<compile_context>
chip_gen: v6e
topology: v6e:2x2x1
jax: 0.10.0
libtpu: 0.0.40
codegen_flags: <defaults>
</compile_context>

<pallas_src>
import functools

import jax
import jax.numpy as jnp
import numpy as np
from jax import lax
from jax.experimental import pallas as pl
from jax.experimental.pallas import tpu as pltpu

HIDDEN = 50


def _sigmoid(v):
    # Exact identity; single EUP tanh instead of exp + divide.
    return 0.5 * jnp.tanh(0.5 * v) + 0.5


def sequence_kernel(T, future,
                    x_ref,
                    wi1_ref, wh1_ref, bi1_ref, bh1_ref,
                    wi2_ref, wh2_ref, bi2_ref, bh2_ref,
                    wlin_ref, blin_ref,
                    out_ref):
    B = x_ref.shape[0]
    H = wh1_ref.shape[0]
    T_total = out_ref.shape[1]

    # --- Hoist all loop-invariant weight/bias loads out of the recurrence. ---
    wi1 = wi1_ref[...]      # (1, 3H)  gru1 input weights (in_features == 1)
    wh1 = wh1_ref[...]      # (H, 3H)  gru1 fused hidden weights
    bi1 = bi1_ref[...]      # (1, 3H)
    bh1 = bh1_ref[...]      # (1, 3H)
    wi2 = wi2_ref[...]      # (H, 3H)  gru2 fused input weights
    wh2 = wh2_ref[...]      # (H, 3H)  gru2 fused hidden weights
    bi2 = bi2_ref[...]      # (1, 3H)
    bh2 = bh2_ref[...]      # (1, 3H)
    wlin = wlin_ref[...]    # (H, 1)
    blin = blin_ref[...]    # (1, 1)

    # Hoisted once (JAX does not CSE broadcast_in_dim inside loops).
    col_ids = lax.broadcasted_iota(jnp.int32, (B, T_total), 1)

    def gru_update(gx, gh, h):
        # gx / gh : (B, 3H) fused pre-activations (biases included),
        # PyTorch GRUCell gate order [r | z | n].
        r = _sigmoid(gx[:, 0:H] + gh[:, 0:H])
        z = _sigmoid(gx[:, H:2 * H] + gh[:, H:2 * H])
        n = jnp.tanh(gx[:, 2 * H:3 * H] + r * gh[:, 2 * H:3 * H])
        return (1.0 - z) * n + z * h

    def gru1(x_col, h):
        # x_col: (B, 1). K == 1 contraction -> VPU broadcast outer product.
        gx = x_col * wi1 + bi1
        gh = jnp.dot(h, wh1, preferred_element_type=jnp.float32) + bh1
        return gru_update(gx, gh, h)

    def gru2(x, h):
        gx = jnp.dot(x, wi2, preferred_element_type=jnp.float32) + bi2
        gh = jnp.dot(h, wh2, preferred_element_type=jnp.float32) + bh2
        return gru_update(gx, gh, h)

    def linear(h):
        return jnp.dot(h, wlin, preferred_element_type=jnp.float32) + blin

    def scatter(out_acc, out_t, t):
        # Accumulate the (B,1) column into the in-register output tile;
        # avoids a 1-lane masked VMEM store every step.
        return out_acc + jnp.where(col_ids == t, out_t, 0.0)

    h1_0 = jnp.zeros((B, H), jnp.float32)
    out_0 = jnp.zeros((B, 1), jnp.float32)
    acc_0 = jnp.zeros((B, T_total), jnp.float32)

    # -------------------- history phase: gru1 -> linear --------------------
    def hist_step(t, carry):
        h1, _, out_acc = carry
        x_t = x_ref[:, pl.ds(t, 1)]                         # (B, 1)
        h1 = gru1(x_t, h1)
        out_t = linear(h1)
        return h1, out_t, scatter(out_acc, out_t, t)

    h1, out_t, out_acc = lax.fori_loop(
        0, T, hist_step, (h1_0, out_0, acc_0), unroll=True)

    # ------------- autoregressive phase: gru1 -> gru2 -> linear -------------
    if future > 0:
        def future_step(i, carry):
            h1, h2, out_prev, out_acc = carry
            h1 = gru1(out_prev, h1)
            h2 = gru2(h1, h2)
            out_t = linear(h2)
            return h1, h2, out_t, scatter(out_acc, out_t, T + i)

        h2_0 = jnp.zeros((B, H), jnp.float32)
        _, _, _, out_acc = lax.fori_loop(
            0, future, future_step, (h1, h2_0, out_t, out_acc), unroll=True)

    # Single dense store of the whole output tile.
    out_ref[...] = out_acc


def sequence_forward(x, params, future=0):
    B, T = x.shape
    # Pad batch to a full sublane tile (8); padded rows are discarded.
    B_pad = int(np.ceil(B / 8)) * 8
    if B_pad != B:
        x = jnp.pad(x, ((0, B_pad - B), (0, 0)))
    T_total = T + future
    n_in = 1 + len(params)
    kernel = functools.partial(sequence_kernel, T, future)
    out = pl.pallas_call(
        kernel,
        out_shape=jax.ShapeDtypeStruct((B_pad, T_total), jnp.float32),
        in_specs=[pl.BlockSpec(memory_space=pltpu.MemorySpace.VMEM)] * n_in,
        out_specs=pl.BlockSpec(memory_space=pltpu.MemorySpace.VMEM),
    )(x, *params)
    return out[:B]


# ---------------------------------------------------------------------------
# Deterministic parameter construction (PyTorch-style uniform(-k, k) init),
# fused per cell: input/hidden weights transposed to (in, 3H) with gate order
# [r | z | n]; biases as (1, 3H) rows; linear as (H, 1) + (1, 1).
# ---------------------------------------------------------------------------
def make_params(key, hidden=HIDDEN):
    H = hidden
    ks = jax.random.split(key, 10)
    kg = 1.0 / np.sqrt(H)

    def u(k, shape, scale):
        return jax.random.uniform(k, shape, jnp.float32, -scale, scale)

    # PyTorch-native shapes, gate order [r; z; n].
    wih1 = u(ks[0], (3 * H, 1), kg)   # gru1: GRUCell(1, H)
    whh1 = u(ks[1], (3 * H, H), kg)
    bih1 = u(ks[2], (3 * H,), kg)
    bhh1 = u(ks[3], (3 * H,), kg)
    wih2 = u(ks[4], (3 * H, H), kg)   # gru2: GRUCell(H, H)
    whh2 = u(ks[5], (3 * H, H), kg)
    bih2 = u(ks[6], (3 * H,), kg)
    bhh2 = u(ks[7], (3 * H,), kg)
    wlin = u(ks[8], (1, H), kg)       # linear: Linear(H, 1)
    blin = u(ks[9], (1,), kg)

    return (
        wih1.T,                       # wi1  (1, 3H)
        whh1.T,                       # wh1  (H, 3H)
        bih1.reshape(1, 3 * H),       # bi1
        bhh1.reshape(1, 3 * H),       # bh1
        wih2.T,                       # wi2  (H, 3H)
        whh2.T,                       # wh2  (H, 3H)
        bih2.reshape(1, 3 * H),       # bi2
        bhh2.reshape(1, 3 * H),       # bh2
        wlin.T,                       # (H, 1)
        blin.reshape(1, 1),           # (1, 1)
    )


# ---------------------------------------------------------------------------
# Pure-JAX reference (plain Python loop, exact jax.nn.sigmoid) for validation.
# ---------------------------------------------------------------------------
def _gru_cell_ref(x, h, wi, wh, bi, bh, H):
    gx = x @ wi + bi
    gh = h @ wh + bh
    r = jax.nn.sigmoid(gx[:, 0:H] + gh[:, 0:H])
    z = jax.nn.sigmoid(gx[:, H:2 * H] + gh[:, H:2 * H])
    n = jnp.tanh(gx[:, 2 * H:3 * H] + r * gh[:, 2 * H:3 * H])
    return (1.0 - z) * n + z * h


def sequence_reference(x, params, future=0):
    wi1, wh1, bi1, bh1, wi2, wh2, bi2, bh2, wlin, blin = params
    H = wh1.shape[0]
    B, T = x.shape
    h1 = jnp.zeros((B, H), jnp.float32)
    h2 = jnp.zeros((B, H), jnp.float32)
    out = jnp.zeros((B, 1), jnp.float32)
    outs = []
    for t in range(T):
        h1 = _gru_cell_ref(x[:, t:t + 1], h1, wi1, wh1, bi1, bh1, H)
        out = h1 @ wlin + blin
        outs.append(out)
    for _ in range(future):
        h1 = _gru_cell_ref(out, h1, wi1, wh1, bi1, bh1, H)
        h2 = _gru_cell_ref(h1, h2, wi2, wh2, bi2, bh2, H)
        out = h2 @ wlin + blin
        outs.append(out)
    return jnp.concatenate(outs, axis=1)  # (B, T + future)


if __name__ == "__main__":
    key = jax.random.PRNGKey(0)
    k_param, k_x = jax.random.split(key)

    B, T, FUTURE = 4, 8, 4
    params = make_params(k_param)
    x = jax.random.normal(k_x, (B, T), jnp.float32)

    out = sequence_forward(x, params, future=FUTURE)
    out = jax.block_until_ready(out)

    ref = sequence_reference(x, params, future=FUTURE)
    assert out.shape == (B, T + FUTURE), out.shape
    np.testing.assert_allclose(np.asarray(out), np.asarray(ref),
                               rtol=1e-4, atol=1e-4)
    print("KERNEL_OK")
</pallas_src>

<mosaic_0001>
module attributes {stable_mosaic.version = 11 : i64} {
  func.func @sequence_kernel(%arg0: memref<8x8xf32, #tpu.memory_space<vmem>>, %arg1: memref<1x150xf32, #tpu.memory_space<vmem>>, %arg2: memref<50x150xf32, #tpu.memory_space<vmem>>, %arg3: memref<1x150xf32, #tpu.memory_space<vmem>>, %arg4: memref<1x150xf32, #tpu.memory_space<vmem>>, %arg5: memref<50x150xf32, #tpu.memory_space<vmem>>, %arg6: memref<50x150xf32, #tpu.memory_space<vmem>>, %arg7: memref<1x150xf32, #tpu.memory_space<vmem>>, %arg8: memref<1x150xf32, #tpu.memory_space<vmem>>, %arg9: memref<50x1xf32, #tpu.memory_space<vmem>>, %arg10: memref<1x1xf32, #tpu.memory_space<vmem>>, %arg11: memref<8x12xf32, #tpu.memory_space<vmem>>) attributes {dimension_semantics = [], scalar_prefetch = 0 : i64, scratch_operands = 0 : i64, tpu.core_type = #tpu.core_type<tc>} {
    %c0 = arith.constant 0 : index
    %c0_0 = arith.constant 0 : index
    %0 = vector.load %arg1[%c0, %c0_0] : memref<1x150xf32, #tpu.memory_space<vmem>>, vector<1x150xf32>
    %c0_1 = arith.constant 0 : index
    %c0_2 = arith.constant 0 : index
    %1 = vector.load %arg2[%c0_1, %c0_2] : memref<50x150xf32, #tpu.memory_space<vmem>>, vector<50x150xf32>
    %c0_3 = arith.constant 0 : index
    %c0_4 = arith.constant 0 : index
    %2 = vector.load %arg3[%c0_3, %c0_4] : memref<1x150xf32, #tpu.memory_space<vmem>>, vector<1x150xf32>
    %c0_5 = arith.constant 0 : index
    %c0_6 = arith.constant 0 : index
    %3 = vector.load %arg4[%c0_5, %c0_6] : memref<1x150xf32, #tpu.memory_space<vmem>>, vector<1x150xf32>
    %c0_7 = arith.constant 0 : index
    %c0_8 = arith.constant 0 : index
    %4 = vector.load %arg5[%c0_7, %c0_8] : memref<50x150xf32, #tpu.memory_space<vmem>>, vector<50x150xf32>
    %c0_9 = arith.constant 0 : index
    %c0_10 = arith.constant 0 : index
    %5 = vector.load %arg6[%c0_9, %c0_10] : memref<50x150xf32, #tpu.memory_space<vmem>>, vector<50x150xf32>
    %c0_11 = arith.constant 0 : index
    %c0_12 = arith.constant 0 : index
    %6 = vector.load %arg7[%c0_11, %c0_12] : memref<1x150xf32, #tpu.memory_space<vmem>>, vector<1x150xf32>
    %c0_13 = arith.constant 0 : index
    %c0_14 = arith.constant 0 : index
    %7 = vector.load %arg8[%c0_13, %c0_14] : memref<1x150xf32, #tpu.memory_space<vmem>>, vector<1x150xf32>
    %c0_15 = arith.constant 0 : index
    %c0_16 = arith.constant 0 : index
    %8 = vector.load %arg9[%c0_15, %c0_16] : memref<50x1xf32, #tpu.memory_space<vmem>>, vector<50x1xf32>
    %c0_17 = arith.constant 0 : index
    %c0_18 = arith.constant 0 : index
    %9 = vector.load %arg10[%c0_17, %c0_18] : memref<1x1xf32, #tpu.memory_space<vmem>>, vector<1x1xf32>
    %10 = tpu.iota {dimensions = array<i32: 1>} : vector<8x12xi32>
    %cst = arith.constant 0.000000e+00 : f32
    %11 = vector.broadcast %cst : f32 to vector<8x50xf32>
    %cst_19 = arith.constant 0.000000e+00 : f32
    %12 = vector.broadcast %cst_19 : f32 to vector<8x1xf32>
    %cst_20 = arith.constant 0.000000e+00 : f32
    %13 = vector.broadcast %cst_20 : f32 to vector<8x12xf32>
    %c0_i32 = arith.constant 0 : i32
    %c0_21 = arith.constant 0 : index
    %14 = arith.index_cast %c0_i32 : i32 to index
    %15 = vector.load %arg0[%c0_21, %14] : memref<8x8xf32, #tpu.memory_space<vmem>>, vector<8x1xf32>
    %16 = vector.broadcast %15 : vector<8x1xf32> to vector<8x150xf32>
    %17 = vector.broadcast %0 : vector<1x150xf32> to vector<8x150xf32>
    %18 = arith.mulf %16, %17 : vector<8x150xf32>
    %19 = vector.broadcast %2 : vector<1x150xf32> to vector<8x150xf32>
    %20 = arith.addf %18, %19 : vector<8x150xf32>
    %cst_22 = arith.constant dense<0.000000e+00> : vector<8x150xf32>
    %21 = tpu.matmul %11, %1, %cst_22 {dimension_numbers = #tpu.dot_dimension_numbers<[1], [0], [0], [1], [0, 0, 1, 1], [], []>} : vector<8x50xf32>, vector<50x150xf32>, vector<8x150xf32> -> vector<8x150xf32>
    %22 = vector.broadcast %3 : vector<1x150xf32> to vector<8x150xf32>
    %23 = arith.addf %21, %22 : vector<8x150xf32>
    %24 = vector.extract_strided_slice %20 {offsets = [0, 0], sizes = [8, 50], strides = [1, 1]} : vector<8x150xf32> to vector<8x50xf32>
    %25 = vector.extract_strided_slice %23 {offsets = [0, 0], sizes = [8, 50], strides = [1, 1]} : vector<8x150xf32> to vector<8x50xf32>
    %26 = arith.addf %24, %25 : vector<8x50xf32>
    %cst_23 = arith.constant 5.000000e-01 : f32
    %27 = vector.broadcast %cst_23 : f32 to vector<8x50xf32>
    %28 = arith.mulf %27, %26 : vector<8x50xf32>
    %29 = math.tanh %28 : vector<8x50xf32>
    %cst_24 = arith.constant 5.000000e-01 : f32
    %30 = vector.broadcast %cst_24 : f32 to vector<8x50xf32>
    %31 = arith.mulf %30, %29 : vector<8x50xf32>
    %cst_25 = arith.constant 5.000000e-01 : f32
    %32 = vector.broadcast %cst_25 : f32 to vector<8x50xf32>
    %33 = arith.addf %31, %32 : vector<8x50xf32>
    %34 = vector.extract_strided_slice %20 {offsets = [0, 50], sizes = [8, 50], strides = [1, 1]} : vector<8x150xf32> to vector<8x50xf32>
    %35 = vector.extract_strided_slice %23 {offsets = [0, 50], sizes = [8, 50], strides = [1, 1]} : vector<8x150xf32> to vector<8x50xf32>
    %36 = arith.addf %34, %35 : vector<8x50xf32>
    %cst_26 = arith.constant 5.000000e-01 : f32
    %37 = vector.broadcast %cst_26 : f32 to vector<8x50xf32>
    %38 = arith.mulf %37, %36 : vector<8x50xf32>
    %39 = math.tanh %38 : vector<8x50xf32>
    %cst_27 = arith.constant 5.000000e-01 : f32
    %40 = vector.broadcast %cst_27 : f32 to vector<8x50xf32>
    %41 = arith.mulf %40, %39 : vector<8x50xf32>
    %cst_28 = arith.constant 5.000000e-01 : f32
    %42 = vector.broadcast %cst_28 : f32 to vector<8x50xf32>
    %43 = arith.addf %41, %42 : vector<8x50xf32>
    %44 = vector.extract_strided_slice %20 {offsets = [0, 100], sizes = [8, 50], strides = [1, 1]} : vector<8x150xf32> to vector<8x50xf32>
    %45 = vector.extract_strided_slice %23 {offsets = [0, 100], sizes = [8, 50], strides = [1, 1]} : vector<8x150xf32> to vector<8x50xf32>
    %46 = arith.mulf %33, %45 : vector<8x50xf32>
    %47 = arith.addf %44, %46 : vector<8x50xf32>
    %48 = math.tanh %47 : vector<8x50xf32>
    %cst_29 = arith.constant 1.000000e+00 : f32
    %49 = vector.broadcast %cst_29 : f32 to vector<8x50xf32>
    %50 = arith.subf %49, %43 : vector<8x50xf32>
    %51 = arith.mulf %50, %48 : vector<8x50xf32>
    %52 = arith.mulf %43, %11 : vector<8x50xf32>
    %53 = arith.addf %51, %52 : vector<8x50xf32>
    %cst_30 = arith.constant dense<0.000000e+00> : vector<8x1xf32>
    %54 = tpu.matmul %53, %8, %cst_30 {dimension_numbers = #tpu.dot_dimension_numbers<[1], [0], [0], [1], [0, 0, 1, 1], [], []>} : vector<8x50xf32>, vector<50x1xf32>, vector<8x1xf32> -> vector<8x1xf32>
    %55 = vector.broadcast %9 : vector<1x1xf32> to vector<8x1xf32>
    %56 = arith.addf %54, %55 : vector<8x1xf32>
    %57 = vector.broadcast %c0_i32 : i32 to vector<8x12xi32>
    %58 = arith.cmpi eq, %10, %57 : vector<8x12xi32>
    %cst_31 = arith.constant 0.000000e+00 : f32
    %59 = vector.shape_cast %56 : vector<8x1xf32> to vector<8x1xf32>
    %60 = vector.broadcast %59 : vector<8x1xf32> to vector<8x12xf32>
    %61 = vector.broadcast %cst_31 : f32 to vector<8x12xf32>
    %62 = arith.select %58, %60, %61 : vector<8x12xi1>, vector<8x12xf32>
    %63 = arith.addf %13, %62 : vector<8x12xf32>
    %c1_i32 = arith.constant 1 : i32
    %c0_32 = arith.constant 0 : index
    %64 = arith.index_cast %c1_i32 : i32 to index
    %65 = vector.load %arg0[%c0_32, %64] : memref<8x8xf32, #tpu.memory_space<vmem>>, vector<8x1xf32>
    %66 = vector.broadcast %65 : vector<8x1xf32> to vector<8x150xf32>
    %67 = vector.broadcast %0 : vector<1x150xf32> to vector<8x150xf32>
    %68 = arith.mulf %66, %67 : vector<8x150xf32>
    %69 = vector.broadcast %2 : vector<1x150xf32> to vector<8x150xf32>
    %70 = arith.addf %68, %69 : vector<8x150xf32>
    %cst_33 = arith.constant dense<0.000000e+00> : vector<8x150xf32>
    %71 = tpu.matmul %53, %1, %cst_33 {dimension_numbers = #tpu.dot_dimension_numbers<[1], [0], [0], [1], [0, 0, 1, 1], [], []>} : vector<8x50xf32>, vector<50x150xf32>, vector<8x150xf32> -> vector<8x150xf32>
    %72 = vector.broadcast %3 : vector<1x150xf32> to vector<8x150xf32>
    %73 = arith.addf %71, %72 : vector<8x150xf32>
    %74 = vector.extract_strided_slice %70 {offsets = [0, 0], sizes = [8, 50], strides = [1, 1]} : vector<8x150xf32> to vector<8x50xf32>
    %75 = vector.extract_strided_slice %73 {offsets = [0, 0], sizes = [8, 50], strides = [1, 1]} : vector<8x150xf32> to vector<8x50xf32>
    %76 = arith.addf %74, %75 : vector<8x50xf32>
    %cst_34 = arith.constant 5.000000e-01 : f32
    %77 = vector.broadcast %cst_34 : f32 to vector<8x50xf32>
    %78 = arith.mulf %77, %76 : vector<8x50xf32>
    %79 = math.tanh %78 : vector<8x50xf32>
    %cst_35 = arith.constant 5.000000e-01 : f32
    %80 = vector.broadcast %cst_35 : f32 to vector<8x50xf32>
    %81 = arith.mulf %80, %79 : vector<8x50xf32>
    %cst_36 = arith.constant 5.000000e-01 : f32
    %82 = vector.broadcast %cst_36 : f32 to vector<8x50xf32>
    %83 = arith.addf %81, %82 : vector<8x50xf32>
    %84 = vector.extract_strided_slice %70 {offsets = [0, 50], sizes = [8, 50], strides = [1, 1]} : vector<8x150xf32> to vector<8x50xf32>
    %85 = vector.extract_strided_slice %73 {offsets = [0, 50], sizes = [8, 50], strides = [1, 1]} : vector<8x150xf32> to vector<8x50xf32>
    %86 = arith.addf %84, %85 : vector<8x50xf32>
    %cst_37 = arith.constant 5.000000e-01 : f32
    %87 = vector.broadcast %cst_37 : f32 to vector<8x50xf32>
    %88 = arith.mulf %87, %86 : vector<8x50xf32>
    %89 = math.tanh %88 : vector<8x50xf32>
    %cst_38 = arith.constant 5.000000e-01 : f32
    %90 = vector.broadcast %cst_38 : f32 to vector<8x50xf32>
    %91 = arith.mulf %90, %89 : vector<8x50xf32>
    %cst_39 = arith.constant 5.000000e-01 : f32
    %92 = vector.broadcast %cst_39 : f32 to vector<8x50xf32>
    %93 = arith.addf %91, %92 : vector<8x50xf32>
    %94 = vector.extract_strided_slice %70 {offsets = [0, 100], sizes = [8, 50], strides = [1, 1]} : vector<8x150xf32> to vector<8x50xf32>
    %95 = vector.extract_strided_slice %73 {offsets = [0, 100], sizes = [8, 50], strides = [1, 1]} : vector<8x150xf32> to vector<8x50xf32>
    %96 = arith.mulf %83, %95 : vector<8x50xf32>
    %97 = arith.addf %94, %96 : vector<8x50xf32>
    %98 = math.tanh %97 : vector<8x50xf32>
    %cst_40 = arith.constant 1.000000e+00 : f32
    %99 = vector.broadcast %cst_40 : f32 to vector<8x50xf32>
    %100 = arith.subf %99, %93 : vector<8x50xf32>
    %101 = arith.mulf %100, %98 : vector<8x50xf32>
    %102 = arith.mulf %93, %53 : vector<8x50xf32>
    %103 = arith.addf %101, %102 : vector<8x50xf32>
    %cst_41 = arith.constant dense<0.000000e+00> : vector<8x1xf32>
    %104 = tpu.matmul %103, %8, %cst_41 {dimension_numbers = #tpu.dot_dimension_numbers<[1], [0], [0], [1], [0, 0, 1, 1], [], []>} : vector<8x50xf32>, vector<50x1xf32>, vector<8x1xf32> -> vector<8x1xf32>
    %105 = vector.broadcast %9 : vector<1x1xf32> to vector<8x1xf32>
    %106 = arith.addf %104, %105 : vector<8x1xf32>
    %107 = vector.broadcast %c1_i32 : i32 to vector<8x12xi32>
    %108 = arith.cmpi eq, %10, %107 : vector<8x12xi32>
    %cst_42 = arith.constant 0.000000e+00 : f32
    %109 = vector.shape_cast %106 : vector<8x1xf32> to vector<8x1xf32>
    %110 = vector.broadcast %109 : vector<8x1xf32> to vector<8x12xf32>
    %111 = vector.broadcast %cst_42 : f32 to vector<8x12xf32>
    %112 = arith.select %108, %110, %111 : vector<8x12xi1>, vector<8x12xf32>
    %113 = arith.addf %63, %112 : vector<8x12xf32>
    %c2_i32 = arith.constant 2 : i32
    %c0_43 = arith.constant 0 : index
    %114 = arith.index_cast %c2_i32 : i32 to index
    %115 = vector.load %arg0[%c0_43, %114] : memref<8x8xf32, #tpu.memory_space<vmem>>, vector<8x1xf32>
    %116 = vector.broadcast %115 : vector<8x1xf32> to vector<8x150xf32>
    %117 = vector.broadcast %0 : vector<1x150xf32> to vector<8x150xf32>
    %118 = arith.mulf %116, %117 : vector<8x150xf32>
    %119 = vector.broadcast %2 : vector<1x150xf32> to vector<8x150xf32>
    %120 = arith.addf %118, %119 : vector<8x150xf32>
    %cst_44 = arith.constant dense<0.000000e+00> : vector<8x150xf32>
    %121 = tpu.matmul %103, %1, %cst_44 {dimension_numbers = #tpu.dot_dimension_numbers<[1], [0], [0], [1], [0, 0, 1, 1], [], []>} : vector<8x50xf32>, vector<50x150xf32>, vector<8x150xf32> -> vector<8x150xf32>
    %122 = vector.broadcast %3 : vector<1x150xf32> to vector<8x150xf32>
    %123 = arith.addf %121, %122 : vector<8x150xf32>
    %124 = vector.extract_strided_slice %120 {offsets = [0, 0], sizes = [8, 50], strides = [1, 1]} : vector<8x150xf32> to vector<8x50xf32>
    %125 = vector.extract_strided_slice %123 {offsets = [0, 0], sizes = [8, 50], strides = [1, 1]} : vector<8x150xf32> to vector<8x50xf32>
    %126 = arith.addf %124, %125 : vector<8x50xf32>
    %cst_45 = arith.constant 5.000000e-01 : f32
    %127 = vector.broadcast %cst_45 : f32 to vector<8x50xf32>
    %128 = arith.mulf %127, %126 : vector<8x50xf32>
    %129 = math.tanh %128 : vector<8x50xf32>
    %cst_46 = arith.constant 5.000000e-01 : f32
    %130 = vector.broadcast %cst_46 : f32 to vector<8x50xf32>
    %131 = arith.mulf %130, %129 : vector<8x50xf32>
    %cst_47 = arith.constant 5.000000e-01 : f32
    %132 = vector.broadcast %cst_47 : f32 to vector<8x50xf32>
    %133 = arith.addf %131, %132 : vector<8x50xf32>
    %134 = vector.extract_strided_slice %120 {offsets = [0, 50], sizes = [8, 50], strides = [1, 1]} : vector<8x150xf32> to vector<8x50xf32>
    %135 = vector.extract_strided_slice %123 {offsets = [0, 50], sizes = [8, 50], strides = [1, 1]} : vector<8x150xf32> to vector<8x50xf32>
    %136 = arith.addf %134, %135 : vector<8x50xf32>
    %cst_48 = arith.constant 5.000000e-01 : f32
    %137 = vector.broadcast %cst_48 : f32 to vector<8x50xf32>
    %138 = arith.mulf %137, %136 : vector<8x50xf32>
    %139 = math.tanh %138 : vector<8x50xf32>
    %cst_49 = arith.constant 5.000000e-01 : f32
    %140 = vector.broadcast %cst_49 : f32 to vector<8x50xf32>
    %141 = arith.mulf %140, %139 : vector<8x50xf32>
    %cst_50 = arith.constant 5.000000e-01 : f32
    %142 = vector.broadcast %cst_50 : f32 to vector<8x50xf32>
    %143 = arith.addf %141, %142 : vector<8x50xf32>
    %144 = vector.extract_strided_slice %120 {offsets = [0, 100], sizes = [8, 50], strides = [1, 1]} : vector<8x150xf32> to vector<8x50xf32>
    %145 = vector.extract_strided_slice %123 {offsets = [0, 100], sizes = [8, 50], strides = [1, 1]} : vector<8x150xf32> to vector<8x50xf32>
    %146 = arith.mulf %133, %145 : vector<8x50xf32>
    %147 = arith.addf %144, %146 : vector<8x50xf32>
    %148 = math.tanh %147 : vector<8x50xf32>
    %cst_51 = arith.constant 1.000000e+00 : f32
    %149 = vector.broadcast %cst_51 : f32 to vector<8x50xf32>
    %150 = arith.subf %149, %143 : vector<8x50xf32>
    %151 = arith.mulf %150, %148 : vector<8x50xf32>
    %152 = arith.mulf %143, %103 : vector<8x50xf32>
    %153 = arith.addf %151, %152 : vector<8x50xf32>
    %cst_52 = arith.constant dense<0.000000e+00> : vector<8x1xf32>
    %154 = tpu.matmul %153, %8, %cst_52 {dimension_numbers = #tpu.dot_dimension_numbers<[1], [0], [0], [1], [0, 0, 1, 1], [], []>} : vector<8x50xf32>, vector<50x1xf32>, vector<8x1xf32> -> vector<8x1xf32>
    %155 = vector.broadcast %9 : vector<1x1xf32> to vector<8x1xf32>
    %156 = arith.addf %154, %155 : vector<8x1xf32>
    %157 = vector.broadcast %c2_i32 : i32 to vector<8x12xi32>
    %158 = arith.cmpi eq, %10, %157 : vector<8x12xi32>
    %cst_53 = arith.constant 0.000000e+00 : f32
    %159 = vector.shape_cast %156 : vector<8x1xf32> to vector<8x1xf32>
    %160 = vector.broadcast %159 : vector<8x1xf32> to vector<8x12xf32>
    %161 = vector.broadcast %cst_53 : f32 to vector<8x12xf32>
    %162 = arith.select %158, %160, %161 : vector<8x12xi1>, vector<8x12xf32>
    %163 = arith.addf %113, %162 : vector<8x12xf32>
    %c3_i32 = arith.constant 3 : i32
    %c0_54 = arith.constant 0 : index
    %164 = arith.index_cast %c3_i32 : i32 to index
    %165 = vector.load %arg0[%c0_54, %164] : memref<8x8xf32, #tpu.memory_space<vmem>>, vector<8x1xf32>
    %166 = vector.broadcast %165 : vector<8x1xf32> to vector<8x150xf32>
    %167 = vector.broadcast %0 : vector<1x150xf32> to vector<8x150xf32>
    %168 = arith.mulf %166, %167 : vector<8x150xf32>
    %169 = vector.broadcast %2 : vector<1x150xf32> to vector<8x150xf32>
    %170 = arith.addf %168, %169 : vector<8x150xf32>
    %cst_55 = arith.constant dense<0.000000e+00> : vector<8x150xf32>
    %171 = tpu.matmul %153, %1, %cst_55 {dimension_numbers = #tpu.dot_dimension_numbers<[1], [0], [0], [1], [0, 0, 1, 1], [], []>} : vector<8x50xf32>, vector<50x150xf32>, vector<8x150xf32> -> vector<8x150xf32>
    %172 = vector.broadcast %3 : vector<1x150xf32> to vector<8x150xf32>
    %173 = arith.addf %171, %172 : vector<8x150xf32>
    %174 = vector.extract_strided_slice %170 {offsets = [0, 0], sizes = [8, 50], strides = [1, 1]} : vector<8x150xf32> to vector<8x50xf32>
    %175 = vector.extract_strided_slice %173 {offsets = [0, 0], sizes = [8, 50], strides = [1, 1]} : vector<8x150xf32> to vector<8x50xf32>
    %176 = arith.addf %174, %175 : vector<8x50xf32>
    %cst_56 = arith.constant 5.000000e-01 : f32
    %177 = vector.broadcast %cst_56 : f32 to vector<8x50xf32>
    %178 = arith.mulf %177, %176 : vector<8x50xf32>
    %179 = math.tanh %178 : vector<8x50xf32>
    %cst_57 = arith.constant 5.000000e-01 : f32
    %180 = vector.broadcast %cst_57 : f32 to vector<8x50xf32>
    %181 = arith.mulf %180, %179 : vector<8x50xf32>
    %cst_58 = arith.constant 5.000000e-01 : f32
    %182 = vector.broadcast %cst_58 : f32 to vector<8x50xf32>
    %183 = arith.addf %181, %182 : vector<8x50xf32>
    %184 = vector.extract_strided_slice %170 {offsets = [0, 50], sizes = [8, 50], strides = [1, 1]} : vector<8x150xf32> to vector<8x50xf32>
    %185 = vector.extract_strided_slice %173 {offsets = [0, 50], sizes = [8, 50], strides = [1, 1]} : vector<8x150xf32> to vector<8x50xf32>
    %186 = arith.addf %184, %185 : vector<8x50xf32>
    %cst_59 = arith.constant 5.000000e-01 : f32
    %187 = vector.broadcast %cst_59 : f32 to vector<8x50xf32>
    %188 = arith.mulf %187, %186 : vector<8x50xf32>
    %189 = math.tanh %188 : vector<8x50xf32>
    %cst_60 = arith.constant 5.000000e-01 : f32
    %190 = vector.broadcast %cst_60 : f32 to vector<8x50xf32>
    %191 = arith.mulf %190, %189 : vector<8x50xf32>
    %cst_61 = arith.constant 5.000000e-01 : f32
    %192 = vector.broadcast %cst_61 : f32 to vector<8x50xf32>
    %193 = arith.addf %191, %192 : vector<8x50xf32>
    %194 = vector.extract_strided_slice %170 {offsets = [0, 100], sizes = [8, 50], strides = [1, 1]} : vector<8x150xf32> to vector<8x50xf32>
    %195 = vector.extract_strided_slice %173 {offsets = [0, 100], sizes = [8, 50], strides = [1, 1]} : vector<8x150xf32> to vector<8x50xf32>
    %196 = arith.mulf %183, %195 : vector<8x50xf32>
    %197 = arith.addf %194, %196 : vector<8x50xf32>
    %198 = math.tanh %197 : vector<8x50xf32>
    %cst_62 = arith.constant 1.000000e+00 : f32
    %199 = vector.broadcast %cst_62 : f32 to vector<8x50xf32>
    %200 = arith.subf %199, %193 : vector<8x50xf32>
    %201 = arith.mulf %200, %198 : vector<8x50xf32>
    %202 = arith.mulf %193, %153 : vector<8x50xf32>
    %203 = arith.addf %201, %202 : vector<8x50xf32>
    %cst_63 = arith.constant dense<0.000000e+00> : vector<8x1xf32>
    %204 = tpu.matmul %203, %8, %cst_63 {dimension_numbers = #tpu.dot_dimension_numbers<[1], [0], [0], [1], [0, 0, 1, 1], [], []>} : vector<8x50xf32>, vector<50x1xf32>, vector<8x1xf32> -> vector<8x1xf32>
    %205 = vector.broadcast %9 : vector<1x1xf32> to vector<8x1xf32>
    %206 = arith.addf %204, %205 : vector<8x1xf32>
    %207 = vector.broadcast %c3_i32 : i32 to vector<8x12xi32>
    %208 = arith.cmpi eq, %10, %207 : vector<8x12xi32>
    %cst_64 = arith.constant 0.000000e+00 : f32
    %209 = vector.shape_cast %206 : vector<8x1xf32> to vector<8x1xf32>
    %210 = vector.broadcast %209 : vector<8x1xf32> to vector<8x12xf32>
    %211 = vector.broadcast %cst_64 : f32 to vector<8x12xf32>
    %212 = arith.select %208, %210, %211 : vector<8x12xi1>, vector<8x12xf32>
    %213 = arith.addf %163, %212 : vector<8x12xf32>
    %c4_i32 = arith.constant 4 : i32
    %c0_65 = arith.constant 0 : index
    %214 = arith.index_cast %c4_i32 : i32 to index
    %215 = vector.load %arg0[%c0_65, %214] : memref<8x8xf32, #tpu.memory_space<vmem>>, vector<8x1xf32>
    %216 = vector.broadcast %215 : vector<8x1xf32> to vector<8x150xf32>
    %217 = vector.broadcast %0 : vector<1x150xf32> to vector<8x150xf32>
    %218 = arith.mulf %216, %217 : vector<8x150xf32>
    %219 = vector.broadcast %2 : vector<1x150xf32> to vector<8x150xf32>
    %220 = arith.addf %218, %219 : vector<8x150xf32>
    %cst_66 = arith.constant dense<0.000000e+00> : vector<8x150xf32>
    %221 = tpu.matmul %203, %1, %cst_66 {dimension_numbers = #tpu.dot_dimension_numbers<[1], [0], [0], [1], [0, 0, 1, 1], [], []>} : vector<8x50xf32>, vector<50x150xf32>, vector<8x150xf32> -> vector<8x150xf32>
    %222 = vector.broadcast %3 : vector<1x150xf32> to vector<8x150xf32>
    %223 = arith.addf %221, %222 : vector<8x150xf32>
    %224 = vector.extract_strided_slice %220 {offsets = [0, 0], sizes = [8, 50], strides = [1, 1]} : vector<8x150xf32> to vector<8x50xf32>
    %225 = vector.extract_strided_slice %223 {offsets = [0, 0], sizes = [8, 50], strides = [1, 1]} : vector<8x150xf32> to vector<8x50xf32>
    %226 = arith.addf %224, %225 : vector<8x50xf32>
    %cst_67 = arith.constant 5.000000e-01 : f32
    %227 = vector.broadcast %cst_67 : f32 to vector<8x50xf32>
    %228 = arith.mulf %227, %226 : vector<8x50xf32>
    %229 = math.tanh %228 : vector<8x50xf32>
    %cst_68 = arith.constant 5.000000e-01 : f32
    %230 = vector.broadcast %cst_68 : f32 to vector<8x50xf32>
    %231 = arith.mulf %230, %229 : vector<8x50xf32>
    %cst_69 = arith.constant 5.000000e-01 : f32
    %232 = vector.broadcast %cst_69 : f32 to vector<8x50xf32>
    %233 = arith.addf %231, %232 : vector<8x50xf32>
    %234 = vector.extract_strided_slice %220 {offsets = [0, 50], sizes = [8, 50], strides = [1, 1]} : vector<8x150xf32> to vector<8x50xf32>
    %235 = vector.extract_strided_slice %223 {offsets = [0, 50], sizes = [8, 50], strides = [1, 1]} : vector<8x150xf32> to vector<8x50xf32>
    %236 = arith.addf %234, %235 : vector<8x50xf32>
    %cst_70 = arith.constant 5.000000e-01 : f32
    %237 = vector.broadcast %cst_70 : f32 to vector<8x50xf32>
    %238 = arith.mulf %237, %236 : vector<8x50xf32>
    %239 = math.tanh %238 : vector<8x50xf32>
    %cst_71 = arith.constant 5.000000e-01 : f32
    %240 = vector.broadcast %cst_71 : f32 to vector<8x50xf32>
    %241 = arith.mulf %240, %239 : vector<8x50xf32>
    %cst_72 = arith.constant 5.000000e-01 : f32
    %242 = vector.broadcast %cst_72 : f32 to vector<8x50xf32>
    %243 = arith.addf %241, %242 : vector<8x50xf32>
    %244 = vector.extract_strided_slice %220 {offsets = [0, 100], sizes = [8, 50], strides = [1, 1]} : vector<8x150xf32> to vector<8x50xf32>
    %245 = vector.extract_strided_slice %223 {offsets = [0, 100], sizes = [8, 50], strides = [1, 1]} : vector<8x150xf32> to vector<8x50xf32>
    %246 = arith.mulf %233, %245 : vector<8x50xf32>
    %247 = arith.addf %244, %246 : vector<8x50xf32>
    %248 = math.tanh %247 : vector<8x50xf32>
    %cst_73 = arith.constant 1.000000e+00 : f32
    %249 = vector.broadcast %cst_73 : f32 to vector<8x50xf32>
    %250 = arith.subf %249, %243 : vector<8x50xf32>
    %251 = arith.mulf %250, %248 : vector<8x50xf32>
    %252 = arith.mulf %243, %203 : vector<8x50xf32>
    %253 = arith.addf %251, %252 : vector<8x50xf32>
    %cst_74 = arith.constant dense<0.000000e+00> : vector<8x1xf32>
    %254 = tpu.matmul %253, %8, %cst_74 {dimension_numbers = #tpu.dot_dimension_numbers<[1], [0], [0], [1], [0, 0, 1, 1], [], []>} : vector<8x50xf32>, vector<50x1xf32>, vector<8x1xf32> -> vector<8x1xf32>
    %255 = vector.broadcast %9 : vector<1x1xf32> to vector<8x1xf32>
    %256 = arith.addf %254, %255 : vector<8x1xf32>
    %257 = vector.broadcast %c4_i32 : i32 to vector<8x12xi32>
    %258 = arith.cmpi eq, %10, %257 : vector<8x12xi32>
    %cst_75 = arith.constant 0.000000e+00 : f32
    %259 = vector.shape_cast %256 : vector<8x1xf32> to vector<8x1xf32>
    %260 = vector.broadcast %259 : vector<8x1xf32> to vector<8x12xf32>
    %261 = vector.broadcast %cst_75 : f32 to vector<8x12xf32>
    %262 = arith.select %258, %260, %261 : vector<8x12xi1>, vector<8x12xf32>
    %263 = arith.addf %213, %262 : vector<8x12xf32>
    %c5_i32 = arith.constant 5 : i32
    %c0_76 = arith.constant 0 : index
    %264 = arith.index_cast %c5_i32 : i32 to index
    %265 = vector.load %arg0[%c0_76, %264] : memref<8x8xf32, #tpu.memory_space<vmem>>, vector<8x1xf32>
    %266 = vector.broadcast %265 : vector<8x1xf32> to vector<8x150xf32>
    %267 = vector.broadcast %0 : vector<1x150xf32> to vector<8x150xf32>
    %268 = arith.mulf %266, %267 : vector<8x150xf32>
    %269 = vector.broadcast %2 : vector<1x150xf32> to vector<8x150xf32>
    %270 = arith.addf %268, %269 : vector<8x150xf32>
    %cst_77 = arith.constant dense<0.000000e+00> : vector<8x150xf32>
    %271 = tpu.matmul %253, %1, %cst_77 {dimension_numbers = #tpu.dot_dimension_numbers<[1], [0], [0], [1], [0, 0, 1, 1], [], []>} : vector<8x50xf32>, vector<50x150xf32>, vector<8x150xf32> -> vector<8x150xf32>
    %272 = vector.broadcast %3 : vector<1x150xf32> to vector<8x150xf32>
    %273 = arith.addf %271, %272 : vector<8x150xf32>
    %274 = vector.extract_strided_slice %270 {offsets = [0, 0], sizes = [8, 50], strides = [1, 1]} : vector<8x150xf32> to vector<8x50xf32>
    %275 = vector.extract_strided_slice %273 {offsets = [0, 0], sizes = [8, 50], strides = [1, 1]} : vector<8x150xf32> to vector<8x50xf32>
    %276 = arith.addf %274, %275 : vector<8x50xf32>
    %cst_78 = arith.constant 5.000000e-01 : f32
    %277 = vector.broadcast %cst_78 : f32 to vector<8x50xf32>
    %278 = arith.mulf %277, %276 : vector<8x50xf32>
    %279 = math.tanh %278 : vector<8x50xf32>
    %cst_79 = arith.constant 5.000000e-01 : f32
    %280 = vector.broadcast %cst_79 : f32 to vector<8x50xf32>
    %281 = arith.mulf %280, %279 : vector<8x50xf32>
    %cst_80 = arith.constant 5.000000e-01 : f32
    %282 = vector.broadcast %cst_80 : f32 to vector<8x50xf32>
    %283 = arith.addf %281, %282 : vector<8x50xf32>
    %284 = vector.extract_strided_slice %270 {offsets = [0, 50], sizes = [8, 50], strides = [1, 1]} : vector<8x150xf32> to vector<8x50xf32>
    %285 = vector.extract_strided_slice %273 {offsets = [0, 50], sizes = [8, 50], strides = [1, 1]} : vector<8x150xf32> to vector<8x50xf32>
    %286 = arith.addf %284, %285 : vector<8x50xf32>
    %cst_81 = arith.constant 5.000000e-01 : f32
    %287 = vector.broadcast %cst_81 : f32 to vector<8x50xf32>
    %288 = arith.mulf %287, %286 : vector<8x50xf32>
    %289 = math.tanh %288 : vector<8x50xf32>
    %cst_82 = arith.constant 5.000000e-01 : f32
    %290 = vector.broadcast %cst_82 : f32 to vector<8x50xf32>
    %291 = arith.mulf %290, %289 : vector<8x50xf32>
    %cst_83 = arith.constant 5.000000e-01 : f32
    %292 = vector.broadcast %cst_83 : f32 to vector<8x50xf32>
    %293 = arith.addf %291, %292 : vector<8x50xf32>
    %294 = vector.extract_strided_slice %270 {offsets = [0, 100], sizes = [8, 50], strides = [1, 1]} : vector<8x150xf32> to vector<8x50xf32>
    %295 = vector.extract_strided_slice %273 {offsets = [0, 100], sizes = [8, 50], strides = [1, 1]} : vector<8x150xf32> to vector<8x50xf32>
    %296 = arith.mulf %283, %295 : vector<8x50xf32>
    %297 = arith.addf %294, %296 : vector<8x50xf32>
    %298 = math.tanh %297 : vector<8x50xf32>
    %cst_84 = arith.constant 1.000000e+00 : f32
    %299 = vector.broadcast %cst_84 : f32 to vector<8x50xf32>
    %300 = arith.subf %299, %293 : vector<8x50xf32>
    %301 = arith.mulf %300, %298 : vector<8x50xf32>
    %302 = arith.mulf %293, %253 : vector<8x50xf32>
    %303 = arith.addf %301, %302 : vector<8x50xf32>
    %cst_85 = arith.constant dense<0.000000e+00> : vector<8x1xf32>
    %304 = tpu.matmul %303, %8, %cst_85 {dimension_numbers = #tpu.dot_dimension_numbers<[1], [0], [0], [1], [0, 0, 1, 1], [], []>} : vector<8x50xf32>, vector<50x1xf32>, vector<8x1xf32> -> vector<8x1xf32>
    %305 = vector.broadcast %9 : vector<1x1xf32> to vector<8x1xf32>
    %306 = arith.addf %304, %305 : vector<8x1xf32>
    %307 = vector.broadcast %c5_i32 : i32 to vector<8x12xi32>
    %308 = arith.cmpi eq, %10, %307 : vector<8x12xi32>
    %cst_86 = arith.constant 0.000000e+00 : f32
    %309 = vector.shape_cast %306 : vector<8x1xf32> to vector<8x1xf32>
    %310 = vector.broadcast %309 : vector<8x1xf32> to vector<8x12xf32>
    %311 = vector.broadcast %cst_86 : f32 to vector<8x12xf32>
    %312 = arith.select %308, %310, %311 : vector<8x12xi1>, vector<8x12xf32>
    %313 = arith.addf %263, %312 : vector<8x12xf32>
    %c6_i32 = arith.constant 6 : i32
    %c0_87 = arith.constant 0 : index
    %314 = arith.index_cast %c6_i32 : i32 to index
    %315 = vector.load %arg0[%c0_87, %314] : memref<8x8xf32, #tpu.memory_space<vmem>>, vector<8x1xf32>
    %316 = vector.broadcast %315 : vector<8x1xf32> to vector<8x150xf32>
    %317 = vector.broadcast %0 : vector<1x150xf32> to vector<8x150xf32>
    %318 = arith.mulf %316, %317 : vector<8x150xf32>
    %319 = vector.broadcast %2 : vector<1x150xf32> to vector<8x150xf32>
    %320 = arith.addf %318, %319 : vector<8x150xf32>
    %cst_88 = arith.constant dense<0.000000e+00> : vector<8x150xf32>
    %321 = tpu.matmul %303, %1, %cst_88 {dimension_numbers = #tpu.dot_dimension_numbers<[1], [0], [0], [1], [0, 0, 1, 1], [], []>} : vector<8x50xf32>, vector<50x150xf32>, vector<8x150xf32> -> vector<8x150xf32>
    %322 = vector.broadcast %3 : vector<1x150xf32> to vector<8x150xf32>
    %323 = arith.addf %321, %322 : vector<8x150xf32>
    %324 = vector.extract_strided_slice %320 {offsets = [0, 0], sizes = [8, 50], strides = [1, 1]} : vector<8x150xf32> to vector<8x50xf32>
    %325 = vector.extract_strided_slice %323 {offsets = [0, 0], sizes = [8, 50], strides = [1, 1]} : vector<8x150xf32> to vector<8x50xf32>
    %326 = arith.addf %324, %325 : vector<8x50xf32>
    %cst_89 = arith.constant 5.000000e-01 : f32
    %327 = vector.broadcast %cst_89 : f32 to vector<8x50xf32>
    %328 = arith.mulf %327, %326 : vector<8x50xf32>
    %329 = math.tanh %328 : vector<8x50xf32>
    %cst_90 = arith.constant 5.000000e-01 : f32
    %330 = vector.broadcast %cst_90 : f32 to vector<8x50xf32>
    %331 = arith.mulf %330, %329 : vector<8x50xf32>
    %cst_91 = arith.constant 5.000000e-01 : f32
    %332 = vector.broadcast %cst_91 : f32 to vector<8x50xf32>
    %333 = arith.addf %331, %332 : vector<8x50xf32>
    %334 = vector.extract_strided_slice %320 {offsets = [0, 50], sizes = [8, 50], strides = [1, 1]} : vector<8x150xf32> to vector<8x50xf32>
    %335 = vector.extract_strided_slice %323 {offsets = [0, 50], sizes = [8, 50], strides = [1, 1]} : vector<8x150xf32> to vector<8x50xf32>
    %336 = arith.addf %334, %335 : vector<8x50xf32>
    %cst_92 = arith.constant 5.000000e-01 : f32
    %337 = vector.broadcast %cst_92 : f32 to vector<8x50xf32>
    %338 = arith.mulf %337, %336 : vector<8x50xf32>
    %339 = math.tanh %338 : vector<8x50xf32>
    %cst_93 = arith.constant 5.000000e-01 : f32
    %340 = vector.broadcast %cst_93 : f32 to vector<8x50xf32>
    %341 = arith.mulf %340, %339 : vector<8x50xf32>
    %cst_94 = arith.constant 5.000000e-01 : f32
    %342 = vector.broadcast %cst_94 : f32 to vector<8x50xf32>
    %343 = arith.addf %341, %342 : vector<8x50xf32>
    %344 = vector.extract_strided_slice %320 {offsets = [0, 100], sizes = [8, 50], strides = [1, 1]} : vector<8x150xf32> to vector<8x50xf32>
    %345 = vector.extract_strided_slice %323 {offsets = [0, 100], sizes = [8, 50], strides = [1, 1]} : vector<8x150xf32> to vector<8x50xf32>
    %346 = arith.mulf %333, %345 : vector<8x50xf32>
    %347 = arith.addf %344, %346 : vector<8x50xf32>
    %348 = math.tanh %347 : vector<8x50xf32>
    %cst_95 = arith.constant 1.000000e+00 : f32
    %349 = vector.broadcast %cst_95 : f32 to vector<8x50xf32>
    %350 = arith.subf %349, %343 : vector<8x50xf32>
    %351 = arith.mulf %350, %348 : vector<8x50xf32>
    %352 = arith.mulf %343, %303 : vector<8x50xf32>
    %353 = arith.addf %351, %352 : vector<8x50xf32>
    %cst_96 = arith.constant dense<0.000000e+00> : vector<8x1xf32>
    %354 = tpu.matmul %353, %8, %cst_96 {dimension_numbers = #tpu.dot_dimension_numbers<[1], [0], [0], [1], [0, 0, 1, 1], [], []>} : vector<8x50xf32>, vector<50x1xf32>, vector<8x1xf32> -> vector<8x1xf32>
    %355 = vector.broadcast %9 : vector<1x1xf32> to vector<8x1xf32>
    %356 = arith.addf %354, %355 : vector<8x1xf32>
    %357 = vector.broadcast %c6_i32 : i32 to vector<8x12xi32>
    %358 = arith.cmpi eq, %10, %357 : vector<8x12xi32>
    %cst_97 = arith.constant 0.000000e+00 : f32
    %359 = vector.shape_cast %356 : vector<8x1xf32> to vector<8x1xf32>
    %360 = vector.broadcast %359 : vector<8x1xf32> to vector<8x12xf32>
    %361 = vector.broadcast %cst_97 : f32 to vector<8x12xf32>
    %362 = arith.select %358, %360, %361 : vector<8x12xi1>, vector<8x12xf32>
    %363 = arith.addf %313, %362 : vector<8x12xf32>
    %c7_i32 = arith.constant 7 : i32
    %c0_98 = arith.constant 0 : index
    %364 = arith.index_cast %c7_i32 : i32 to index
    %365 = vector.load %arg0[%c0_98, %364] : memref<8x8xf32, #tpu.memory_space<vmem>>, vector<8x1xf32>
    %366 = vector.broadcast %365 : vector<8x1xf32> to vector<8x150xf32>
    %367 = vector.broadcast %0 : vector<1x150xf32> to vector<8x150xf32>
    %368 = arith.mulf %366, %367 : vector<8x150xf32>
    %369 = vector.broadcast %2 : vector<1x150xf32> to vector<8x150xf32>
    %370 = arith.addf %368, %369 : vector<8x150xf32>
    %cst_99 = arith.constant dense<0.000000e+00> : vector<8x150xf32>
    %371 = tpu.matmul %353, %1, %cst_99 {dimension_numbers = #tpu.dot_dimension_numbers<[1], [0], [0], [1], [0, 0, 1, 1], [], []>} : vector<8x50xf32>, vector<50x150xf32>, vector<8x150xf32> -> vector<8x150xf32>
    %372 = vector.broadcast %3 : vector<1x150xf32> to vector<8x150xf32>
    %373 = arith.addf %371, %372 : vector<8x150xf32>
    %374 = vector.extract_strided_slice %370 {offsets = [0, 0], sizes = [8, 50], strides = [1, 1]} : vector<8x150xf32> to vector<8x50xf32>
    %375 = vector.extract_strided_slice %373 {offsets = [0, 0], sizes = [8, 50], strides = [1, 1]} : vector<8x150xf32> to vector<8x50xf32>
    %376 = arith.addf %374, %375 : vector<8x50xf32>
    %cst_100 = arith.constant 5.000000e-01 : f32
    %377 = vector.broadcast %cst_100 : f32 to vector<8x50xf32>
    %378 = arith.mulf %377, %376 : vector<8x50xf32>
    %379 = math.tanh %378 : vector<8x50xf32>
    %cst_101 = arith.constant 5.000000e-01 : f32
    %380 = vector.broadcast %cst_101 : f32 to vector<8x50xf32>
    %381 = arith.mulf %380, %379 : vector<8x50xf32>
    %cst_102 = arith.constant 5.000000e-01 : f32
    %382 = vector.broadcast %cst_102 : f32 to vector<8x50xf32>
    %383 = arith.addf %381, %382 : vector<8x50xf32>
    %384 = vector.extract_strided_slice %370 {offsets = [0, 50], sizes = [8, 50], strides = [1, 1]} : vector<8x150xf32> to vector<8x50xf32>
    %385 = vector.extract_strided_slice %373 {offsets = [0, 50], sizes = [8, 50], strides = [1, 1]} : vector<8x150xf32> to vector<8x50xf32>
    %386 = arith.addf %384, %385 : vector<8x50xf32>
    %cst_103 = arith.constant 5.000000e-01 : f32
    %387 = vector.broadcast %cst_103 : f32 to vector<8x50xf32>
    %388 = arith.mulf %387, %386 : vector<8x50xf32>
    %389 = math.tanh %388 : vector<8x50xf32>
    %cst_104 = arith.constant 5.000000e-01 : f32
    %390 = vector.broadcast %cst_104 : f32 to vector<8x50xf32>
    %391 = arith.mulf %390, %389 : vector<8x50xf32>
    %cst_105 = arith.constant 5.000000e-01 : f32
    %392 = vector.broadcast %cst_105 : f32 to vector<8x50xf32>
    %393 = arith.addf %391, %392 : vector<8x50xf32>
    %394 = vector.extract_strided_slice %370 {offsets = [0, 100], sizes = [8, 50], strides = [1, 1]} : vector<8x150xf32> to vector<8x50xf32>
    %395 = vector.extract_strided_slice %373 {offsets = [0, 100], sizes = [8, 50], strides = [1, 1]} : vector<8x150xf32> to vector<8x50xf32>
    %396 = arith.mulf %383, %395 : vector<8x50xf32>
    %397 = arith.addf %394, %396 : vector<8x50xf32>
    %398 = math.tanh %397 : vector<8x50xf32>
    %cst_106 = arith.constant 1.000000e+00 : f32
    %399 = vector.broadcast %cst_106 : f32 to vector<8x50xf32>
    %400 = arith.subf %399, %393 : vector<8x50xf32>
    %401 = arith.mulf %400, %398 : vector<8x50xf32>
    %402 = arith.mulf %393, %353 : vector<8x50xf32>
    %403 = arith.addf %401, %402 : vector<8x50xf32>
    %cst_107 = arith.constant dense<0.000000e+00> : vector<8x1xf32>
    %404 = tpu.matmul %403, %8, %cst_107 {dimension_numbers = #tpu.dot_dimension_numbers<[1], [0], [0], [1], [0, 0, 1, 1], [], []>} : vector<8x50xf32>, vector<50x1xf32>, vector<8x1xf32> -> vector<8x1xf32>
    %405 = vector.broadcast %9 : vector<1x1xf32> to vector<8x1xf32>
    %406 = arith.addf %404, %405 : vector<8x1xf32>
    %407 = vector.broadcast %c7_i32 : i32 to vector<8x12xi32>
    %408 = arith.cmpi eq, %10, %407 : vector<8x12xi32>
    %cst_108 = arith.constant 0.000000e+00 : f32
    %409 = vector.shape_cast %406 : vector<8x1xf32> to vector<8x1xf32>
    %410 = vector.broadcast %409 : vector<8x1xf32> to vector<8x12xf32>
    %411 = vector.broadcast %cst_108 : f32 to vector<8x12xf32>
    %412 = arith.select %408, %410, %411 : vector<8x12xi1>, vector<8x12xf32>
    %413 = arith.addf %363, %412 : vector<8x12xf32>
    %c8_i32 = arith.constant 8 : i32
    %cst_109 = arith.constant 0.000000e+00 : f32
    %414 = vector.broadcast %cst_109 : f32 to vector<8x50xf32>
    %c0_i32_110 = arith.constant 0 : i32
    %415 = vector.broadcast %406 : vector<8x1xf32> to vector<8x150xf32>
    %416 = vector.broadcast %0 : vector<1x150xf32> to vector<8x150xf32>
    %417 = arith.mulf %415, %416 : vector<8x150xf32>
    %418 = vector.broadcast %2 : vector<1x150xf32> to vector<8x150xf32>
    %419 = arith.addf %417, %418 : vector<8x150xf32>
    %cst_111 = arith.constant dense<0.000000e+00> : vector<8x150xf32>
    %420 = tpu.matmul %403, %1, %cst_111 {dimension_numbers = #tpu.dot_dimension_numbers<[1], [0], [0], [1], [0, 0, 1, 1], [], []>} : vector<8x50xf32>, vector<50x150xf32>, vector<8x150xf32> -> vector<8x150xf32>
    %421 = vector.broadcast %3 : vector<1x150xf32> to vector<8x150xf32>
    %422 = arith.addf %420, %421 : vector<8x150xf32>
    %423 = vector.extract_strided_slice %419 {offsets = [0, 0], sizes = [8, 50], strides = [1, 1]} : vector<8x150xf32> to vector<8x50xf32>
    %424 = vector.extract_strided_slice %422 {offsets = [0, 0], sizes = [8, 50], strides = [1, 1]} : vector<8x150xf32> to vector<8x50xf32>
    %425 = arith.addf %423, %424 : vector<8x50xf32>
    %cst_112 = arith.constant 5.000000e-01 : f32
    %426 = vector.broadcast %cst_112 : f32 to vector<8x50xf32>
    %427 = arith.mulf %426, %425 : vector<8x50xf32>
    %428 = math.tanh %427 : vector<8x50xf32>
    %cst_113 = arith.constant 5.000000e-01 : f32
    %429 = vector.broadcast %cst_113 : f32 to vector<8x50xf32>
    %430 = arith.mulf %429, %428 : vector<8x50xf32>
    %cst_114 = arith.constant 5.000000e-01 : f32
    %431 = vector.broadcast %cst_114 : f32 to vector<8x50xf32>
    %432 = arith.addf %430, %431 : vector<8x50xf32>
    %433 = vector.extract_strided_slice %419 {offsets = [0, 50], sizes = [8, 50], strides = [1, 1]} : vector<8x150xf32> to vector<8x50xf32>
    %434 = vector.extract_strided_slice %422 {offsets = [0, 50], sizes = [8, 50], strides = [1, 1]} : vector<8x150xf32> to vector<8x50xf32>
    %435 = arith.addf %433, %434 : vector<8x50xf32>
    %cst_115 = arith.constant 5.000000e-01 : f32
    %436 = vector.broadcast %cst_115 : f32 to vector<8x50xf32>
    %437 = arith.mulf %436, %435 : vector<8x50xf32>
    %438 = math.tanh %437 : vector<8x50xf32>
    %cst_116 = arith.constant 5.000000e-01 : f32
    %439 = vector.broadcast %cst_116 : f32 to vector<8x50xf32>
    %440 = arith.mulf %439, %438 : vector<8x50xf32>
    %cst_117 = arith.constant 5.000000e-01 : f32
    %441 = vector.broadcast %cst_117 : f32 to vector<8x50xf32>
    %442 = arith.addf %440, %441 : vector<8x50xf32>
    %443 = vector.extract_strided_slice %419 {offsets = [0, 100], sizes = [8, 50], strides = [1, 1]} : vector<8x150xf32> to vector<8x50xf32>
    %444 = vector.extract_strided_slice %422 {offsets = [0, 100], sizes = [8, 50], strides = [1, 1]} : vector<8x150xf32> to vector<8x50xf32>
    %445 = arith.mulf %432, %444 : vector<8x50xf32>
    %446 = arith.addf %443, %445 : vector<8x50xf32>
    %447 = math.tanh %446 : vector<8x50xf32>
    %cst_118 = arith.constant 1.000000e+00 : f32
    %448 = vector.broadcast %cst_118 : f32 to vector<8x50xf32>
    %449 = arith.subf %448, %442 : vector<8x50xf32>
    %450 = arith.mulf %449, %447 : vector<8x50xf32>
    %451 = arith.mulf %442, %403 : vector<8x50xf32>
    %452 = arith.addf %450, %451 : vector<8x50xf32>
    %cst_119 = arith.constant dense<0.000000e+00> : vector<8x150xf32>
    %453 = tpu.matmul %452, %4, %cst_119 {dimension_numbers = #tpu.dot_dimension_numbers<[1], [0], [0], [1], [0, 0, 1, 1], [], []>} : vector<8x50xf32>, vector<50x150xf32>, vector<8x150xf32> -> vector<8x150xf32>
    %454 = vector.broadcast %6 : vector<1x150xf32> to vector<8x150xf32>
    %455 = arith.addf %453, %454 : vector<8x150xf32>
    %cst_120 = arith.constant dense<0.000000e+00> : vector<8x150xf32>
    %456 = tpu.matmul %414, %5, %cst_120 {dimension_numbers = #tpu.dot_dimension_numbers<[1], [0], [0], [1], [0, 0, 1, 1], [], []>} : vector<8x50xf32>, vector<50x150xf32>, vector<8x150xf32> -> vector<8x150xf32>
    %457 = vector.broadcast %7 : vector<1x150xf32> to vector<8x150xf32>
    %458 = arith.addf %456, %457 : vector<8x150xf32>
    %459 = vector.extract_strided_slice %455 {offsets = [0, 0], sizes = [8, 50], strides = [1, 1]} : vector<8x150xf32> to vector<8x50xf32>
    %460 = vector.extract_strided_slice %458 {offsets = [0, 0], sizes = [8, 50], strides = [1, 1]} : vector<8x150xf32> to vector<8x50xf32>
    %461 = arith.addf %459, %460 : vector<8x50xf32>
    %cst_121 = arith.constant 5.000000e-01 : f32
    %462 = vector.broadcast %cst_121 : f32 to vector<8x50xf32>
    %463 = arith.mulf %462, %461 : vector<8x50xf32>
    %464 = math.tanh %463 : vector<8x50xf32>
    %cst_122 = arith.constant 5.000000e-01 : f32
    %465 = vector.broadcast %cst_122 : f32 to vector<8x50xf32>
    %466 = arith.mulf %465, %464 : vector<8x50xf32>
    %cst_123 = arith.constant 5.000000e-01 : f32
    %467 = vector.broadcast %cst_123 : f32 to vector<8x50xf32>
    %468 = arith.addf %466, %467 : vector<8x50xf32>
    %469 = vector.extract_strided_slice %455 {offsets = [0, 50], sizes = [8, 50], strides = [1, 1]} : vector<8x150xf32> to vector<8x50xf32>
    %470 = vector.extract_strided_slice %458 {offsets = [0, 50], sizes = [8, 50], strides = [1, 1]} : vector<8x150xf32> to vector<8x50xf32>
    %471 = arith.addf %469, %470 : vector<8x50xf32>
    %cst_124 = arith.constant 5.000000e-01 : f32
    %472 = vector.broadcast %cst_124 : f32 to vector<8x50xf32>
    %473 = arith.mulf %472, %471 : vector<8x50xf32>
    %474 = math.tanh %473 : vector<8x50xf32>
    %cst_125 = arith.constant 5.000000e-01 : f32
    %475 = vector.broadcast %cst_125 : f32 to vector<8x50xf32>
    %476 = arith.mulf %475, %474 : vector<8x50xf32>
    %cst_126 = arith.constant 5.000000e-01 : f32
    %477 = vector.broadcast %cst_126 : f32 to vector<8x50xf32>
    %478 = arith.addf %476, %477 : vector<8x50xf32>
    %479 = vector.extract_strided_slice %455 {offsets = [0, 100], sizes = [8, 50], strides = [1, 1]} : vector<8x150xf32> to vector<8x50xf32>
    %480 = vector.extract_strided_slice %458 {offsets = [0, 100], sizes = [8, 50], strides = [1, 1]} : vector<8x150xf32> to vector<8x50xf32>
    %481 = arith.mulf %468, %480 : vector<8x50xf32>
    %482 = arith.addf %479, %481 : vector<8x50xf32>
    %483 = math.tanh %482 : vector<8x50xf32>
    %cst_127 = arith.constant 1.000000e+00 : f32
    %484 = vector.broadcast %cst_127 : f32 to vector<8x50xf32>
    %485 = arith.subf %484, %478 : vector<8x50xf32>
    %486 = arith.mulf %485, %483 : vector<8x50xf32>
    %487 = arith.mulf %478, %414 : vector<8x50xf32>
    %488 = arith.addf %486, %487 : vector<8x50xf32>
    %cst_128 = arith.constant dense<0.000000e+00> : vector<8x1xf32>
    %489 = tpu.matmul %488, %8, %cst_128 {dimension_numbers = #tpu.dot_dimension_numbers<[1], [0], [0], [1], [0, 0, 1, 1], [], []>} : vector<8x50xf32>, vector<50x1xf32>, vector<8x1xf32> -> vector<8x1xf32>
    %490 = vector.broadcast %9 : vector<1x1xf32> to vector<8x1xf32>
    %491 = arith.addf %489, %490 : vector<8x1xf32>
    %c8_i32_129 = arith.constant 8 : i32
    %492 = arith.addi %c8_i32_129, %c0_i32_110 : i32
    %493 = vector.broadcast %492 : i32 to vector<8x12xi32>
    %494 = arith.cmpi eq, %10, %493 : vector<8x12xi32>
    %cst_130 = arith.constant 0.000000e+00 : f32
    %495 = vector.shape_cast %491 : vector<8x1xf32> to vector<8x1xf32>
    %496 = vector.broadcast %495 : vector<8x1xf32> to vector<8x12xf32>
    %497 = vector.broadcast %cst_130 : f32 to vector<8x12xf32>
    %498 = arith.select %494, %496, %497 : vector<8x12xi1>, vector<8x12xf32>
    %499 = arith.addf %413, %498 : vector<8x12xf32>
    %c1_i32_131 = arith.constant 1 : i32
    %500 = vector.broadcast %491 : vector<8x1xf32> to vector<8x150xf32>
    %501 = vector.broadcast %0 : vector<1x150xf32> to vector<8x150xf32>
    %502 = arith.mulf %500, %501 : vector<8x150xf32>
    %503 = vector.broadcast %2 : vector<1x150xf32> to vector<8x150xf32>
    %504 = arith.addf %502, %503 : vector<8x150xf32>
    %cst_132 = arith.constant dense<0.000000e+00> : vector<8x150xf32>
    %505 = tpu.matmul %452, %1, %cst_132 {dimension_numbers = #tpu.dot_dimension_numbers<[1], [0], [0], [1], [0, 0, 1, 1], [], []>} : vector<8x50xf32>, vector<50x150xf32>, vector<8x150xf32> -> vector<8x150xf32>
    %506 = vector.broadcast %3 : vector<1x150xf32> to vector<8x150xf32>
    %507 = arith.addf %505, %506 : vector<8x150xf32>
    %508 = vector.extract_strided_slice %504 {offsets = [0, 0], sizes = [8, 50], strides = [1, 1]} : vector<8x150xf32> to vector<8x50xf32>
    %509 = vector.extract_strided_slice %507 {offsets = [0, 0], sizes = [8, 50], strides = [1, 1]} : vector<8x150xf32> to vector<8x50xf32>
    %510 = arith.addf %508, %509 : vector<8x50xf32>
    %cst_133 = arith.constant 5.000000e-01 : f32
    %511 = vector.broadcast %cst_133 : f32 to vector<8x50xf32>
    %512 = arith.mulf %511, %510 : vector<8x50xf32>
    %513 = math.tanh %512 : vector<8x50xf32>
    %cst_134 = arith.constant 5.000000e-01 : f32
    %514 = vector.broadcast %cst_134 : f32 to vector<8x50xf32>
    %515 = arith.mulf %514, %513 : vector<8x50xf32>
    %cst_135 = arith.constant 5.000000e-01 : f32
    %516 = vector.broadcast %cst_135 : f32 to vector<8x50xf32>
    %517 = arith.addf %515, %516 : vector<8x50xf32>
    %518 = vector.extract_strided_slice %504 {offsets = [0, 50], sizes = [8, 50], strides = [1, 1]} : vector<8x150xf32> to vector<8x50xf32>
    %519 = vector.extract_strided_slice %507 {offsets = [0, 50], sizes = [8, 50], strides = [1, 1]} : vector<8x150xf32> to vector<8x50xf32>
    %520 = arith.addf %518, %519 : vector<8x50xf32>
    %cst_136 = arith.constant 5.000000e-01 : f32
    %521 = vector.broadcast %cst_136 : f32 to vector<8x50xf32>
    %522 = arith.mulf %521, %520 : vector<8x50xf32>
    %523 = math.tanh %522 : vector<8x50xf32>
    %cst_137 = arith.constant 5.000000e-01 : f32
    %524 = vector.broadcast %cst_137 : f32 to vector<8x50xf32>
    %525 = arith.mulf %524, %523 : vector<8x50xf32>
    %cst_138 = arith.constant 5.000000e-01 : f32
    %526 = vector.broadcast %cst_138 : f32 to vector<8x50xf32>
    %527 = arith.addf %525, %526 : vector<8x50xf32>
    %528 = vector.extract_strided_slice %504 {offsets = [0, 100], sizes = [8, 50], strides = [1, 1]} : vector<8x150xf32> to vector<8x50xf32>
    %529 = vector.extract_strided_slice %507 {offsets = [0, 100], sizes = [8, 50], strides = [1, 1]} : vector<8x150xf32> to vector<8x50xf32>
    %530 = arith.mulf %517, %529 : vector<8x50xf32>
    %531 = arith.addf %528, %530 : vector<8x50xf32>
    %532 = math.tanh %531 : vector<8x50xf32>
    %cst_139 = arith.constant 1.000000e+00 : f32
    %533 = vector.broadcast %cst_139 : f32 to vector<8x50xf32>
    %534 = arith.subf %533, %527 : vector<8x50xf32>
    %535 = arith.mulf %534, %532 : vector<8x50xf32>
    %536 = arith.mulf %527, %452 : vector<8x50xf32>
    %537 = arith.addf %535, %536 : vector<8x50xf32>
    %cst_140 = arith.constant dense<0.000000e+00> : vector<8x150xf32>
    %538 = tpu.matmul %537, %4, %cst_140 {dimension_numbers = #tpu.dot_dimension_numbers<[1], [0], [0], [1], [0, 0, 1, 1], [], []>} : vector<8x50xf32>, vector<50x150xf32>, vector<8x150xf32> -> vector<8x150xf32>
    %539 = vector.broadcast %6 : vector<1x150xf32> to vector<8x150xf32>
    %540 = arith.addf %538, %539 : vector<8x150xf32>
    %cst_141 = arith.constant dense<0.000000e+00> : vector<8x150xf32>
    %541 = tpu.matmul %488, %5, %cst_141 {dimension_numbers = #tpu.dot_dimension_numbers<[1], [0], [0], [1], [0, 0, 1, 1], [], []>} : vector<8x50xf32>, vector<50x150xf32>, vector<8x150xf32> -> vector<8x150xf32>
    %542 = vector.broadcast %7 : vector<1x150xf32> to vector<8x150xf32>
    %543 = arith.addf %541, %542 : vector<8x150xf32>
    %544 = vector.extract_strided_slice %540 {offsets = [0, 0], sizes = [8, 50], strides = [1, 1]} : vector<8x150xf32> to vector<8x50xf32>
    %545 = vector.extract_strided_slice %543 {offsets = [0, 0], sizes = [8, 50], strides = [1, 1]} : vector<8x150xf32> to vector<8x50xf32>
    %546 = arith.addf %544, %545 : vector<8x50xf32>
    %cst_142 = arith.constant 5.000000e-01 : f32
    %547 = vector.broadcast %cst_142 : f32 to vector<8x50xf32>
    %548 = arith.mulf %547, %546 : vector<8x50xf32>
    %549 = math.tanh %548 : vector<8x50xf32>
    %cst_143 = arith.constant 5.000000e-01 : f32
    %550 = vector.broadcast %cst_143 : f32 to vector<8x50xf32>
    %551 = arith.mulf %550, %549 : vector<8x50xf32>
    %cst_144 = arith.constant 5.000000e-01 : f32
    %552 = vector.broadcast %cst_144 : f32 to vector<8x50xf32>
    %553 = arith.addf %551, %552 : vector<8x50xf32>
    %554 = vector.extract_strided_slice %540 {offsets = [0, 50], sizes = [8, 50], strides = [1, 1]} : vector<8x150xf32> to vector<8x50xf32>
    %555 = vector.extract_strided_slice %543 {offsets = [0, 50], sizes = [8, 50], strides = [1, 1]} : vector<8x150xf32> to vector<8x50xf32>
    %556 = arith.addf %554, %555 : vector<8x50xf32>
    %cst_145 = arith.constant 5.000000e-01 : f32
    %557 = vector.broadcast %cst_145 : f32 to vector<8x50xf32>
    %558 = arith.mulf %557, %556 : vector<8x50xf32>
    %559 = math.tanh %558 : vector<8x50xf32>
    %cst_146 = arith.constant 5.000000e-01 : f32
    %560 = vector.broadcast %cst_146 : f32 to vector<8x50xf32>
    %561 = arith.mulf %560, %559 : vector<8x50xf32>
    %cst_147 = arith.constant 5.000000e-01 : f32
    %562 = vector.broadcast %cst_147 : f32 to vector<8x50xf32>
    %563 = arith.addf %561, %562 : vector<8x50xf32>
    %564 = vector.extract_strided_slice %540 {offsets = [0, 100], sizes = [8, 50], strides = [1, 1]} : vector<8x150xf32> to vector<8x50xf32>
    %565 = vector.extract_strided_slice %543 {offsets = [0, 100], sizes = [8, 50], strides = [1, 1]} : vector<8x150xf32> to vector<8x50xf32>
    %566 = arith.mulf %553, %565 : vector<8x50xf32>
    %567 = arith.addf %564, %566 : vector<8x50xf32>
    %568 = math.tanh %567 : vector<8x50xf32>
    %cst_148 = arith.constant 1.000000e+00 : f32
    %569 = vector.broadcast %cst_148 : f32 to vector<8x50xf32>
    %570 = arith.subf %569, %563 : vector<8x50xf32>
    %571 = arith.mulf %570, %568 : vector<8x50xf32>
    %572 = arith.mulf %563, %488 : vector<8x50xf32>
    %573 = arith.addf %571, %572 : vector<8x50xf32>
    %cst_149 = arith.constant dense<0.000000e+00> : vector<8x1xf32>
    %574 = tpu.matmul %573, %8, %cst_149 {dimension_numbers = #tpu.dot_dimension_numbers<[1], [0], [0], [1], [0, 0, 1, 1], [], []>} : vector<8x50xf32>, vector<50x1xf32>, vector<8x1xf32> -> vector<8x1xf32>
    %575 = vector.broadcast %9 : vector<1x1xf32> to vector<8x1xf32>
    %576 = arith.addf %574, %575 : vector<8x1xf32>
    %c8_i32_150 = arith.constant 8 : i32
    %577 = arith.addi %c8_i32_150, %c1_i32_131 : i32
    %578 = vector.broadcast %577 : i32 to vector<8x12xi32>
    %579 = arith.cmpi eq, %10, %578 : vector<8x12xi32>
    %cst_151 = arith.constant 0.000000e+00 : f32
    %580 = vector.shape_cast %576 : vector<8x1xf32> to vector<8x1xf32>
    %581 = vector.broadcast %580 : vector<8x1xf32> to vector<8x12xf32>
    %582 = vector.broadcast %cst_151 : f32 to vector<8x12xf32>
    %583 = arith.select %579, %581, %582 : vector<8x12xi1>, vector<8x12xf32>
    %584 = arith.addf %499, %583 : vector<8x12xf32>
    %c2_i32_152 = arith.constant 2 : i32
    %585 = vector.broadcast %576 : vector<8x1xf32> to vector<8x150xf32>
    %586 = vector.broadcast %0 : vector<1x150xf32> to vector<8x150xf32>
    %587 = arith.mulf %585, %586 : vector<8x150xf32>
    %588 = vector.broadcast %2 : vector<1x150xf32> to vector<8x150xf32>
    %589 = arith.addf %587, %588 : vector<8x150xf32>
    %cst_153 = arith.constant dense<0.000000e+00> : vector<8x150xf32>
    %590 = tpu.matmul %537, %1, %cst_153 {dimension_numbers = #tpu.dot_dimension_numbers<[1], [0], [0], [1], [0, 0, 1, 1], [], []>} : vector<8x50xf32>, vector<50x150xf32>, vector<8x150xf32> -> vector<8x150xf32>
    %591 = vector.broadcast %3 : vector<1x150xf32> to vector<8x150xf32>
    %592 = arith.addf %590, %591 : vector<8x150xf32>
    %593 = vector.extract_strided_slice %589 {offsets = [0, 0], sizes = [8, 50], strides = [1, 1]} : vector<8x150xf32> to vector<8x50xf32>
    %594 = vector.extract_strided_slice %592 {offsets = [0, 0], sizes = [8, 50], strides = [1, 1]} : vector<8x150xf32> to vector<8x50xf32>
    %595 = arith.addf %593, %594 : vector<8x50xf32>
    %cst_154 = arith.constant 5.000000e-01 : f32
    %596 = vector.broadcast %cst_154 : f32 to vector<8x50xf32>
    %597 = arith.mulf %596, %595 : vector<8x50xf32>
    %598 = math.tanh %597 : vector<8x50xf32>
    %cst_155 = arith.constant 5.000000e-01 : f32
    %599 = vector.broadcast %cst_155 : f32 to vector<8x50xf32>
    %600 = arith.mulf %599, %598 : vector<8x50xf32>
    %cst_156 = arith.constant 5.000000e-01 : f32
    %601 = vector.broadcast %cst_156 : f32 to vector<8x50xf32>
    %602 = arith.addf %600, %601 : vector<8x50xf32>
    %603 = vector.extract_strided_slice %589 {offsets = [0, 50], sizes = [8, 50], strides = [1, 1]} : vector<8x150xf32> to vector<8x50xf32>
    %604 = vector.extract_strided_slice %592 {offsets = [0, 50], sizes = [8, 50], strides = [1, 1]} : vector<8x150xf32> to vector<8x50xf32>
    %605 = arith.addf %603, %604 : vector<8x50xf32>
    %cst_157 = arith.constant 5.000000e-01 : f32
    %606 = vector.broadcast %cst_157 : f32 to vector<8x50xf32>
    %607 = arith.mulf %606, %605 : vector<8x50xf32>
    %608 = math.tanh %607 : vector<8x50xf32>
    %cst_158 = arith.constant 5.000000e-01 : f32
    %609 = vector.broadcast %cst_158 : f32 to vector<8x50xf32>
    %610 = arith.mulf %609, %608 : vector<8x50xf32>
    %cst_159 = arith.constant 5.000000e-01 : f32
    %611 = vector.broadcast %cst_159 : f32 to vector<8x50xf32>
    %612 = arith.addf %610, %611 : vector<8x50xf32>
    %613 = vector.extract_strided_slice %589 {offsets = [0, 100], sizes = [8, 50], strides = [1, 1]} : vector<8x150xf32> to vector<8x50xf32>
    %614 = vector.extract_strided_slice %592 {offsets = [0, 100], sizes = [8, 50], strides = [1, 1]} : vector<8x150xf32> to vector<8x50xf32>
    %615 = arith.mulf %602, %614 : vector<8x50xf32>
    %616 = arith.addf %613, %615 : vector<8x50xf32>
    %617 = math.tanh %616 : vector<8x50xf32>
    %cst_160 = arith.constant 1.000000e+00 : f32
    %618 = vector.broadcast %cst_160 : f32 to vector<8x50xf32>
    %619 = arith.subf %618, %612 : vector<8x50xf32>
    %620 = arith.mulf %619, %617 : vector<8x50xf32>
    %621 = arith.mulf %612, %537 : vector<8x50xf32>
    %622 = arith.addf %620, %621 : vector<8x50xf32>
    %cst_161 = arith.constant dense<0.000000e+00> : vector<8x150xf32>
    %623 = tpu.matmul %622, %4, %cst_161 {dimension_numbers = #tpu.dot_dimension_numbers<[1], [0], [0], [1], [0, 0, 1, 1], [], []>} : vector<8x50xf32>, vector<50x150xf32>, vector<8x150xf32> -> vector<8x150xf32>
    %624 = vector.broadcast %6 : vector<1x150xf32> to vector<8x150xf32>
    %625 = arith.addf %623, %624 : vector<8x150xf32>
    %cst_162 = arith.constant dense<0.000000e+00> : vector<8x150xf32>
    %626 = tpu.matmul %573, %5, %cst_162 {dimension_numbers = #tpu.dot_dimension_numbers<[1], [0], [0], [1], [0, 0, 1, 1], [], []>} : vector<8x50xf32>, vector<50x150xf32>, vector<8x150xf32> -> vector<8x150xf32>
    %627 = vector.broadcast %7 : vector<1x150xf32> to vector<8x150xf32>
    %628 = arith.addf %626, %627 : vector<8x150xf32>
    %629 = vector.extract_strided_slice %625 {offsets = [0, 0], sizes = [8, 50], strides = [1, 1]} : vector<8x150xf32> to vector<8x50xf32>
    %630 = vector.extract_strided_slice %628 {offsets = [0, 0], sizes = [8, 50], strides = [1, 1]} : vector<8x150xf32> to vector<8x50xf32>
    %631 = arith.addf %629, %630 : vector<8x50xf32>
    %cst_163 = arith.constant 5.000000e-01 : f32
    %632 = vector.broadcast %cst_163 : f32 to vector<8x50xf32>
    %633 = arith.mulf %632, %631 : vector<8x50xf32>
    %634 = math.tanh %633 : vector<8x50xf32>
    %cst_164 = arith.constant 5.000000e-01 : f32
    %635 = vector.broadcast %cst_164 : f32 to vector<8x50xf32>
    %636 = arith.mulf %635, %634 : vector<8x50xf32>
    %cst_165 = arith.constant 5.000000e-01 : f32
    %637 = vector.broadcast %cst_165 : f32 to vector<8x50xf32>
    %638 = arith.addf %636, %637 : vector<8x50xf32>
    %639 = vector.extract_strided_slice %625 {offsets = [0, 50], sizes = [8, 50], strides = [1, 1]} : vector<8x150xf32> to vector<8x50xf32>
    %640 = vector.extract_strided_slice %628 {offsets = [0, 50], sizes = [8, 50], strides = [1, 1]} : vector<8x150xf32> to vector<8x50xf32>
    %641 = arith.addf %639, %640 : vector<8x50xf32>
    %cst_166 = arith.constant 5.000000e-01 : f32
    %642 = vector.broadcast %cst_166 : f32 to vector<8x50xf32>
    %643 = arith.mulf %642, %641 : vector<8x50xf32>
    %644 = math.tanh %643 : vector<8x50xf32>
    %cst_167 = arith.constant 5.000000e-01 : f32
    %645 = vector.broadcast %cst_167 : f32 to vector<8x50xf32>
    %646 = arith.mulf %645, %644 : vector<8x50xf32>
    %cst_168 = arith.constant 5.000000e-01 : f32
    %647 = vector.broadcast %cst_168 : f32 to vector<8x50xf32>
    %648 = arith.addf %646, %647 : vector<8x50xf32>
    %649 = vector.extract_strided_slice %625 {offsets = [0, 100], sizes = [8, 50], strides = [1, 1]} : vector<8x150xf32> to vector<8x50xf32>
    %650 = vector.extract_strided_slice %628 {offsets = [0, 100], sizes = [8, 50], strides = [1, 1]} : vector<8x150xf32> to vector<8x50xf32>
    %651 = arith.mulf %638, %650 : vector<8x50xf32>
    %652 = arith.addf %649, %651 : vector<8x50xf32>
    %653 = math.tanh %652 : vector<8x50xf32>
    %cst_169 = arith.constant 1.000000e+00 : f32
    %654 = vector.broadcast %cst_169 : f32 to vector<8x50xf32>
    %655 = arith.subf %654, %648 : vector<8x50xf32>
    %656 = arith.mulf %655, %653 : vector<8x50xf32>
    %657 = arith.mulf %648, %573 : vector<8x50xf32>
    %658 = arith.addf %656, %657 : vector<8x50xf32>
    %cst_170 = arith.constant dense<0.000000e+00> : vector<8x1xf32>
    %659 = tpu.matmul %658, %8, %cst_170 {dimension_numbers = #tpu.dot_dimension_numbers<[1], [0], [0], [1], [0, 0, 1, 1], [], []>} : vector<8x50xf32>, vector<50x1xf32>, vector<8x1xf32> -> vector<8x1xf32>
    %660 = vector.broadcast %9 : vector<1x1xf32> to vector<8x1xf32>
    %661 = arith.addf %659, %660 : vector<8x1xf32>
    %c8_i32_171 = arith.constant 8 : i32
    %662 = arith.addi %c8_i32_171, %c2_i32_152 : i32
    %663 = vector.broadcast %662 : i32 to vector<8x12xi32>
    %664 = arith.cmpi eq, %10, %663 : vector<8x12xi32>
    %cst_172 = arith.constant 0.000000e+00 : f32
    %665 = vector.shape_cast %661 : vector<8x1xf32> to vector<8x1xf32>
    %666 = vector.broadcast %665 : vector<8x1xf32> to vector<8x12xf32>
    %667 = vector.broadcast %cst_172 : f32 to vector<8x12xf32>
    %668 = arith.select %664, %666, %667 : vector<8x12xi1>, vector<8x12xf32>
    %669 = arith.addf %584, %668 : vector<8x12xf32>
    %c3_i32_173 = arith.constant 3 : i32
    %670 = vector.broadcast %661 : vector<8x1xf32> to vector<8x150xf32>
    %671 = vector.broadcast %0 : vector<1x150xf32> to vector<8x150xf32>
    %672 = arith.mulf %670, %671 : vector<8x150xf32>
    %673 = vector.broadcast %2 : vector<1x150xf32> to vector<8x150xf32>
    %674 = arith.addf %672, %673 : vector<8x150xf32>
    %cst_174 = arith.constant dense<0.000000e+00> : vector<8x150xf32>
    %675 = tpu.matmul %622, %1, %cst_174 {dimension_numbers = #tpu.dot_dimension_numbers<[1], [0], [0], [1], [0, 0, 1, 1], [], []>} : vector<8x50xf32>, vector<50x150xf32>, vector<8x150xf32> -> vector<8x150xf32>
    %676 = vector.broadcast %3 : vector<1x150xf32> to vector<8x150xf32>
    %677 = arith.addf %675, %676 : vector<8x150xf32>
    %678 = vector.extract_strided_slice %674 {offsets = [0, 0], sizes = [8, 50], strides = [1, 1]} : vector<8x150xf32> to vector<8x50xf32>
    %679 = vector.extract_strided_slice %677 {offsets = [0, 0], sizes = [8, 50], strides = [1, 1]} : vector<8x150xf32> to vector<8x50xf32>
    %680 = arith.addf %678, %679 : vector<8x50xf32>
    %cst_175 = arith.constant 5.000000e-01 : f32
    %681 = vector.broadcast %cst_175 : f32 to vector<8x50xf32>
    %682 = arith.mulf %681, %680 : vector<8x50xf32>
    %683 = math.tanh %682 : vector<8x50xf32>
    %cst_176 = arith.constant 5.000000e-01 : f32
    %684 = vector.broadcast %cst_176 : f32 to vector<8x50xf32>
    %685 = arith.mulf %684, %683 : vector<8x50xf32>
    %cst_177 = arith.constant 5.000000e-01 : f32
    %686 = vector.broadcast %cst_177 : f32 to vector<8x50xf32>
    %687 = arith.addf %685, %686 : vector<8x50xf32>
    %688 = vector.extract_strided_slice %674 {offsets = [0, 50], sizes = [8, 50], strides = [1, 1]} : vector<8x150xf32> to vector<8x50xf32>
    %689 = vector.extract_strided_slice %677 {offsets = [0, 50], sizes = [8, 50], strides = [1, 1]} : vector<8x150xf32> to vector<8x50xf32>
    %690 = arith.addf %688, %689 : vector<8x50xf32>
    %cst_178 = arith.constant 5.000000e-01 : f32
    %691 = vector.broadcast %cst_178 : f32 to vector<8x50xf32>
    %692 = arith.mulf %691, %690 : vector<8x50xf32>
    %693 = math.tanh %692 : vector<8x50xf32>
    %cst_179 = arith.constant 5.000000e-01 : f32
    %694 = vector.broadcast %cst_179 : f32 to vector<8x50xf32>
    %695 = arith.mulf %694, %693 : vector<8x50xf32>
    %cst_180 = arith.constant 5.000000e-01 : f32
    %696 = vector.broadcast %cst_180 : f32 to vector<8x50xf32>
    %697 = arith.addf %695, %696 : vector<8x50xf32>
    %698 = vector.extract_strided_slice %674 {offsets = [0, 100], sizes = [8, 50], strides = [1, 1]} : vector<8x150xf32> to vector<8x50xf32>
    %699 = vector.extract_strided_slice %677 {offsets = [0, 100], sizes = [8, 50], strides = [1, 1]} : vector<8x150xf32> to vector<8x50xf32>
    %700 = arith.mulf %687, %699 : vector<8x50xf32>
    %701 = arith.addf %698, %700 : vector<8x50xf32>
    %702 = math.tanh %701 : vector<8x50xf32>
    %cst_181 = arith.constant 1.000000e+00 : f32
    %703 = vector.broadcast %cst_181 : f32 to vector<8x50xf32>
    %704 = arith.subf %703, %697 : vector<8x50xf32>
    %705 = arith.mulf %704, %702 : vector<8x50xf32>
    %706 = arith.mulf %697, %622 : vector<8x50xf32>
    %707 = arith.addf %705, %706 : vector<8x50xf32>
    %cst_182 = arith.constant dense<0.000000e+00> : vector<8x150xf32>
    %708 = tpu.matmul %707, %4, %cst_182 {dimension_numbers = #tpu.dot_dimension_numbers<[1], [0], [0], [1], [0, 0, 1, 1], [], []>} : vector<8x50xf32>, vector<50x150xf32>, vector<8x150xf32> -> vector<8x150xf32>
    %709 = vector.broadcast %6 : vector<1x150xf32> to vector<8x150xf32>
    %710 = arith.addf %708, %709 : vector<8x150xf32>
    %cst_183 = arith.constant dense<0.000000e+00> : vector<8x150xf32>
    %711 = tpu.matmul %658, %5, %cst_183 {dimension_numbers = #tpu.dot_dimension_numbers<[1], [0], [0], [1], [0, 0, 1, 1], [], []>} : vector<8x50xf32>, vector<50x150xf32>, vector<8x150xf32> -> vector<8x150xf32>
    %712 = vector.broadcast %7 : vector<1x150xf32> to vector<8x150xf32>
    %713 = arith.addf %711, %712 : vector<8x150xf32>
    %714 = vector.extract_strided_slice %710 {offsets = [0, 0], sizes = [8, 50], strides = [1, 1]} : vector<8x150xf32> to vector<8x50xf32>
    %715 = vector.extract_strided_slice %713 {offsets = [0, 0], sizes = [8, 50], strides = [1, 1]} : vector<8x150xf32> to vector<8x50xf32>
    %716 = arith.addf %714, %715 : vector<8x50xf32>
    %cst_184 = arith.constant 5.000000e-01 : f32
    %717 = vector.broadcast %cst_184 : f32 to vector<8x50xf32>
    %718 = arith.mulf %717, %716 : vector<8x50xf32>
    %719 = math.tanh %718 : vector<8x50xf32>
    %cst_185 = arith.constant 5.000000e-01 : f32
    %720 = vector.broadcast %cst_185 : f32 to vector<8x50xf32>
    %721 = arith.mulf %720, %719 : vector<8x50xf32>
    %cst_186 = arith.constant 5.000000e-01 : f32
    %722 = vector.broadcast %cst_186 : f32 to vector<8x50xf32>
    %723 = arith.addf %721, %722 : vector<8x50xf32>
    %724 = vector.extract_strided_slice %710 {offsets = [0, 50], sizes = [8, 50], strides = [1, 1]} : vector<8x150xf32> to vector<8x50xf32>
    %725 = vector.extract_strided_slice %713 {offsets = [0, 50], sizes = [8, 50], strides = [1, 1]} : vector<8x150xf32> to vector<8x50xf32>
    %726 = arith.addf %724, %725 : vector<8x50xf32>
    %cst_187 = arith.constant 5.000000e-01 : f32
    %727 = vector.broadcast %cst_187 : f32 to vector<8x50xf32>
    %728 = arith.mulf %727, %726 : vector<8x50xf32>
    %729 = math.tanh %728 : vector<8x50xf32>
    %cst_188 = arith.constant 5.000000e-01 : f32
    %730 = vector.broadcast %cst_188 : f32 to vector<8x50xf32>
    %731 = arith.mulf %730, %729 : vector<8x50xf32>
    %cst_189 = arith.constant 5.000000e-01 : f32
    %732 = vector.broadcast %cst_189 : f32 to vector<8x50xf32>
    %733 = arith.addf %731, %732 : vector<8x50xf32>
    %734 = vector.extract_strided_slice %710 {offsets = [0, 100], sizes = [8, 50], strides = [1, 1]} : vector<8x150xf32> to vector<8x50xf32>
    %735 = vector.extract_strided_slice %713 {offsets = [0, 100], sizes = [8, 50], strides = [1, 1]} : vector<8x150xf32> to vector<8x50xf32>
    %736 = arith.mulf %723, %735 : vector<8x50xf32>
    %737 = arith.addf %734, %736 : vector<8x50xf32>
    %738 = math.tanh %737 : vector<8x50xf32>
    %cst_190 = arith.constant 1.000000e+00 : f32
    %739 = vector.broadcast %cst_190 : f32 to vector<8x50xf32>
    %740 = arith.subf %739, %733 : vector<8x50xf32>
    %741 = arith.mulf %740, %738 : vector<8x50xf32>
    %742 = arith.mulf %733, %658 : vector<8x50xf32>
    %743 = arith.addf %741, %742 : vector<8x50xf32>
    %cst_191 = arith.constant dense<0.000000e+00> : vector<8x1xf32>
    %744 = tpu.matmul %743, %8, %cst_191 {dimension_numbers = #tpu.dot_dimension_numbers<[1], [0], [0], [1], [0, 0, 1, 1], [], []>} : vector<8x50xf32>, vector<50x1xf32>, vector<8x1xf32> -> vector<8x1xf32>
    %745 = vector.broadcast %9 : vector<1x1xf32> to vector<8x1xf32>
    %746 = arith.addf %744, %745 : vector<8x1xf32>
    %c8_i32_192 = arith.constant 8 : i32
    %747 = arith.addi %c8_i32_192, %c3_i32_173 : i32
    %748 = vector.broadcast %747 : i32 to vector<8x12xi32>
    %749 = arith.cmpi eq, %10, %748 : vector<8x12xi32>
    %cst_193 = arith.constant 0.000000e+00 : f32
    %750 = vector.shape_cast %746 : vector<8x1xf32> to vector<8x1xf32>
    %751 = vector.broadcast %750 : vector<8x1xf32> to vector<8x12xf32>
    %752 = vector.broadcast %cst_193 : f32 to vector<8x12xf32>
    %753 = arith.select %749, %751, %752 : vector<8x12xi1>, vector<8x12xf32>
    %754 = arith.addf %669, %753 : vector<8x12xf32>
    %c4_i32_194 = arith.constant 4 : i32
    %c0_195 = arith.constant 0 : index
    %c0_196 = arith.constant 0 : index
    %755 = vector.load %arg11[%c0_195, %c0_196] : memref<8x12xf32, #tpu.memory_space<vmem>>, vector<8x12xf32>
    tpu.vector_store %arg11[%c0_195, %c0_196], %754 {strides = array<i32>} : memref<8x12xf32, #tpu.memory_space<vmem>>, vector<8x12xf32>,
    return
  }
}

</mosaic_0001>

<llo_original>
// kernel: tpu_custom_call.1
$region0: #{tpu_custom_call.1}
  #allocation0 [shape = 'u32[]', space=smem, size = 0x4, offset = 0x4, fixed_abs, tag = 'smem constant byte address 0x4 - core index']
  #allocation1 [shape = 'u32[144,128]{1,0:T(1,128)}', space=vmem, size = 0x12000, scoped, tag = 'internal scratch']
  #allocation2 [shape = 'f32[1,1]{1,0:T(1,128)S(1)}', space=vmem, size = 0x200, scoped, tag = 'scoped memory for tpu_custom_call.1']
  %s0 = inlined_call_operand.vmem [shape: f32[8,8], index: 0, kind: input, shape index: {}]
  %s1 = inlined_call_operand.vmem [shape: f32[1,150], index: 1, kind: input, shape index: {}]
  %s2 = inlined_call_operand.hbm [shape: f32[50,150], index: 2, kind: input, shape index: {}]
  %s3 = inlined_call_operand.vmem [shape: f32[1,150], index: 3, kind: input, shape index: {}]
  %s4 = inlined_call_operand.vmem [shape: f32[1,150], index: 4, kind: input, shape index: {}]
  %s5 = inlined_call_operand.hbm [shape: f32[50,150], index: 5, kind: input, shape index: {}]
  %s6 = inlined_call_operand.hbm [shape: f32[50,150], index: 6, kind: input, shape index: {}]
  %s7 = inlined_call_operand.vmem [shape: f32[1,150], index: 7, kind: input, shape index: {}]
  %s8 = inlined_call_operand.vmem [shape: f32[1,150], index: 8, kind: input, shape index: {}]
  %s9 = inlined_call_operand.vmem [shape: f32[50,1], index: 9, kind: input, shape index: {}]
  %s10 = inlined_call_operand.<no memory space> [shape: f32[1,1], index: 10, kind: input, shape index: {}]
  %s11 = inlined_call_operand.hbm [shape: f32[8,12], index: 11, kind: output, shape index: {}]
  %s12 = sld [smem:[#allocation0]]
  $region66: #{tpu_custom_call.1} parent=0
    _
  %s14 = ssub.s32 1, %s12
  %s15 = scalar_select 0, %s14, %s12
  %v16 = vstv %s10
  %17 = vst [vmem:[#allocation2] sm:$0x1] %v16
  $region1: #{tpu_custom_call.1} parent=0
    #allocation3 [shape = 'u8[57344]{0}', space=vmem, size = 0xe000, scoped, tag = 'input window, operand 2, single buffered']
    #allocation4 [shape = 's32[1]{0}', space=sflag, size = 0x4, scoped, tag = 'scoped memory for tpu_custom_call.1']
    #allocation5 [shape = 's32[1]{0}', space=sflag, size = 0x4, scoped, tag = 'scoped memory for tpu_custom_call.1']
    #allocation6 [shape = 'u8[57344]{0}', space=vmem, size = 0xe000, scoped, tag = 'input window, operand 5, single buffered']
    #allocation7 [shape = 's32[1]{0}', space=sflag, size = 0x4, scoped, tag = 'scoped memory for tpu_custom_call.1']
    #allocation8 [shape = 'u8[57344]{0}', space=vmem, size = 0xe000, scoped, tag = 'input window, operand 6, single buffered']
    #allocation9 [shape = 'u8[4096]{0}', space=vmem, size = 0x1000, scoped, tag = 'output window, operand 0, single buffered']
    %18 = vsyncpa [#allocation4], 0
    %19 = vsyncpa [#allocation7], 0
    %20 = vsyncpa [#allocation5], 0
    // Predicated region
    $region2: #{tpu_custom_call.1} parent=1 // pred_check
      _
    $region3: #{tpu_custom_call.1} parent=1 // pred_check_branch
      %22 = sbr.rel (0) target = $region5
    $region4: #{tpu_custom_call.1} parent=1 // pred_region
      _
    $region5: #{tpu_custom_call.1} parent=1 // pred_fallthru
      _
    // Predicated region
    $region6: #{tpu_custom_call.1} parent=1 // pred_check
      _
    $region7: #{tpu_custom_call.1} parent=1 // pred_check_branch
      %24 = sbr.rel (0) target = $region9
    $region8: #{tpu_custom_call.1} parent=1 // pred_region
      _
    $region9: #{tpu_custom_call.1} parent=1 // pred_fallthru
      _
    // Predicated region
    $region10: #{tpu_custom_call.1} parent=1 // pred_check
      _
    $region11: #{tpu_custom_call.1} parent=1 // pred_check_branch
      %26 = sbr.rel (0) target = $region13
    $region12: #{tpu_custom_call.1} parent=1 // pred_region
      %s28 = ssub.s32 1792, 1792
      %29 = vsyncadd [#allocation4], %s28
      %s30 = sshll.u32 [#allocation3], 4
      %s31 = int_to_ptr.vmem [resolvable:$true] %s30
      %36 = dma.hbm_to_vmem [thread:$0]  %s2, 1792, %s31, [#allocation4], 256, 256, 16
    $region13: #{tpu_custom_call.1} parent=1 // pred_fallthru
      _
    // Predicated region
    $region14: #{tpu_custom_call.1} parent=1 // pred_check
      _
    $region15: #{tpu_custom_call.1} parent=1 // pred_check_branch
      %38 = sbr.rel (0) target = $region17
    $region16: #{tpu_custom_call.1} parent=1 // pred_region
      _
    $region17: #{tpu_custom_call.1} parent=1 // pred_fallthru
      _
    // Predicated region
    $region18: #{tpu_custom_call.1} parent=1 // pred_check
      _
    $region19: #{tpu_custom_call.1} parent=1 // pred_check_branch
      %40 = sbr.rel (0) target = $region21
    $region20: #{tpu_custom_call.1} parent=1 // pred_region
      _
    $region21: #{tpu_custom_call.1} parent=1 // pred_fallthru
      _
    // Predicated region
    $region22: #{tpu_custom_call.1} parent=1 // pred_check
      _
    $region23: #{tpu_custom_call.1} parent=1 // pred_check_branch
      %42 = sbr.rel (0) target = $region25
    $region24: #{tpu_custom_call.1} parent=1 // pred_region
      %s44 = ssub.s32 1792, 1792
      %45 = vsyncadd [#allocation7], %s44
      %s46 = sshll.u32 [#allocation6], 4
      %s47 = int_to_ptr.vmem [resolvable:$true] %s46
      %52 = dma.hbm_to_vmem [thread:$0]  %s5, 1792, %s47, [#allocation7], 256, 256, 16
    $region25: #{tpu_custom_call.1} parent=1 // pred_fallthru
      _
    // Predicated region
    $region26: #{tpu_custom_call.1} parent=1 // pred_check
      _
    $region27: #{tpu_custom_call.1} parent=1 // pred_check_branch
      %54 = sbr.rel (0) target = $region29
    $region28: #{tpu_custom_call.1} parent=1 // pred_region
      %s56 = ssub.s32 1792, 1792
      %57 = vsyncadd [#allocation7], %s56
      %s58 = sshll.u32 [#allocation8], 4
      %s59 = int_to_ptr.vmem [resolvable:$true] %s58
      %64 = dma.hbm_to_vmem [thread:$0]  %s6, 1792, %s59, [#allocation7], 256, 256, 16
    $region29: #{tpu_custom_call.1} parent=1 // pred_fallthru
      _
    // Predicated region
    $region30: #{tpu_custom_call.1} parent=1 // pred_check
      _
    $region31: #{tpu_custom_call.1} parent=1 // pred_check_branch
      %66 = sbr.rel (0) target = $region33
    $region32: #{tpu_custom_call.1} parent=1 // pred_region
      _
    $region33: #{tpu_custom_call.1} parent=1 // pred_fallthru
      _
    // Predicated region
    $region34: #{tpu_custom_call.1} parent=1 // pred_check
      _
    $region35: #{tpu_custom_call.1} parent=1 // pred_check_branch
      %68 = sbr.rel (0) target = $region37
    $region36: #{tpu_custom_call.1} parent=1 // pred_region
      _
    $region37: #{tpu_custom_call.1} parent=1 // pred_fallthru
      _
    // Predicated region
    $region38: #{tpu_custom_call.1} parent=1 // pred_check
      _
    $region39: #{tpu_custom_call.1} parent=1 // pred_check_branch
      %70 = sbr.rel (0) target = $region41
    $region40: #{tpu_custom_call.1} parent=1 // pred_region
      _
    $region41: #{tpu_custom_call.1} parent=1 // pred_fallthru
      _
    // Predicated region
    $region42: #{tpu_custom_call.1} parent=1 // pred_check
      _
    $region43: #{tpu_custom_call.1} parent=1 // pred_check_branch
      %72 = sbr.rel (0) target = $region45
    $region44: #{tpu_custom_call.1} parent=1 // pred_region
      _
    $region45: #{tpu_custom_call.1} parent=1 // pred_fallthru
      _
    // Predicated region
    $region46: #{tpu_custom_call.1} parent=1 // pred_check
      _
    $region47: #{tpu_custom_call.1} parent=1 // pred_check_branch
      %74 = sbr.rel (0) target = $region49
    $region48: #{tpu_custom_call.1} parent=1 // pred_region
      %75 = dma.done [#allocation4], 1792
    $region49: #{tpu_custom_call.1} parent=1 // pred_fallthru
      _
    // Predicated region
    $region50: #{tpu_custom_call.1} parent=1 // pred_check
      _
    $region51: #{tpu_custom_call.1} parent=1 // pred_check_branch
      %77 = sbr.rel (0) target = $region53
    $region52: #{tpu_custom_call.1} parent=1 // pred_region
      %78 = dma.done [#allocation7], 1792
    $region53: #{tpu_custom_call.1} parent=1 // pred_fallthru
      _
    // Predicated region
    $region54: #{tpu_custom_call.1} parent=1 // pred_check
      _
    $region55: #{tpu_custom_call.1} parent=1 // pred_check_branch
      %80 = sbr.rel (0) target = $region57
    $region56: #{tpu_custom_call.1} parent=1 // pred_region
      %81 = dma.done [#allocation7], 1792
    $region57: #{tpu_custom_call.1} parent=1 // pred_fallthru
      _
    %v82 = vld [vmem:[%s1] sm:$0x3]
    %v83 = vld [vmem:[#allocation3] sm:$0xff]
    %v84 = vld [vmem:[#allocation3 + $0x8] sm:$0xff]
    %v85 = vld [vmem:[#allocation3 + $0x10] sm:$0xff]
    %v86 = vld [vmem:[#allocation3 + $0x18] sm:$0xff]
    %v87 = vld [vmem:[#allocation3 + $0x20] sm:$0xff]
    %v88 = vld [vmem:[#allocation3 + $0x28] sm:$0xff]
    %v89 = vld [vmem:[#allocation3 + $0x30] sm:$0xff]
    %v90 = vld [vmem:[#allocation3 + $0x38] sm:$0xff]
    %v91 = vld [vmem:[#allocation3 + $0x40] sm:$0xff]
    %v92 = vld [vmem:[#allocation3 + $0x48] sm:$0xff]
    %v93 = vld [vmem:[#allocation3 + $0x50] sm:$0xff]
    %v94 = vld [vmem:[#allocation3 + $0x58] sm:$0xff]
    %v95 = vld [vmem:[#allocation3 + $0x60] sm:$0x3]
    %v96 = vld [vmem:[#allocation3 + $0x68] sm:$0x3]
    %v97 = vld [vmem:[%s3] sm:$0x3]
    %v98 = vld [vmem:[%s4] sm:$0x3]
    %v99 = vld [vmem:[#allocation6] sm:$0xff]
    %v100 = vld [vmem:[#allocation6 + $0x8] sm:$0xff]
    %v101 = vld [vmem:[#allocation6 + $0x10] sm:$0xff]
    %v102 = vld [vmem:[#allocation6 + $0x18] sm:$0xff]
    %v103 = vld [vmem:[#allocation6 + $0x20] sm:$0xff]
    %v104 = vld [vmem:[#allocation6 + $0x28] sm:$0xff]
    %v105 = vld [vmem:[#allocation6 + $0x30] sm:$0xff]
    %v106 = vld [vmem:[#allocation6 + $0x38] sm:$0xff]
    %v107 = vld [vmem:[#allocation6 + $0x40] sm:$0xff]
    %v108 = vld [vmem:[#allocation6 + $0x48] sm:$0xff]
    %v109 = vld [vmem:[#allocation6 + $0x50] sm:$0xff]
    %v110 = vld [vmem:[#allocation6 + $0x58] sm:$0xff]
    %v111 = vld [vmem:[#allocation6 + $0x60] sm:$0x3]
    %v112 = vld [vmem:[#allocation6 + $0x68] sm:$0x3]
    %v113 = vld [vmem:[#allocation8] sm:$0xff]
    %v114 = vld [vmem:[#allocation8 + $0x8] sm:$0xff]
    %v115 = vld [vmem:[#allocation8 + $0x10] sm:$0xff]
    %v116 = vld [vmem:[#allocation8 + $0x18] sm:$0xff]
    %v117 = vld [vmem:[#allocation8 + $0x20] sm:$0xff]
    %v118 = vld [vmem:[#allocation8 + $0x28] sm:$0xff]
    %v119 = vld [vmem:[#allocation8 + $0x30] sm:$0xff]
    %v120 = vld [vmem:[#allocation8 + $0x38] sm:$0xff]
    %v121 = vld [vmem:[#allocation8 + $0x40] sm:$0xff]
    %v122 = vld [vmem:[#allocation8 + $0x48] sm:$0xff]
    %v123 = vld [vmem:[#allocation8 + $0x50] sm:$0xff]
    %v124 = vld [vmem:[#allocation8 + $0x58] sm:$0xff]
    %v125 = vld [vmem:[#allocation8 + $0x60] sm:$0x3]
    %v126 = vld [vmem:[#allocation8 + $0x68] sm:$0x3]
    %v127 = vld [vmem:[%s7] sm:$0x3]
    %v128 = vld [vmem:[%s8] sm:$0x3]
    %v129 = vld [vmem:[%s9] sm:$0xff]
    %v130 = vld [vmem:[%s9 + $0x8] sm:$0xff]
    %v131 = vld [vmem:[%s9 + $0x10] sm:$0xff]
    %v132 = vld [vmem:[%s9 + $0x18] sm:$0xff]
    %v133 = vld [vmem:[%s9 + $0x20] sm:$0xff]
    %v134 = vld [vmem:[%s9 + $0x28] sm:$0xff]
    %v135 = vld [vmem:[%s9 + $0x30] sm:$0x3]
    %v136 = vld [vmem:[#allocation2] sm:$0x1]
    %v137 = vlaneseq
    %v138 = vand.u32 %v137, 127
    %v139 = vld [vmem:[%s0] sm:$0xff]
    %141 = vset.pattern.permute.xlu0 0
    %142 = vperm.xlu0 %141, %v139
    %v143 = vpop.permute.xlu0 %142
    %v146 = vlaneseq
    %v147 = vshrl.u32 %v146, 7
    %v148 = vsub.s32 0, %v147
    %v149 = vrot.slane %v82, %v148
    %v150 = vlaneseq
    %v151 = vshrl.u32 %v150, 7
    %v152 = vsub.s32 1, %v151
    %v153 = vrot.slane %v82, %v152
    %v156 = vmul.f32 %v143, %v149
    %v157 = vmul.f32 %v143, %v153
    %v159 = vlaneseq
    %v160 = vshrl.u32 %v159, 7
    %v161 = vsub.s32 0, %v160
    %v162 = vrot.slane %v97, %v161
    %v163 = vlaneseq
    %v164 = vshrl.u32 %v163, 7
    %v165 = vsub.s32 1, %v164
    %v166 = vrot.slane %v97, %v165
    %v169 = vadd.f32 %v156, %v162
    %v170 = vadd.f32 %v157, %v166
    %v172 = vlaneseq
    %v173 = vshrl.u32 %v172, 7
    %v174 = vsub.s32 0, %v173
    %v175 = vrot.slane %v98, %v174
    %v176 = vlaneseq
    %v177 = vshrl.u32 %v176, 7
    %v178 = vsub.s32 1, %v177
    %v179 = vrot.slane %v98, %v178
    %vm182 = vcmask 408576
    %v184 = vsel %vm182, 0.0, 0
    %vm186 = vcmask 1041408
    %v188 = vsel %vm186, %v95, 0
    %v191 = vsel %vm186, %v96, 0
    %193 = vmatprep.subr.mxu0 0.0
    %194 = vmatpush1.msra.mxu0 0.0
    %195 = vmatprep.subr.mxu0 0.0
    %196 = vmatpush1.msra.mxu0 0.0
    %197 = vmatprep.subr.mxu0 0.0
    %198 = vmatpush1.msra.mxu0 0.0
    %199 = vmatprep.subr.mxu0 0.0
    %200 = vmatpush1.msra.mxu0 0.0
    %201 = vmatprep.subr.mxu0 0.0
    %202 = vmatpush1.msra.mxu0 0.0
    %203 = vmatprep.subr.mxu0 0.0
    %204 = vmatpush1.msra.mxu0 0.0
    %205 = vmatprep.subr.mxu0 0.0
    %206 = vmatpush1.msra.mxu0 0.0
    %207 = vmatprep.subr.mxu0 0.0
    %208 = vmatpush1.msra.mxu0 0.0
    %209 = vmatprep.subr.mxu0 0.0
    %210 = vmatpush1.msra.mxu0 0.0
    %211 = vmatprep.subr.mxu0 %v191
    %212 = vmatpush1.msra.mxu0 %v188
    %213 = vmatprep.subr.mxu0 %v94
    %214 = vmatpush1.msra.mxu0 %v93
    %215 = vmatprep.subr.mxu0 %v92
    %216 = vmatpush1.msra.mxu0 %v91
    %217 = vmatprep.subr.mxu0 %v90
    %218 = vmatpush1.msra.mxu0 %v89
    %219 = vmatprep.subr.mxu0 %v88
    %220 = vmatpush1.msra.mxu0 %v87
    %221 = vmatprep.subr.mxu0 %v86
    %222 = vmatpush1.msra.mxu0 %v85
    %223 = vmatprep.subr.mxu0 %v84
    %224 = vmatpush1.msra.mxu0 %v83
    %225 = vmatprep.subr.mxu0 0.0
    %226 = vmatpush2.msra.mxu0 0.0
    %227 = vmatprep.subr.mxu0 0.0
    %228 = vmatpush2.msra.mxu0 0.0
    %229 = vmatprep.subr.mxu0 0.0
    %230 = vmatpush2.msra.mxu0 0.0
    %231 = vmatprep.subr.mxu0 0.0
    %232 = vmatpush2.msra.mxu0 0.0
    %233 = vmatprep.subr.mxu0 0.0
    %234 = vmatpush2.msra.mxu0 0.0
    %235 = vmatprep.subr.mxu0 0.0
    %236 = vmatpush2.msra.mxu0 0.0
    %237 = vmatprep.subr.mxu0 0.0
    %238 = vmatpush2.msra.mxu0 0.0
    %239 = vmatprep.subr.mxu0 0.0
    %240 = vmatpush2.msra.mxu0 0.0
    %241 = vmatprep.subr.mxu0 0.0
    %242 = vmatpush2.msra.mxu0 0.0
    %243 = vmatprep.subr.mxu0 0.0
    %244 = vmatpush2.msra.mxu0 0.0
    %245 = vmatprep.subr.mxu0 0.0
    %246 = vmatpush2.msra.mxu0 0.0
    %247 = vmatprep.subr.mxu0 0.0
    %248 = vmatpush2.msra.mxu0 0.0
    %249 = vmatprep.subr.mxu0 0.0
    %250 = vmatpush2.msra.mxu0 0.0
    %251 = vmatprep.subr.mxu0 0.0
    %252 = vmatpush2.msra.mxu0 0.0
    %253 = vmatprep.subr.mxu0 0.0
    %254 = vmatpush2.msra.mxu0 0.0
    %255 = vmatprep.subr.mxu0 0.0
    %256 = vmatpush2.msra.mxu0 0.0
    %257 = vmatprep.mubr.f32.mxu0 0.0
    %258 = vmatmul.mubr.f32.gmra.mxu0 %v184
    %v259 = vpop.f32.mrf.mxu0
    %v260 = vadd.f32 %v175, %v259
    %v261 = vpop.f32.mrf.mxu0
    %v262 = vadd.f32 %v179, %v261
    %263 = vdwg.mxu0
    %v264 = vadd.f32 %v169, %v260
    %v265 = vmul.f32 %v264, 0.5
    %v266 = vtanh.pop %v265
    %v267 = vmul.f32 %v266, 0.5
    %v268 = vadd.f32 %v267, 0.5
    %271 = vrot.lane.b32.xlu0 %v260, 28
    %v272 = vpop.permute.xlu0 %271
    %273 = vrot.lane.b32.xlu0 %v262, 28
    %v274 = vpop.permute.xlu0 %273
    %vm275 = vcmask 228352
    %v276 = vsel %vm275, %v272, %v274
    %v278 = vmul.f32 %v268, %v276
    %280 = vrot.lane.b32.xlu0 %v278, 100
    %v281 = vpop.permute.xlu0 %280
    %v283 = vadd.f32 %v169, %v281
    %v284 = vadd.f32 %v170, %v281
    %v285 = vtanh.pop %v283
    %v286 = vtanh.pop %v284
    %v287 = vsub.f32 1.0, %v268
    %290 = vrot.lane.b32.xlu0 %v285, 78
    %v291 = vpop.permute.xlu0 %290
    %292 = vrot.lane.b32.xlu0 %v286, 78
    %v293 = vpop.permute.xlu0 %292
    %vm294 = vcmask 637952
    %v295 = vsel %vm294, %v291, %v293
    %v297 = vmul.f32 %v287, %v295
    %v298 = vmul.f32 %v268, 0.0
    %v299 = vadd.f32 %v297, %v298
    %v301 = vlaneseq
    %v302 = vshrl.u32 %v301, 7
    %v303 = vsub.s32 0, %v302
    %v304 = vrot.slane %v136, %v303
    %307 = vrot.lane.b32.xlu0 %v299, 78
    %v308 = vpop.permute.xlu0 %307
    %v309 = vsel %vm182, %v308, 0
    %v312 = vsel %vm186, %v135, 0
    %314 = vmatprep.subr.mxu0 0.0
    %315 = vmatpush1.msra.mxu0 0.0
    %316 = vmatprep.subr.mxu0 0.0
    %317 = vmatpush1.msra.mxu0 0.0
    %318 = vmatprep.subr.mxu0 0.0
    %319 = vmatpush1.msra.mxu0 0.0
    %320 = vmatprep.subr.mxu0 0.0
    %321 = vmatpush1.msra.mxu0 0.0
    %322 = vmatprep.subr.mxu0 0.0
    %323 = vmatpush1.msra.mxu0 0.0
    %324 = vmatprep.subr.mxu0 0.0
    %325 = vmatpush1.msra.mxu0 0.0
    %326 = vmatprep.subr.mxu0 0.0
    %327 = vmatpush1.msra.mxu0 0.0
    %328 = vmatprep.subr.mxu0 0.0
    %329 = vmatpush1.msra.mxu0 0.0
    %330 = vmatprep.subr.mxu0 0.0
    %331 = vmatpush1.msra.mxu0 0.0
    %332 = vmatprep.subr.mxu0 0.0
    %333 = vmatpush1.msra.mxu0 %v312
    %334 = vmatprep.subr.mxu0 0.0
    %335 = vmatpush1.msra.mxu0 %v134
    %336 = vmatprep.subr.mxu0 0.0
    %337 = vmatpush1.msra.mxu0 %v133
    %338 = vmatprep.subr.mxu0 0.0
    %339 = vmatpush1.msra.mxu0 %v132
    %340 = vmatprep.subr.mxu0 0.0
    %341 = vmatpush1.msra.mxu0 %v131
    %342 = vmatprep.subr.mxu0 0.0
    %343 = vmatpush1.msra.mxu0 %v130
    %344 = vmatprep.subr.mxu0 0.0
    %345 = vmatpush1.msra.mxu0 %v129
    %346 = vmatprep.subr.mxu0 0.0
    %347 = vmatpush2.msra.mxu0 0.0
    %348 = vmatprep.subr.mxu0 0.0
    %349 = vmatpush2.msra.mxu0 0.0
    %350 = vmatprep.subr.mxu0 0.0
    %351 = vmatpush2.msra.mxu0 0.0
    %352 = vmatprep.subr.mxu0 0.0
    %353 = vmatpush2.msra.mxu0 0.0
    %354 = vmatprep.subr.mxu0 0.0
    %355 = vmatpush2.msra.mxu0 0.0
    %356 = vmatprep.subr.mxu0 0.0
    %357 = vmatpush2.msra.mxu0 0.0
    %358 = vmatprep.subr.mxu0 0.0
    %359 = vmatpush2.msra.mxu0 0.0
    %360 = vmatprep.subr.mxu0 0.0
    %361 = vmatpush2.msra.mxu0 0.0
    %362 = vmatprep.subr.mxu0 0.0
    %363 = vmatpush2.msra.mxu0 0.0
    %364 = vmatprep.subr.mxu0 0.0
    %365 = vmatpush2.msra.mxu0 0.0
    %366 = vmatprep.subr.mxu0 0.0
    %367 = vmatpush2.msra.mxu0 0.0
    %368 = vmatprep.subr.mxu0 0.0
    %369 = vmatpush2.msra.mxu0 0.0
    %370 = vmatprep.subr.mxu0 0.0
    %371 = vmatpush2.msra.mxu0 0.0
    %372 = vmatprep.subr.mxu0 0.0
    %373 = vmatpush2.msra.mxu0 0.0
    %374 = vmatprep.subr.mxu0 0.0
    %375 = vmatpush2.msra.mxu0 0.0
    %376 = vmatprep.subr.mxu0 0.0
    %377 = vmatpush2.msra.mxu0 0.0
    %378 = vmatprep.mubr.f32.mxu0 0.0
    %379 = vmatmul.mubr.f32.gmra.mxu0 %v309
    %v380 = vpop.f32.mrf.mxu0
    %v381 = vadd.f32 %v304, %v380
    %v382 = vpop.f32.mrf.mxu0
    %383 = vdwg.mxu0
    %vm384 = vcmp.eq.s32.totalorder %v138, 0
    %386 = vset.pattern.permute.xlu0 0
    %387 = vperm.xlu0 %386, %v381
    %v388 = vpop.permute.xlu0 %387
    %v390 = vsel %vm384, %v388, 0.0
    %v391 = vadd.f32 %v390, 0.0
    %392 = vset.pattern.permute.xlu0 1
    %393 = vperm.xlu0 %392, %v139
    %v394 = vpop.permute.xlu0 %393
    %v396 = vmul.f32 %v394, %v149
    %v397 = vmul.f32 %v394, %v153
    %v398 = vadd.f32 %v396, %v162
    %v399 = vadd.f32 %v397, %v166
    %400 = vmatprep.subr.mxu0 0.0
    %401 = vmatpush1.msra.mxu0 0.0
    %402 = vmatprep.subr.mxu0 0.0
    %403 = vmatpush1.msra.mxu0 0.0
    %404 = vmatprep.subr.mxu0 0.0
    %405 = vmatpush1.msra.mxu0 0.0
    %406 = vmatprep.subr.mxu0 0.0
    %407 = vmatpush1.msra.mxu0 0.0
    %408 = vmatprep.subr.mxu0 0.0
    %409 = vmatpush1.msra.mxu0 0.0
    %410 = vmatprep.subr.mxu0 0.0
    %411 = vmatpush1.msra.mxu0 0.0
    %412 = vmatprep.subr.mxu0 0.0
    %413 = vmatpush1.msra.mxu0 0.0
    %414 = vmatprep.subr.mxu0 0.0
    %415 = vmatpush1.msra.mxu0 0.0
    %416 = vmatprep.subr.mxu0 0.0
    %417 = vmatpush1.msra.mxu0 0.0
    %418 = vmatprep.subr.mxu0 %v191
    %419 = vmatpush1.msra.mxu0 %v188
    %420 = vmatprep.subr.mxu0 %v94
    %421 = vmatpush1.msra.mxu0 %v93
    %422 = vmatprep.subr.mxu0 %v92
    %423 = vmatpush1.msra.mxu0 %v91
    %424 = vmatprep.subr.mxu0 %v90
    %425 = vmatpush1.msra.mxu0 %v89
    %426 = vmatprep.subr.mxu0 %v88
    %427 = vmatpush1.msra.mxu0 %v87
    %428 = vmatprep.subr.mxu0 %v86
    %429 = vmatpush1.msra.mxu0 %v85
    %430 = vmatprep.subr.mxu0 %v84
    %431 = vmatpush1.msra.mxu0 %v83
    %432 = vmatprep.subr.mxu0 0.0
    %433 = vmatpush2.msra.mxu0 0.0
    %434 = vmatprep.subr.mxu0 0.0
    %435 = vmatpush2.msra.mxu0 0.0
    %436 = vmatprep.subr.mxu0 0.0
    %437 = vmatpush2.msra.mxu0 0.0
    %438 = vmatprep.subr.mxu0 0.0
    %439 = vmatpush2.msra.mxu0 0.0
    %440 = vmatprep.subr.mxu0 0.0
    %441 = vmatpush2.msra.mxu0 0.0
    %442 = vmatprep.subr.mxu0 0.0
    %443 = vmatpush2.msra.mxu0 0.0
    %444 = vmatprep.subr.mxu0 0.0
    %445 = vmatpush2.msra.mxu0 0.0
    %446 = vmatprep.subr.mxu0 0.0
    %447 = vmatpush2.msra.mxu0 0.0
    %448 = vmatprep.subr.mxu0 0.0
    %449 = vmatpush2.msra.mxu0 0.0
    %450 = vmatprep.subr.mxu0 0.0
    %451 = vmatpush2.msra.mxu0 0.0
    %452 = vmatprep.subr.mxu0 0.0
    %453 = vmatpush2.msra.mxu0 0.0
    %454 = vmatprep.subr.mxu0 0.0
    %455 = vmatpush2.msra.mxu0 0.0
    %456 = vmatprep.subr.mxu0 0.0
    %457 = vmatpush2.msra.mxu0 0.0
    %458 = vmatprep.subr.mxu0 0.0
    %459 = vmatpush2.msra.mxu0 0.0
    %460 = vmatprep.subr.mxu0 0.0
    %461 = vmatpush2.msra.mxu0 0.0
    %462 = vmatprep.subr.mxu0 0.0
    %463 = vmatpush2.msra.mxu0 0.0
    %464 = vmatprep.mubr.f32.mxu0 0.0
    %465 = vmatmul.mubr.f32.gmra.mxu0 %v309
    %v466 = vpop.f32.mrf.mxu0
    %v467 = vadd.f32 %v175, %v466
    %v468 = vpop.f32.mrf.mxu0
    %v469 = vadd.f32 %v179, %v468
    %470 = vdwg.mxu0
    %v471 = vadd.f32 %v398, %v467
    %v472 = vmul.f32 %v471, 0.5
    %v473 = vtanh.pop %v472
    %v474 = vmul.f32 %v473, 0.5
    %v475 = vadd.f32 %v474, 0.5
    %478 = vrot.lane.b32.xlu0 %v467, 28
    %v479 = vpop.permute.xlu0 %478
    %480 = vrot.lane.b32.xlu0 %v469, 28
    %v481 = vpop.permute.xlu0 %480
    %v482 = vsel %vm275, %v479, %v481
    %v484 = vmul.f32 %v475, %v482
    %486 = vrot.lane.b32.xlu0 %v484, 100
    %v487 = vpop.permute.xlu0 %486
    %v489 = vadd.f32 %v398, %v487
    %v490 = vadd.f32 %v399, %v487
    %v491 = vtanh.pop %v489
    %v492 = vtanh.pop %v490
    %v493 = vsub.f32 1.0, %v475
    %496 = vrot.lane.b32.xlu0 %v491, 78
    %v497 = vpop.permute.xlu0 %496
    %498 = vrot.lane.b32.xlu0 %v492, 78
    %v499 = vpop.permute.xlu0 %498
    %v500 = vsel %vm294, %v497, %v499
    %v502 = vmul.f32 %v493, %v500
    %v503 = vmul.f32 %v475, %v299
    %v504 = vadd.f32 %v502, %v503
    %506 = vrot.lane.b32.xlu0 %v504, 78
    %v507 = vpop.permute.xlu0 %506
    %v508 = vsel %vm182, %v507, 0
    %510 = vmatprep.subr.mxu0 0.0
    %511 = vmatpush1.msra.mxu0 0.0
    %512 = vmatprep.subr.mxu0 0.0
    %513 = vmatpush1.msra.mxu0 0.0
    %514 = vmatprep.subr.mxu0 0.0
    %515 = vmatpush1.msra.mxu0 0.0
    %516 = vmatprep.subr.mxu0 0.0
    %517 = vmatpush1.msra.mxu0 0.0
    %518 = vmatprep.subr.mxu0 0.0
    %519 = vmatpush1.msra.mxu0 0.0
    %520 = vmatprep.subr.mxu0 0.0
    %521 = vmatpush1.msra.mxu0 0.0
    %522 = vmatprep.subr.mxu0 0.0
    %523 = vmatpush1.msra.mxu0 0.0
    %524 = vmatprep.subr.mxu0 0.0
    %525 = vmatpush1.msra.mxu0 0.0
    %526 = vmatprep.subr.mxu0 0.0
    %527 = vmatpush1.msra.mxu0 0.0
    %528 = vmatprep.subr.mxu0 0.0
    %529 = vmatpush1.msra.mxu0 %v312
    %530 = vmatprep.subr.mxu0 0.0
    %531 = vmatpush1.msra.mxu0 %v134
    %532 = vmatprep.subr.mxu0 0.0
    %533 = vmatpush1.msra.mxu0 %v133
    %534 = vmatprep.subr.mxu0 0.0
    %535 = vmatpush1.msra.mxu0 %v132
    %536 = vmatprep.subr.mxu0 0.0
    %537 = vmatpush1.msra.mxu0 %v131
    %538 = vmatprep.subr.mxu0 0.0
    %539 = vmatpush1.msra.mxu0 %v130
    %540 = vmatprep.subr.mxu0 0.0
    %541 = vmatpush1.msra.mxu0 %v129
    %542 = vmatprep.subr.mxu0 0.0
    %543 = vmatpush2.msra.mxu0 0.0
    %544 = vmatprep.subr.mxu0 0.0
    %545 = vmatpush2.msra.mxu0 0.0
    %546 = vmatprep.subr.mxu0 0.0
    %547 = vmatpush2.msra.mxu0 0.0
    %548 = vmatprep.subr.mxu0 0.0
    %549 = vmatpush2.msra.mxu0 0.0
    %550 = vmatprep.subr.mxu0 0.0
    %551 = vmatpush2.msra.mxu0 0.0
    %552 = vmatprep.subr.mxu0 0.0
    %553 = vmatpush2.msra.mxu0 0.0
    %554 = vmatprep.subr.mxu0 0.0
    %555 = vmatpush2.msra.mxu0 0.0
    %556 = vmatprep.subr.mxu0 0.0
    %557 = vmatpush2.msra.mxu0 0.0
    %558 = vmatprep.subr.mxu0 0.0
    %559 = vmatpush2.msra.mxu0 0.0
    %560 = vmatprep.subr.mxu0 0.0
    %561 = vmatpush2.msra.mxu0 0.0
    %562 = vmatprep.subr.mxu0 0.0
    %563 = vmatpush2.msra.mxu0 0.0
    %564 = vmatprep.subr.mxu0 0.0
    %565 = vmatpush2.msra.mxu0 0.0
    %566 = vmatprep.subr.mxu0 0.0
    %567 = vmatpush2.msra.mxu0 0.0
    %568 = vmatprep.subr.mxu0 0.0
    %569 = vmatpush2.msra.mxu0 0.0
    %570 = vmatprep.subr.mxu0 0.0
    %571 = vmatpush2.msra.mxu0 0.0
    %572 = vmatprep.subr.mxu0 0.0
    %573 = vmatpush2.msra.mxu0 0.0
    %574 = vmatprep.mubr.f32.mxu0 0.0
    %575 = vmatmul.mubr.f32.gmra.mxu0 %v508
    %v576 = vpop.f32.mrf.mxu0
    %v577 = vadd.f32 %v304, %v576
    %v578 = vpop.f32.mrf.mxu0
    %579 = vdwg.mxu0
    %vm580 = vcmp.eq.s32.totalorder %v138, 1
    %582 = vset.pattern.permute.xlu0 0
    %583 = vperm.xlu0 %582, %v577
    %v584 = vpop.permute.xlu0 %583
    %v586 = vsel %vm580, %v584, 0.0
    %v587 = vadd.f32 %v391, %v586
    %588 = vset.pattern.permute.xlu0 2
    %589 = vperm.xlu0 %588, %v139
    %v590 = vpop.permute.xlu0 %589
    %v592 = vmul.f32 %v590, %v149
    %v593 = vmul.f32 %v590, %v153
    %v594 = vadd.f32 %v592, %v162
    %v595 = vadd.f32 %v593, %v166
    %596 = vmatprep.subr.mxu0 0.0
    %597 = vmatpush1.msra.mxu0 0.0
    %598 = vmatprep.subr.mxu0 0.0
    %599 = vmatpush1.msra.mxu0 0.0
    %600 = vmatprep.subr.mxu0 0.0
    %601 = vmatpush1.msra.mxu0 0.0
    %602 = vmatprep.subr.mxu0 0.0
    %603 = vmatpush1.msra.mxu0 0.0
    %604 = vmatprep.subr.mxu0 0.0
    %605 = vmatpush1.msra.mxu0 0.0
    %606 = vmatprep.subr.mxu0 0.0
    %607 = vmatpush1.msra.mxu0 0.0
    %608 = vmatprep.subr.mxu0 0.0
    %609 = vmatpush1.msra.mxu0 0.0
    %610 = vmatprep.subr.mxu0 0.0
    %611 = vmatpush1.msra.mxu0 0.0
    %612 = vmatprep.subr.mxu0 0.0
    %613 = vmatpush1.msra.mxu0 0.0
    %614 = vmatprep.subr.mxu0 %v191
    %615 = vmatpush1.msra.mxu0 %v188
    %616 = vmatprep.subr.mxu0 %v94
    %617 = vmatpush1.msra.mxu0 %v93
    %618 = vmatprep.subr.mxu0 %v92
    %619 = vmatpush1.msra.mxu0 %v91
    %620 = vmatprep.subr.mxu0 %v90
    %621 = vmatpush1.msra.mxu0 %v89
    %622 = vmatprep.subr.mxu0 %v88
    %623 = vmatpush1.msra.mxu0 %v87
    %624 = vmatprep.subr.mxu0 %v86
    %625 = vmatpush1.msra.mxu0 %v85
    %626 = vmatprep.subr.mxu0 %v84
    %627 = vmatpush1.msra.mxu0 %v83
    %628 = vmatprep.subr.mxu0 0.0
    %629 = vmatpush2.msra.mxu0 0.0
    %630 = vmatprep.subr.mxu0 0.0
    %631 = vmatpush2.msra.mxu0 0.0
    %632 = vmatprep.subr.mxu0 0.0
    %633 = vmatpush2.msra.mxu0 0.0
    %634 = vmatprep.subr.mxu0 0.0
    %635 = vmatpush2.msra.mxu0 0.0
    %636 = vmatprep.subr.mxu0 0.0
    %637 = vmatpush2.msra.mxu0 0.0
    %638 = vmatprep.subr.mxu0 0.0
    %639 = vmatpush2.msra.mxu0 0.0
    %640 = vmatprep.subr.mxu0 0.0
    %641 = vmatpush2.msra.mxu0 0.0
    %642 = vmatprep.subr.mxu0 0.0
    %643 = vmatpush2.msra.mxu0 0.0
    %644 = vmatprep.subr.mxu0 0.0
    %645 = vmatpush2.msra.mxu0 0.0
    %646 = vmatprep.subr.mxu0 0.0
    %647 = vmatpush2.msra.mxu0 0.0
    %648 = vmatprep.subr.mxu0 0.0
    %649 = vmatpush2.msra.mxu0 0.0
    %650 = vmatprep.subr.mxu0 0.0
    %651 = vmatpush2.msra.mxu0 0.0
    %652 = vmatprep.subr.mxu0 0.0
    %653 = vmatpush2.msra.mxu0 0.0
    %654 = vmatprep.subr.mxu0 0.0
    %655 = vmatpush2.msra.mxu0 0.0
    %656 = vmatprep.subr.mxu0 0.0
    %657 = vmatpush2.msra.mxu0 0.0
    %658 = vmatprep.subr.mxu0 0.0
    %659 = vmatpush2.msra.mxu0 0.0
    %660 = vmatprep.mubr.f32.mxu0 0.0
    %661 = vmatmul.mubr.f32.gmra.mxu0 %v508
    %v662 = vpop.f32.mrf.mxu0
    %v663 = vadd.f32 %v175, %v662
    %v664 = vpop.f32.mrf.mxu0
    %v665 = vadd.f32 %v179, %v664
    %666 = vdwg.mxu0
    %v667 = vadd.f32 %v594, %v663
    %v668 = vmul.f32 %v667, 0.5
    %v669 = vtanh.pop %v668
    %v670 = vmul.f32 %v669, 0.5
    %v671 = vadd.f32 %v670, 0.5
    %674 = vrot.lane.b32.xlu0 %v663, 28
    %v675 = vpop.permute.xlu0 %674
    %676 = vrot.lane.b32.xlu0 %v665, 28
    %v677 = vpop.permute.xlu0 %676
    %v678 = vsel %vm275, %v675, %v677
    %v680 = vmul.f32 %v671, %v678
    %682 = vrot.lane.b32.xlu0 %v680, 100
    %v683 = vpop.permute.xlu0 %682
    %v685 = vadd.f32 %v594, %v683
    %v686 = vadd.f32 %v595, %v683
    %v687 = vtanh.pop %v685
    %v688 = vtanh.pop %v686
    %v689 = vsub.f32 1.0, %v671
    %692 = vrot.lane.b32.xlu0 %v687, 78
    %v693 = vpop.permute.xlu0 %692
    %694 = vrot.lane.b32.xlu0 %v688, 78
    %v695 = vpop.permute.xlu0 %694
    %v696 = vsel %vm294, %v693, %v695
    %v698 = vmul.f32 %v689, %v696
    %v699 = vmul.f32 %v671, %v504
    %v700 = vadd.f32 %v698, %v699
    %702 = vrot.lane.b32.xlu0 %v700, 78
    %v703 = vpop.permute.xlu0 %702
    %v704 = vsel %vm182, %v703, 0
    %706 = vmatprep.subr.mxu0 0.0
    %707 = vmatpush1.msra.mxu0 0.0
    %708 = vmatprep.subr.mxu0 0.0
    %709 = vmatpush1.msra.mxu0 0.0
    %710 = vmatprep.subr.mxu0 0.0
    %711 = vmatpush1.msra.mxu0 0.0
    %712 = vmatprep.subr.mxu0 0.0
    %713 = vmatpush1.msra.mxu0 0.0
    %714 = vmatprep.subr.mxu0 0.0
    %715 = vmatpush1.msra.mxu0 0.0
    %716 = vmatprep.subr.mxu0 0.0
    %717 = vmatpush1.msra.mxu0 0.0
    %718 = vmatprep.subr.mxu0 0.0
    %719 = vmatpush1.msra.mxu0 0.0
    %720 = vmatprep.subr.mxu0 0.0
    %721 = vmatpush1.msra.mxu0 0.0
    %722 = vmatprep.subr.mxu0 0.0
    %723 = vmatpush1.msra.mxu0 0.0
    %724 = vmatprep.subr.mxu0 0.0
    %725 = vmatpush1.msra.mxu0 %v312
    %726 = vmatprep.subr.mxu0 0.0
    %727 = vmatpush1.msra.mxu0 %v134
    %728 = vmatprep.subr.mxu0 0.0
    %729 = vmatpush1.msra.mxu0 %v133
    %730 = vmatprep.subr.mxu0 0.0
    %731 = vmatpush1.msra.mxu0 %v132
    %732 = vmatprep.subr.mxu0 0.0
    %733 = vmatpush1.msra.mxu0 %v131
    %734 = vmatprep.subr.mxu0 0.0
    %735 = vmatpush1.msra.mxu0 %v130
    %736 = vmatprep.subr.mxu0 0.0
    %737 = vmatpush1.msra.mxu0 %v129
    %738 = vmatprep.subr.mxu0 0.0
    %739 = vmatpush2.msra.mxu0 0.0
    %740 = vmatprep.subr.mxu0 0.0
    %741 = vmatpush2.msra.mxu0 0.0
    %742 = vmatprep.subr.mxu0 0.0
    %743 = vmatpush2.msra.mxu0 0.0
    %744 = vmatprep.subr.mxu0 0.0
    %745 = vmatpush2.msra.mxu0 0.0
    %746 = vmatprep.subr.mxu0 0.0
    %747 = vmatpush2.msra.mxu0 0.0
    %748 = vmatprep.subr.mxu0 0.0
    %749 = vmatpush2.msra.mxu0 0.0
    %750 = vmatprep.subr.mxu0 0.0
    %751 = vmatpush2.msra.mxu0 0.0
    %752 = vmatprep.subr.mxu0 0.0
    %753 = vmatpush2.msra.mxu0 0.0
    %754 = vmatprep.subr.mxu0 0.0
    %755 = vmatpush2.msra.mxu0 0.0
    %756 = vmatprep.subr.mxu0 0.0
    %757 = vmatpush2.msra.mxu0 0.0
    %758 = vmatprep.subr.mxu0 0.0
    %759 = vmatpush2.msra.mxu0 0.0
    %760 = vmatprep.subr.mxu0 0.0
    %761 = vmatpush2.msra.mxu0 0.0
    %762 = vmatprep.subr.mxu0 0.0
    %763 = vmatpush2.msra.mxu0 0.0
    %764 = vmatprep.subr.mxu0 0.0
    %765 = vmatpush2.msra.mxu0 0.0
    %766 = vmatprep.subr.mxu0 0.0
    %767 = vmatpush2.msra.mxu0 0.0
    %768 = vmatprep.subr.mxu0 0.0
    %769 = vmatpush2.msra.mxu0 0.0
    %770 = vmatprep.mubr.f32.mxu0 0.0
    %771 = vmatmul.mubr.f32.gmra.mxu0 %v704
    %v772 = vpop.f32.mrf.mxu0
    %v773 = vadd.f32 %v304, %v772
    %v774 = vpop.f32.mrf.mxu0
    %775 = vdwg.mxu0
    %vm776 = vcmp.eq.s32.totalorder %v138, 2
    %778 = vset.pattern.permute.xlu0 0
    %779 = vperm.xlu0 %778, %v773
    %v780 = vpop.permute.xlu0 %779
    %v782 = vsel %vm776, %v780, 0.0
    %v783 = vadd.f32 %v587, %v782
    %784 = vset.pattern.permute.xlu0 3
    %785 = vperm.xlu0 %784, %v139
    %v786 = vpop.permute.xlu0 %785
    %v788 = vmul.f32 %v786, %v149
    %v789 = vmul.f32 %v786, %v153
    %v790 = vadd.f32 %v788, %v162
    %v791 = vadd.f32 %v789, %v166
    %792 = vmatprep.subr.mxu0 0.0
    %793 = vmatpush1.msra.mxu0 0.0
    %794 = vmatprep.subr.mxu0 0.0
    %795 = vmatpush1.msra.mxu0 0.0
    %796 = vmatprep.subr.mxu0 0.0
    %797 = vmatpush1.msra.mxu0 0.0
    %798 = vmatprep.subr.mxu0 0.0
    %799 = vmatpush1.msra.mxu0 0.0
    %800 = vmatprep.subr.mxu0 0.0
    %801 = vmatpush1.msra.mxu0 0.0
    %802 = vmatprep.subr.mxu0 0.0
    %803 = vmatpush1.msra.mxu0 0.0
    %804 = vmatprep.subr.mxu0 0.0
    %805 = vmatpush1.msra.mxu0 0.0
    %806 = vmatprep.subr.mxu0 0.0
    %807 = vmatpush1.msra.mxu0 0.0
    %808 = vmatprep.subr.mxu0 0.0
    %809 = vmatpush1.msra.mxu0 0.0
    %810 = vmatprep.subr.mxu0 %v191
    %811 = vmatpush1.msra.mxu0 %v188
    %812 = vmatprep.subr.mxu0 %v94
    %813 = vmatpush1.msra.mxu0 %v93
    %814 = vmatprep.subr.mxu0 %v92
    %815 = vmatpush1.msra.mxu0 %v91
    %816 = vmatprep.subr.mxu0 %v90
    %817 = vmatpush1.msra.mxu0 %v89
    %818 = vmatprep.subr.mxu0 %v88
    %819 = vmatpush1.msra.mxu0 %v87
    %820 = vmatprep.subr.mxu0 %v86
    %821 = vmatpush1.msra.mxu0 %v85
    %822 = vmatprep.subr.mxu0 %v84
    %823 = vmatpush1.msra.mxu0 %v83
    %824 = vmatprep.subr.mxu0 0.0
    %825 = vmatpush2.msra.mxu0 0.0
    %826 = vmatprep.subr.mxu0 0.0
    %827 = vmatpush2.msra.mxu0 0.0
    %828 = vmatprep.subr.mxu0 0.0
    %829 = vmatpush2.msra.mxu0 0.0
    %830 = vmatprep.subr.mxu0 0.0
    %831 = vmatpush2.msra.mxu0 0.0
    %832 = vmatprep.subr.mxu0 0.0
    %833 = vmatpush2.msra.mxu0 0.0
    %834 = vmatprep.subr.mxu0 0.0
    %835 = vmatpush2.msra.mxu0 0.0
    %836 = vmatprep.subr.mxu0 0.0
    %837 = vmatpush2.msra.mxu0 0.0
    %838 = vmatprep.subr.mxu0 0.0
    %839 = vmatpush2.msra.mxu0 0.0
    %840 = vmatprep.subr.mxu0 0.0
    %841 = vmatpush2.msra.mxu0 0.0
    %842 = vmatprep.subr.mxu0 0.0
    %843 = vmatpush2.msra.mxu0 0.0
    %844 = vmatprep.subr.mxu0 0.0
    %845 = vmatpush2.msra.mxu0 0.0
    %846 = vmatprep.subr.mxu0 0.0
    %847 = vmatpush2.msra.mxu0 0.0
    %848 = vmatprep.subr.mxu0 0.0
    %849 = vmatpush2.msra.mxu0 0.0
    %850 = vmatprep.subr.mxu0 0.0
    %851 = vmatpush2.msra.mxu0 0.0
    %852 = vmatprep.subr.mxu0 0.0
    %853 = vmatpush2.msra.mxu0 0.0
    %854 = vmatprep.subr.mxu0 0.0
    %855 = vmatpush2.msra.mxu0 0.0
    %856 = vmatprep.mubr.f32.mxu0 0.0
    %857 = vmatmul.mubr.f32.gmra.mxu0 %v704
    %v858 = vpop.f32.mrf.mxu0
    %v859 = vadd.f32 %v175, %v858
    %v860 = vpop.f32.mrf.mxu0
    %v861 = vadd.f32 %v179, %v860
    %862 = vdwg.mxu0
    %v863 = vadd.f32 %v790, %v859
    %v864 = vmul.f32 %v863, 0.5
    %v865 = vtanh.pop %v864
    %v866 = vmul.f32 %v865, 0.5
    %v867 = vadd.f32 %v866, 0.5
    %870 = vrot.lane.b32.xlu0 %v859, 28
    %v871 = vpop.permute.xlu0 %870
    %872 = vrot.lane.b32.xlu0 %v861, 28
    %v873 = vpop.permute.xlu0 %872
    %v874 = vsel %vm275, %v871, %v873
    %v876 = vmul.f32 %v867, %v874
    %878 = vrot.lane.b32.xlu0 %v876, 100
    %v879 = vpop.permute.xlu0 %878
    %v881 = vadd.f32 %v790, %v879
    %v882 = vadd.f32 %v791, %v879
    %v883 = vtanh.pop %v881
    %v884 = vtanh.pop %v882
    %v885 = vsub.f32 1.0, %v867
    %888 = vrot.lane.b32.xlu0 %v883, 78
    %v889 = vpop.permute.xlu0 %888
    %890 = vrot.lane.b32.xlu0 %v884, 78
    %v891 = vpop.permute.xlu0 %890
    %v892 = vsel %vm294, %v889, %v891
    %v894 = vmul.f32 %v885, %v892
    %v895 = vmul.f32 %v867, %v700
    %v896 = vadd.f32 %v894, %v895
    %898 = vrot.lane.b32.xlu0 %v896, 78
    %v899 = vpop.permute.xlu0 %898
    %v900 = vsel %vm182, %v899, 0
    %902 = vmatprep.subr.mxu0 0.0
    %903 = vmatpush1.msra.mxu0 0.0
    %904 = vmatprep.subr.mxu0 0.0
    %905 = vmatpush1.msra.mxu0 0.0
    %906 = vmatprep.subr.mxu0 0.0
    %907 = vmatpush1.msra.mxu0 0.0
    %908 = vmatprep.subr.mxu0 0.0
    %909 = vmatpush1.msra.mxu0 0.0
    %910 = vmatprep.subr.mxu0 0.0
    %911 = vmatpush1.msra.mxu0 0.0
    %912 = vmatprep.subr.mxu0 0.0
    %913 = vmatpush1.msra.mxu0 0.0
    %914 = vmatprep.subr.mxu0 0.0
    %915 = vmatpush1.msra.mxu0 0.0
    %916 = vmatprep.subr.mxu0 0.0
    %917 = vmatpush1.msra.mxu0 0.0
    %918 = vmatprep.subr.mxu0 0.0
    %919 = vmatpush1.msra.mxu0 0.0
    %920 = vmatprep.subr.mxu0 0.0
    %921 = vmatpush1.msra.mxu0 %v312
    %922 = vmatprep.subr.mxu0 0.0
    %923 = vmatpush1.msra.mxu0 %v134
    %924 = vmatprep.subr.mxu0 0.0
    %925 = vmatpush1.msra.mxu0 %v133
    %926 = vmatprep.subr.mxu0 0.0
    %927 = vmatpush1.msra.mxu0 %v132
    %928 = vmatprep.subr.mxu0 0.0
    %929 = vmatpush1.msra.mxu0 %v131
    %930 = vmatprep.subr.mxu0 0.0
    %931 = vmatpush1.msra.mxu0 %v130
    %932 = vmatprep.subr.mxu0 0.0
    %933 = vmatpush1.msra.mxu0 %v129
    %934 = vmatprep.subr.mxu0 0.0
    %935 = vmatpush2.msra.mxu0 0.0
    %936 = vmatprep.subr.mxu0 0.0
    %937 = vmatpush2.msra.mxu0 0.0
    %938 = vmatprep.subr.mxu0 0.0
    %939 = vmatpush2.msra.mxu0 0.0
    %940 = vmatprep.subr.mxu0 0.0
    %941 = vmatpush2.msra.mxu0 0.0
    %942 = vmatprep.subr.mxu0 0.0
    %943 = vmatpush2.msra.mxu0 0.0
    %944 = vmatprep.subr.mxu0 0.0
    %945 = vmatpush2.msra.mxu0 0.0
    %946 = vmatprep.subr.mxu0 0.0
    %947 = vmatpush2.msra.mxu0 0.0
    %948 = vmatprep.subr.mxu0 0.0
    %949 = vmatpush2.msra.mxu0 0.0
    %950 = vmatprep.subr.mxu0 0.0
    %951 = vmatpush2.msra.mxu0 0.0
    %952 = vmatprep.subr.mxu0 0.0
    %953 = vmatpush2.msra.mxu0 0.0
    %954 = vmatprep.subr.mxu0 0.0
    %955 = vmatpush2.msra.mxu0 0.0
    %956 = vmatprep.subr.mxu0 0.0
    %957 = vmatpush2.msra.mxu0 0.0
    %958 = vmatprep.subr.mxu0 0.0
    %959 = vmatpush2.msra.mxu0 0.0
    %960 = vmatprep.subr.mxu0 0.0
    %961 = vmatpush2.msra.mxu0 0.0
    %962 = vmatprep.subr.mxu0 0.0
    %963 = vmatpush2.msra.mxu0 0.0
    %964 = vmatprep.subr.mxu0 0.0
    %965 = vmatpush2.msra.mxu0 0.0
    %966 = vmatprep.mubr.f32.mxu0 0.0
    %967 = vmatmul.mubr.f32.gmra.mxu0 %v900
    %v968 = vpop.f32.mrf.mxu0
    %v969 = vadd.f32 %v304, %v968
    %v970 = vpop.f32.mrf.mxu0
    %971 = vdwg.mxu0
    %vm972 = vcmp.eq.s32.totalorder %v138, 3
    %974 = vset.pattern.permute.xlu0 0
    %975 = vperm.xlu0 %974, %v969
    %v976 = vpop.permute.xlu0 %975
    %v978 = vsel %vm972, %v976, 0.0
    %v979 = vadd.f32 %v783, %v978
    %980 = vset.pattern.permute.xlu0 4
    %981 = vperm.xlu0 %980, %v139
    %v982 = vpop.permute.xlu0 %981
    %v984 = vmul.f32 %v982, %v149
    %v985 = vmul.f32 %v982, %v153
    %v986 = vadd.f32 %v984, %v162
    %v987 = vadd.f32 %v985, %v166
    %988 = vmatprep.subr.mxu0 0.0
    %989 = vmatpush1.msra.mxu0 0.0
    %990 = vmatprep.subr.mxu0 0.0
    %991 = vmatpush1.msra.mxu0 0.0
    %992 = vmatprep.subr.mxu0 0.0
    %993 = vmatpush1.msra.mxu0 0.0
    %994 = vmatprep.subr.mxu0 0.0
    %995 = vmatpush1.msra.mxu0 0.0
    %996 = vmatprep.subr.mxu0 0.0
    %997 = vmatpush1.msra.mxu0 0.0
    %998 = vmatprep.subr.mxu0 0.0
    %999 = vmatpush1.msra.mxu0 0.0
    %1000 = vmatprep.subr.mxu0 0.0
    %1001 = vmatpush1.msra.mxu0 0.0
    %1002 = vmatprep.subr.mxu0 0.0
    %1003 = vmatpush1.msra.mxu0 0.0
    %1004 = vmatprep.subr.mxu0 0.0
    %1005 = vmatpush1.msra.mxu0 0.0
    %1006 = vmatprep.subr.mxu0 %v191
    %1007 = vmatpush1.msra.mxu0 %v188
    %1008 = vmatprep.subr.mxu0 %v94
    %1009 = vmatpush1.msra.mxu0 %v93
    %1010 = vmatprep.subr.mxu0 %v92
    %1011 = vmatpush1.msra.mxu0 %v91
    %1012 = vmatprep.subr.mxu0 %v90
    %1013 = vmatpush1.msra.mxu0 %v89
    %1014 = vmatprep.subr.mxu0 %v88
    %1015 = vmatpush1.msra.mxu0 %v87
    %1016 = vmatprep.subr.mxu0 %v86
    %1017 = vmatpush1.msra.mxu0 %v85
    %1018 = vmatprep.subr.mxu0 %v84
    %1019 = vmatpush1.msra.mxu0 %v83
    %1020 = vmatprep.subr.mxu0 0.0
    %1021 = vmatpush2.msra.mxu0 0.0
    %1022 = vmatprep.subr.mxu0 0.0
    %1023 = vmatpush2.msra.mxu0 0.0
    %1024 = vmatprep.subr.mxu0 0.0
    %1025 = vmatpush2.msra.mxu0 0.0
    %1026 = vmatprep.subr.mxu0 0.0
    %1027 = vmatpush2.msra.mxu0 0.0
    %1028 = vmatprep.subr.mxu0 0.0
    %1029 = vmatpush2.msra.mxu0 0.0
    %1030 = vmatprep.subr.mxu0 0.0
    %1031 = vmatpush2.msra.mxu0 0.0
    %1032 = vmatprep.subr.mxu0 0.0
    %1033 = vmatpush2.msra.mxu0 0.0
    %1034 = vmatprep.subr.mxu0 0.0
    %1035 = vmatpush2.msra.mxu0 0.0
    %1036 = vmatprep.subr.mxu0 0.0
    %1037 = vmatpush2.msra.mxu0 0.0
    %1038 = vmatprep.subr.mxu0 0.0
    %1039 = vmatpush2.msra.mxu0 0.0
    %1040 = vmatprep.subr.mxu0 0.0
    %1041 = vmatpush2.msra.mxu0 0.0
    %1042 = vmatprep.subr.mxu0 0.0
    %1043 = vmatpush2.msra.mxu0 0.0
    %1044 = vmatprep.subr.mxu0 0.0
    %1045 = vmatpush2.msra.mxu0 0.0
    %1046 = vmatprep.subr.mxu0 0.0
    %1047 = vmatpush2.msra.mxu0 0.0
    %1048 = vmatprep.subr.mxu0 0.0
    %1049 = vmatpush2.msra.mxu0 0.0
    %1050 = vmatprep.subr.mxu0 0.0
    %1051 = vmatpush2.msra.mxu0 0.0
    %1052 = vmatprep.mubr.f32.mxu0 0.0
    %1053 = vmatmul.mubr.f32.gmra.mxu0 %v900
    %v1054 = vpop.f32.mrf.mxu0
    %v1055 = vadd.f32 %v175, %v1054
    %v1056 = vpop.f32.mrf.mxu0
    %v1057 = vadd.f32 %v179, %v1056
    %1058 = vdwg.mxu0
    %v1059 = vadd.f32 %v986, %v1055
    %v1060 = vmul.f32 %v1059, 0.5
    %v1061 = vtanh.pop %v1060
    %v1062 = vmul.f32 %v1061, 0.5
    %v1063 = vadd.f32 %v1062, 0.5
    %1066 = vrot.lane.b32.xlu0 %v1055, 28
    %v1067 = vpop.permute.xlu0 %1066
    %1068 = vrot.lane.b32.xlu0 %v1057, 28
    %v1069 = vpop.permute.xlu0 %1068
    %v1070 = vsel %vm275, %v1067, %v1069
    %v1072 = vmul.f32 %v1063, %v1070
    %1074 = vrot.lane.b32.xlu0 %v1072, 100
    %v1075 = vpop.permute.xlu0 %1074
    %v1077 = vadd.f32 %v986, %v1075
    %v1078 = vadd.f32 %v987, %v1075
    %v1079 = vtanh.pop %v1077
    %v1080 = vtanh.pop %v1078
    %v1081 = vsub.f32 1.0, %v1063
    %1084 = vrot.lane.b32.xlu0 %v1079, 78
    %v1085 = vpop.permute.xlu0 %1084
    %1086 = vrot.lane.b32.xlu0 %v1080, 78
    %v1087 = vpop.permute.xlu0 %1086
    %v1088 = vsel %vm294, %v1085, %v1087
    %v1090 = vmul.f32 %v1081, %v1088
    %v1091 = vmul.f32 %v1063, %v896
    %v1092 = vadd.f32 %v1090, %v1091
    %1094 = vrot.lane.b32.xlu0 %v1092, 78
    %v1095 = vpop.permute.xlu0 %1094
    %v1096 = vsel %vm182, %v1095, 0
    %1098 = vmatprep.subr.mxu0 0.0
    %1099 = vmatpush1.msra.mxu0 0.0
    %1100 = vmatprep.subr.mxu0 0.0
    %1101 = vmatpush1.msra.mxu0 0.0
    %1102 = vmatprep.subr.mxu0 0.0
    %1103 = vmatpush1.msra.mxu0 0.0
    %1104 = vmatprep.subr.mxu0 0.0
    %1105 = vmatpush1.msra.mxu0 0.0
    %1106 = vmatprep.subr.mxu0 0.0
    %1107 = vmatpush1.msra.mxu0 0.0
    %1108 = vmatprep.subr.mxu0 0.0
    %1109 = vmatpush1.msra.mxu0 0.0
    %1110 = vmatprep.subr.mxu0 0.0
    %1111 = vmatpush1.msra.mxu0 0.0
    %1112 = vmatprep.subr.mxu0 0.0
    %1113 = vmatpush1.msra.mxu0 0.0
    %1114 = vmatprep.subr.mxu0 0.0
    %1115 = vmatpush1.msra.mxu0 0.0
    %1116 = vmatprep.subr.mxu0 0.0
    %1117 = vmatpush1.msra.mxu0 %v312
    %1118 = vmatprep.subr.mxu0 0.0
    %1119 = vmatpush1.msra.mxu0 %v134
    %1120 = vmatprep.subr.mxu0 0.0
    %1121 = vmatpush1.msra.mxu0 %v133
    %1122 = vmatprep.subr.mxu0 0.0
    %1123 = vmatpush1.msra.mxu0 %v132
    %1124 = vmatprep.subr.mxu0 0.0
    %1125 = vmatpush1.msra.mxu0 %v131
    %1126 = vmatprep.subr.mxu0 0.0
    %1127 = vmatpush1.msra.mxu0 %v130
    %1128 = vmatprep.subr.mxu0 0.0
    %1129 = vmatpush1.msra.mxu0 %v129
    %1130 = vmatprep.subr.mxu0 0.0
    %1131 = vmatpush2.msra.mxu0 0.0
    %1132 = vmatprep.subr.mxu0 0.0
    %1133 = vmatpush2.msra.mxu0 0.0
    %1134 = vmatprep.subr.mxu0 0.0
    %1135 = vmatpush2.msra.mxu0 0.0
    %1136 = vmatprep.subr.mxu0 0.0
    %1137 = vmatpush2.msra.mxu0 0.0
    %1138 = vmatprep.subr.mxu0 0.0
    %1139 = vmatpush2.msra.mxu0 0.0
    %1140 = vmatprep.subr.mxu0 0.0
    %1141 = vmatpush2.msra.mxu0 0.0
    %1142 = vmatprep.subr.mxu0 0.0
    %1143 = vmatpush2.msra.mxu0 0.0
    %1144 = vmatprep.subr.mxu0 0.0
    %1145 = vmatpush2.msra.mxu0 0.0
    %1146 = vmatprep.subr.mxu0 0.0
    %1147 = vmatpush2.msra.mxu0 0.0
    %1148 = vmatprep.subr.mxu0 0.0
    %1149 = vmatpush2.msra.mxu0 0.0
    %1150 = vmatprep.subr.mxu0 0.0
    %1151 = vmatpush2.msra.mxu0 0.0
    %1152 = vmatprep.subr.mxu0 0.0
    %1153 = vmatpush2.msra.mxu0 0.0
    %1154 = vmatprep.subr.mxu0 0.0
    %1155 = vmatpush2.msra.mxu0 0.0
    %1156 = vmatprep.subr.mxu0 0.0
    %1157 = vmatpush2.msra.mxu0 0.0
    %1158 = vmatprep.subr.mxu0 0.0
    %1159 = vmatpush2.msra.mxu0 0.0
    %1160 = vmatprep.subr.mxu0 0.0
    %1161 = vmatpush2.msra.mxu0 0.0
    %1162 = vmatprep.mubr.f32.mxu0 0.0
    %1163 = vmatmul.mubr.f32.gmra.mxu0 %v1096
    %v1164 = vpop.f32.mrf.mxu0
    %v1165 = vadd.f32 %v304, %v1164
    %v1166 = vpop.f32.mrf.mxu0
    %1167 = vdwg.mxu0
    %vm1168 = vcmp.eq.s32.totalorder %v138, 4
    %1170 = vset.pattern.permute.xlu0 0
    %1171 = vperm.xlu0 %1170, %v1165
    %v1172 = vpop.permute.xlu0 %1171
    %v1174 = vsel %vm1168, %v1172, 0.0
    %v1175 = vadd.f32 %v979, %v1174
    %1176 = vset.pattern.permute.xlu0 5
    %1177 = vperm.xlu0 %1176, %v139
    %v1178 = vpop.permute.xlu0 %1177
    %v1180 = vmul.f32 %v1178, %v149
    %v1181 = vmul.f32 %v1178, %v153
    %v1182 = vadd.f32 %v1180, %v162
    %v1183 = vadd.f32 %v1181, %v166
    %1184 = vmatprep.subr.mxu0 0.0
    %1185 = vmatpush1.msra.mxu0 0.0
    %1186 = vmatprep.subr.mxu0 0.0
    %1187 = vmatpush1.msra.mxu0 0.0
    %1188 = vmatprep.subr.mxu0 0.0
    %1189 = vmatpush1.msra.mxu0 0.0
    %1190 = vmatprep.subr.mxu0 0.0
    %1191 = vmatpush1.msra.mxu0 0.0
    %1192 = vmatprep.subr.mxu0 0.0
    %1193 = vmatpush1.msra.mxu0 0.0
    %1194 = vmatprep.subr.mxu0 0.0
    %1195 = vmatpush1.msra.mxu0 0.0
    %1196 = vmatprep.subr.mxu0 0.0
    %1197 = vmatpush1.msra.mxu0 0.0
    %1198 = vmatprep.subr.mxu0 0.0
    %1199 = vmatpush1.msra.mxu0 0.0
    %1200 = vmatprep.subr.mxu0 0.0
    %1201 = vmatpush1.msra.mxu0 0.0
    %1202 = vmatprep.subr.mxu0 %v191
    %1203 = vmatpush1.msra.mxu0 %v188
    %1204 = vmatprep.subr.mxu0 %v94
    %1205 = vmatpush1.msra.mxu0 %v93
    %1206 = vmatprep.subr.mxu0 %v92
    %1207 = vmatpush1.msra.mxu0 %v91
    %1208 = vmatprep.subr.mxu0 %v90
    %1209 = vmatpush1.msra.mxu0 %v89
    %1210 = vmatprep.subr.mxu0 %v88
    %1211 = vmatpush1.msra.mxu0 %v87
    %1212 = vmatprep.subr.mxu0 %v86
    %1213 = vmatpush1.msra.mxu0 %v85
    %1214 = vmatprep.subr.mxu0 %v84
    %1215 = vmatpush1.msra.mxu0 %v83
    %1216 = vmatprep.subr.mxu0 0.0
    %1217 = vmatpush2.msra.mxu0 0.0
    %1218 = vmatprep.subr.mxu0 0.0
    %1219 = vmatpush2.msra.mxu0 0.0
    %1220 = vmatprep.subr.mxu0 0.0
    %1221 = vmatpush2.msra.mxu0 0.0
    %1222 = vmatprep.subr.mxu0 0.0
    %1223 = vmatpush2.msra.mxu0 0.0
    %1224 = vmatprep.subr.mxu0 0.0
    %1225 = vmatpush2.msra.mxu0 0.0
    %1226 = vmatprep.subr.mxu0 0.0
    %1227 = vmatpush2.msra.mxu0 0.0
    %1228 = vmatprep.subr.mxu0 0.0
    %1229 = vmatpush2.msra.mxu0 0.0
    %1230 = vmatprep.subr.mxu0 0.0
    %1231 = vmatpush2.msra.mxu0 0.0
    %1232 = vmatprep.subr.mxu0 0.0
    %1233 = vmatpush2.msra.mxu0 0.0
    %1234 = vmatprep.subr.mxu0 0.0
    %1235 = vmatpush2.msra.mxu0 0.0
    %1236 = vmatprep.subr.mxu0 0.0
    %1237 = vmatpush2.msra.mxu0 0.0
    %1238 = vmatprep.subr.mxu0 0.0
    %1239 = vmatpush2.msra.mxu0 0.0
    %1240 = vmatprep.subr.mxu0 0.0
    %1241 = vmatpush2.msra.mxu0 0.0
    %1242 = vmatprep.subr.mxu0 0.0
    %1243 = vmatpush2.msra.mxu0 0.0
    %1244 = vmatprep.subr.mxu0 0.0
    %1245 = vmatpush2.msra.mxu0 0.0
    %1246 = vmatprep.subr.mxu0 0.0
    %1247 = vmatpush2.msra.mxu0 0.0
    %1248 = vmatprep.mubr.f32.mxu0 0.0
    %1249 = vmatmul.mubr.f32.gmra.mxu0 %v1096
    %v1250 = vpop.f32.mrf.mxu0
    %v1251 = vadd.f32 %v175, %v1250
    %v1252 = vpop.f32.mrf.mxu0
    %v1253 = vadd.f32 %v179, %v1252
    %1254 = vdwg.mxu0
    %v1255 = vadd.f32 %v1182, %v1251
    %v1256 = vmul.f32 %v1255, 0.5
    %v1257 = vtanh.pop %v1256
    %v1258 = vmul.f32 %v1257, 0.5
    %v1259 = vadd.f32 %v1258, 0.5
    %1262 = vrot.lane.b32.xlu0 %v1251, 28
    %v1263 = vpop.permute.xlu0 %1262
    %1264 = vrot.lane.b32.xlu0 %v1253, 28
    %v1265 = vpop.permute.xlu0 %1264
    %v1266 = vsel %vm275, %v1263, %v1265
    %v1268 = vmul.f32 %v1259, %v1266
    %1270 = vrot.lane.b32.xlu0 %v1268, 100
    %v1271 = vpop.permute.xlu0 %1270
    %v1273 = vadd.f32 %v1182, %v1271
    %v1274 = vadd.f32 %v1183, %v1271
    %v1275 = vtanh.pop %v1273
    %v1276 = vtanh.pop %v1274
    %v1277 = vsub.f32 1.0, %v1259
    %1280 = vrot.lane.b32.xlu0 %v1275, 78
    %v1281 = vpop.permute.xlu0 %1280
    %1282 = vrot.lane.b32.xlu0 %v1276, 78
    %v1283 = vpop.permute.xlu0 %1282
    %v1284 = vsel %vm294, %v1281, %v1283
    %v1286 = vmul.f32 %v1277, %v1284
    %v1287 = vmul.f32 %v1259, %v1092
    %v1288 = vadd.f32 %v1286, %v1287
    %1290 = vrot.lane.b32.xlu0 %v1288, 78
    %v1291 = vpop.permute.xlu0 %1290
    %v1292 = vsel %vm182, %v1291, 0
    %1294 = vmatprep.subr.mxu0 0.0
    %1295 = vmatpush1.msra.mxu0 0.0
    %1296 = vmatprep.subr.mxu0 0.0
    %1297 = vmatpush1.msra.mxu0 0.0
    %1298 = vmatprep.subr.mxu0 0.0
    %1299 = vmatpush1.msra.mxu0 0.0
    %1300 = vmatprep.subr.mxu0 0.0
    %1301 = vmatpush1.msra.mxu0 0.0
    %1302 = vmatprep.subr.mxu0 0.0
    %1303 = vmatpush1.msra.mxu0 0.0
    %1304 = vmatprep.subr.mxu0 0.0
    %1305 = vmatpush1.msra.mxu0 0.0
    %1306 = vmatprep.subr.mxu0 0.0
    %1307 = vmatpush1.msra.mxu0 0.0
    %1308 = vmatprep.subr.mxu0 0.0
    %1309 = vmatpush1.msra.mxu0 0.0
    %1310 = vmatprep.subr.mxu0 0.0
    %1311 = vmatpush1.msra.mxu0 0.0
    %1312 = vmatprep.subr.mxu0 0.0
    %1313 = vmatpush1.msra.mxu0 %v312
    %1314 = vmatprep.subr.mxu0 0.0
    %1315 = vmatpush1.msra.mxu0 %v134
    %1316 = vmatprep.subr.mxu0 0.0
    %1317 = vmatpush1.msra.mxu0 %v133
    %1318 = vmatprep.subr.mxu0 0.0
    %1319 = vmatpush1.msra.mxu0 %v132
    %1320 = vmatprep.subr.mxu0 0.0
    %1321 = vmatpush1.msra.mxu0 %v131
    %1322 = vmatprep.subr.mxu0 0.0
    %1323 = vmatpush1.msra.mxu0 %v130
    %1324 = vmatprep.subr.mxu0 0.0
    %1325 = vmatpush1.msra.mxu0 %v129
    %1326 = vmatprep.subr.mxu0 0.0
    %1327 = vmatpush2.msra.mxu0 0.0
    %1328 = vmatprep.subr.mxu0 0.0
    %1329 = vmatpush2.msra.mxu0 0.0
    %1330 = vmatprep.subr.mxu0 0.0
    %1331 = vmatpush2.msra.mxu0 0.0
    %1332 = vmatprep.subr.mxu0 0.0
    %1333 = vmatpush2.msra.mxu0 0.0
    %1334 = vmatprep.subr.mxu0 0.0
    %1335 = vmatpush2.msra.mxu0 0.0
    %1336 = vmatprep.subr.mxu0 0.0
    %1337 = vmatpush2.msra.mxu0 0.0
    %1338 = vmatprep.subr.mxu0 0.0
    %1339 = vmatpush2.msra.mxu0 0.0
    %1340 = vmatprep.subr.mxu0 0.0
    %1341 = vmatpush2.msra.mxu0 0.0
    %1342 = vmatprep.subr.mxu0 0.0
    %1343 = vmatpush2.msra.mxu0 0.0
    %1344 = vmatprep.subr.mxu0 0.0
    %1345 = vmatpush2.msra.mxu0 0.0
    %1346 = vmatprep.subr.mxu0 0.0
    %1347 = vmatpush2.msra.mxu0 0.0
    %1348 = vmatprep.subr.mxu0 0.0
    %1349 = vmatpush2.msra.mxu0 0.0
    %1350 = vmatprep.subr.mxu0 0.0
    %1351 = vmatpush2.msra.mxu0 0.0
    %1352 = vmatprep.subr.mxu0 0.0
    %1353 = vmatpush2.msra.mxu0 0.0
    %1354 = vmatprep.subr.mxu0 0.0
    %1355 = vmatpush2.msra.mxu0 0.0
    %1356 = vmatprep.subr.mxu0 0.0
    %1357 = vmatpush2.msra.mxu0 0.0
    %1358 = vmatprep.mubr.f32.mxu0 0.0
    %1359 = vmatmul.mubr.f32.gmra.mxu0 %v1292
    %v1360 = vpop.f32.mrf.mxu0
    %v1361 = vadd.f32 %v304, %v1360
    %v1362 = vpop.f32.mrf.mxu0
    %1363 = vdwg.mxu0
    %vm1364 = vcmp.eq.s32.totalorder %v138, 5
    %1366 = vset.pattern.permute.xlu0 0
    %1367 = vperm.xlu0 %1366, %v1361
    %v1368 = vpop.permute.xlu0 %1367
    %v1370 = vsel %vm1364, %v1368, 0.0
    %v1371 = vadd.f32 %v1175, %v1370
    %1372 = vset.pattern.permute.xlu0 6
    %1373 = vperm.xlu0 %1372, %v139
    %v1374 = vpop.permute.xlu0 %1373
    %v1376 = vmul.f32 %v1374, %v149
    %v1377 = vmul.f32 %v1374, %v153
    %v1378 = vadd.f32 %v1376, %v162
    %v1379 = vadd.f32 %v1377, %v166
    %1380 = vmatprep.subr.mxu0 0.0
    %1381 = vmatpush1.msra.mxu0 0.0
    %1382 = vmatprep.subr.mxu0 0.0
    %1383 = vmatpush1.msra.mxu0 0.0
    %1384 = vmatprep.subr.mxu0 0.0
    %1385 = vmatpush1.msra.mxu0 0.0
    %1386 = vmatprep.subr.mxu0 0.0
    %1387 = vmatpush1.msra.mxu0 0.0
    %1388 = vmatprep.subr.mxu0 0.0
    %1389 = vmatpush1.msra.mxu0 0.0
    %1390 = vmatprep.subr.mxu0 0.0
    %1391 = vmatpush1.msra.mxu0 0.0
    %1392 = vmatprep.subr.mxu0 0.0
    %1393 = vmatpush1.msra.mxu0 0.0
    %1394 = vmatprep.subr.mxu0 0.0
    %1395 = vmatpush1.msra.mxu0 0.0
    %1396 = vmatprep.subr.mxu0 0.0
    %1397 = vmatpush1.msra.mxu0 0.0
    %1398 = vmatprep.subr.mxu0 %v191
    %1399 = vmatpush1.msra.mxu0 %v188
    %1400 = vmatprep.subr.mxu0 %v94
    %1401 = vmatpush1.msra.mxu0 %v93
    %1402 = vmatprep.subr.mxu0 %v92
    %1403 = vmatpush1.msra.mxu0 %v91
    %1404 = vmatprep.subr.mxu0 %v90
    %1405 = vmatpush1.msra.mxu0 %v89
    %1406 = vmatprep.subr.mxu0 %v88
    %1407 = vmatpush1.msra.mxu0 %v87
    %1408 = vmatprep.subr.mxu0 %v86
    %1409 = vmatpush1.msra.mxu0 %v85
    %1410 = vmatprep.subr.mxu0 %v84
    %1411 = vmatpush1.msra.mxu0 %v83
    %1412 = vmatprep.subr.mxu0 0.0
    %1413 = vmatpush2.msra.mxu0 0.0
    %1414 = vmatprep.subr.mxu0 0.0
    %1415 = vmatpush2.msra.mxu0 0.0
    %1416 = vmatprep.subr.mxu0 0.0
    %1417 = vmatpush2.msra.mxu0 0.0
    %1418 = vmatprep.subr.mxu0 0.0
    %1419 = vmatpush2.msra.mxu0 0.0
    %1420 = vmatprep.subr.mxu0 0.0
    %1421 = vmatpush2.msra.mxu0 0.0
    %1422 = vmatprep.subr.mxu0 0.0
    %1423 = vmatpush2.msra.mxu0 0.0
    %1424 = vmatprep.subr.mxu0 0.0
    %1425 = vmatpush2.msra.mxu0 0.0
    %1426 = vmatprep.subr.mxu0 0.0
    %1427 = vmatpush2.msra.mxu0 0.0
    %1428 = vmatprep.subr.mxu0 0.0
    %1429 = vmatpush2.msra.mxu0 0.0
    %1430 = vmatprep.subr.mxu0 0.0
    %1431 = vmatpush2.msra.mxu0 0.0
    %1432 = vmatprep.subr.mxu0 0.0
    %1433 = vmatpush2.msra.mxu0 0.0
    %1434 = vmatprep.subr.mxu0 0.0
    %1435 = vmatpush2.msra.mxu0 0.0
    %1436 = vmatprep.subr.mxu0 0.0
    %1437 = vmatpush2.msra.mxu0 0.0
    %1438 = vmatprep.subr.mxu0 0.0
    %1439 = vmatpush2.msra.mxu0 0.0
    %1440 = vmatprep.subr.mxu0 0.0
    %1441 = vmatpush2.msra.mxu0 0.0
    %1442 = vmatprep.subr.mxu0 0.0
    %1443 = vmatpush2.msra.mxu0 0.0
    %1444 = vmatprep.mubr.f32.mxu0 0.0
    %1445 = vmatmul.mubr.f32.gmra.mxu0 %v1292
    %v1446 = vpop.f32.mrf.mxu0
    %v1447 = vadd.f32 %v175, %v1446
    %v1448 = vpop.f32.mrf.mxu0
    %v1449 = vadd.f32 %v179, %v1448
    %1450 = vdwg.mxu0
    %v1451 = vadd.f32 %v1378, %v1447
    %v1452 = vmul.f32 %v1451, 0.5
    %v1453 = vtanh.pop %v1452
    %v1454 = vmul.f32 %v1453, 0.5
    %v1455 = vadd.f32 %v1454, 0.5
    %1458 = vrot.lane.b32.xlu0 %v1447, 28
    %v1459 = vpop.permute.xlu0 %1458
    %1460 = vrot.lane.b32.xlu0 %v1449, 28
    %v1461 = vpop.permute.xlu0 %1460
    %v1462 = vsel %vm275, %v1459, %v1461
    %v1464 = vmul.f32 %v1455, %v1462
    %1466 = vrot.lane.b32.xlu0 %v1464, 100
    %v1467 = vpop.permute.xlu0 %1466
    %v1469 = vadd.f32 %v1378, %v1467
    %v1470 = vadd.f32 %v1379, %v1467
    %v1471 = vtanh.pop %v1469
    %v1472 = vtanh.pop %v1470
    %v1473 = vsub.f32 1.0, %v1455
    %1476 = vrot.lane.b32.xlu0 %v1471, 78
    %v1477 = vpop.permute.xlu0 %1476
    %1478 = vrot.lane.b32.xlu0 %v1472, 78
    %v1479 = vpop.permute.xlu0 %1478
    %v1480 = vsel %vm294, %v1477, %v1479
    %v1482 = vmul.f32 %v1473, %v1480
    %v1483 = vmul.f32 %v1455, %v1288
    %v1484 = vadd.f32 %v1482, %v1483
    %1486 = vrot.lane.b32.xlu0 %v1484, 78
    %v1487 = vpop.permute.xlu0 %1486
    %v1488 = vsel %vm182, %v1487, 0
    %1490 = vmatprep.subr.mxu0 0.0
    %1491 = vmatpush1.msra.mxu0 0.0
    %1492 = vmatprep.subr.mxu0 0.0
    %1493 = vmatpush1.msra.mxu0 0.0
    %1494 = vmatprep.subr.mxu0 0.0
    %1495 = vmatpush1.msra.mxu0 0.0
    %1496 = vmatprep.subr.mxu0 0.0
    %1497 = vmatpush1.msra.mxu0 0.0
    %1498 = vmatprep.subr.mxu0 0.0
    %1499 = vmatpush1.msra.mxu0 0.0
    %1500 = vmatprep.subr.mxu0 0.0
    %1501 = vmatpush1.msra.mxu0 0.0
    %1502 = vmatprep.subr.mxu0 0.0
    %1503 = vmatpush1.msra.mxu0 0.0
    %1504 = vmatprep.subr.mxu0 0.0
    %1505 = vmatpush1.msra.mxu0 0.0
    %1506 = vmatprep.subr.mxu0 0.0
    %1507 = vmatpush1.msra.mxu0 0.0
    %1508 = vmatprep.subr.mxu0 0.0
    %1509 = vmatpush1.msra.mxu0 %v312
    %1510 = vmatprep.subr.mxu0 0.0
    %1511 = vmatpush1.msra.mxu0 %v134
    %1512 = vmatprep.subr.mxu0 0.0
    %1513 = vmatpush1.msra.mxu0 %v133
    %1514 = vmatprep.subr.mxu0 0.0
    %1515 = vmatpush1.msra.mxu0 %v132
    %1516 = vmatprep.subr.mxu0 0.0
    %1517 = vmatpush1.msra.mxu0 %v131
    %1518 = vmatprep.subr.mxu0 0.0
    %1519 = vmatpush1.msra.mxu0 %v130
    %1520 = vmatprep.subr.mxu0 0.0
    %1521 = vmatpush1.msra.mxu0 %v129
    %1522 = vmatprep.subr.mxu0 0.0
    %1523 = vmatpush2.msra.mxu0 0.0
    %1524 = vmatprep.subr.mxu0 0.0
    %1525 = vmatpush2.msra.mxu0 0.0
    %1526 = vmatprep.subr.mxu0 0.0
    %1527 = vmatpush2.msra.mxu0 0.0
    %1528 = vmatprep.subr.mxu0 0.0
    %1529 = vmatpush2.msra.mxu0 0.0
    %1530 = vmatprep.subr.mxu0 0.0
    %1531 = vmatpush2.msra.mxu0 0.0
    %1532 = vmatprep.subr.mxu0 0.0
    %1533 = vmatpush2.msra.mxu0 0.0
    %1534 = vmatprep.subr.mxu0 0.0
    %1535 = vmatpush2.msra.mxu0 0.0
    %1536 = vmatprep.subr.mxu0 0.0
    %1537 = vmatpush2.msra.mxu0 0.0
    %1538 = vmatprep.subr.mxu0 0.0
    %1539 = vmatpush2.msra.mxu0 0.0
    %1540 = vmatprep.subr.mxu0 0.0
    %1541 = vmatpush2.msra.mxu0 0.0
    %1542 = vmatprep.subr.mxu0 0.0
    %1543 = vmatpush2.msra.mxu0 0.0
    %1544 = vmatprep.subr.mxu0 0.0
    %1545 = vmatpush2.msra.mxu0 0.0
    %1546 = vmatprep.subr.mxu0 0.0
    %1547 = vmatpush2.msra.mxu0 0.0
    %1548 = vmatprep.subr.mxu0 0.0
    %1549 = vmatpush2.msra.mxu0 0.0
    %1550 = vmatprep.subr.mxu0 0.0
    %1551 = vmatpush2.msra.mxu0 0.0
    %1552 = vmatprep.subr.mxu0 0.0
    %1553 = vmatpush2.msra.mxu0 0.0
    %1554 = vmatprep.mubr.f32.mxu0 0.0
    %1555 = vmatmul.mubr.f32.gmra.mxu0 %v1488
    %v1556 = vpop.f32.mrf.mxu0
    %v1557 = vadd.f32 %v304, %v1556
    %v1558 = vpop.f32.mrf.mxu0
    %1559 = vdwg.mxu0
    %vm1560 = vcmp.eq.s32.totalorder %v138, 6
    %1562 = vset.pattern.permute.xlu0 0
    %1563 = vperm.xlu0 %1562, %v1557
    %v1564 = vpop.permute.xlu0 %1563
    %v1566 = vsel %vm1560, %v1564, 0.0
    %v1567 = vadd.f32 %v1371, %v1566
    %1568 = vset.pattern.permute.xlu0 7
    %1569 = vperm.xlu0 %1568, %v139
    %v1570 = vpop.permute.xlu0 %1569
    %v1572 = vmul.f32 %v1570, %v149
    %v1573 = vmul.f32 %v1570, %v153
    %v1574 = vadd.f32 %v1572, %v162
    %v1575 = vadd.f32 %v1573, %v166
    %1576 = vmatprep.subr.mxu0 0.0
    %1577 = vmatpush1.msra.mxu0 0.0
    %1578 = vmatprep.subr.mxu0 0.0
    %1579 = vmatpush1.msra.mxu0 0.0
    %1580 = vmatprep.subr.mxu0 0.0
    %1581 = vmatpush1.msra.mxu0 0.0
    %1582 = vmatprep.subr.mxu0 0.0
    %1583 = vmatpush1.msra.mxu0 0.0
    %1584 = vmatprep.subr.mxu0 0.0
    %1585 = vmatpush1.msra.mxu0 0.0
    %1586 = vmatprep.subr.mxu0 0.0
    %1587 = vmatpush1.msra.mxu0 0.0
    %1588 = vmatprep.subr.mxu0 0.0
    %1589 = vmatpush1.msra.mxu0 0.0
    %1590 = vmatprep.subr.mxu0 0.0
    %1591 = vmatpush1.msra.mxu0 0.0
    %1592 = vmatprep.subr.mxu0 0.0
    %1593 = vmatpush1.msra.mxu0 0.0
    %1594 = vmatprep.subr.mxu0 %v191
    %1595 = vmatpush1.msra.mxu0 %v188
    %1596 = vmatprep.subr.mxu0 %v94
    %1597 = vmatpush1.msra.mxu0 %v93
    %1598 = vmatprep.subr.mxu0 %v92
    %1599 = vmatpush1.msra.mxu0 %v91
    %1600 = vmatprep.subr.mxu0 %v90
    %1601 = vmatpush1.msra.mxu0 %v89
    %1602 = vmatprep.subr.mxu0 %v88
    %1603 = vmatpush1.msra.mxu0 %v87
    %1604 = vmatprep.subr.mxu0 %v86
    %1605 = vmatpush1.msra.mxu0 %v85
    %1606 = vmatprep.subr.mxu0 %v84
    %1607 = vmatpush1.msra.mxu0 %v83
    %1608 = vmatprep.subr.mxu0 0.0
    %1609 = vmatpush2.msra.mxu0 0.0
    %1610 = vmatprep.subr.mxu0 0.0
    %1611 = vmatpush2.msra.mxu0 0.0
    %1612 = vmatprep.subr.mxu0 0.0
    %1613 = vmatpush2.msra.mxu0 0.0
    %1614 = vmatprep.subr.mxu0 0.0
    %1615 = vmatpush2.msra.mxu0 0.0
    %1616 = vmatprep.subr.mxu0 0.0
    %1617 = vmatpush2.msra.mxu0 0.0
    %1618 = vmatprep.subr.mxu0 0.0
    %1619 = vmatpush2.msra.mxu0 0.0
    %1620 = vmatprep.subr.mxu0 0.0
    %1621 = vmatpush2.msra.mxu0 0.0
    %1622 = vmatprep.subr.mxu0 0.0
    %1623 = vmatpush2.msra.mxu0 0.0
    %1624 = vmatprep.subr.mxu0 0.0
    %1625 = vmatpush2.msra.mxu0 0.0
    %1626 = vmatprep.subr.mxu0 0.0
    %1627 = vmatpush2.msra.mxu0 0.0
    %1628 = vmatprep.subr.mxu0 0.0
    %1629 = vmatpush2.msra.mxu0 0.0
    %1630 = vmatprep.subr.mxu0 0.0
    %1631 = vmatpush2.msra.mxu0 0.0
    %1632 = vmatprep.subr.mxu0 0.0
    %1633 = vmatpush2.msra.mxu0 0.0
    %1634 = vmatprep.subr.mxu0 0.0
    %1635 = vmatpush2.msra.mxu0 0.0
    %1636 = vmatprep.subr.mxu0 0.0
    %1637 = vmatpush2.msra.mxu0 0.0
    %1638 = vmatprep.subr.mxu0 0.0
    %1639 = vmatpush2.msra.mxu0 0.0
    %1640 = vmatprep.mubr.f32.mxu0 0.0
    %1641 = vmatmul.mubr.f32.gmra.mxu0 %v1488
    %v1642 = vpop.f32.mrf.mxu0
    %v1643 = vadd.f32 %v175, %v1642
    %v1644 = vpop.f32.mrf.mxu0
    %v1645 = vadd.f32 %v179, %v1644
    %1646 = vdwg.mxu0
    %v1647 = vadd.f32 %v1574, %v1643
    %v1648 = vmul.f32 %v1647, 0.5
    %v1649 = vtanh.pop %v1648
    %v1650 = vmul.f32 %v1649, 0.5
    %v1651 = vadd.f32 %v1650, 0.5
    %1654 = vrot.lane.b32.xlu0 %v1643, 28
    %v1655 = vpop.permute.xlu0 %1654
    %1656 = vrot.lane.b32.xlu0 %v1645, 28
    %v1657 = vpop.permute.xlu0 %1656
    %v1658 = vsel %vm275, %v1655, %v1657
    %v1660 = vmul.f32 %v1651, %v1658
    %1662 = vrot.lane.b32.xlu0 %v1660, 100
    %v1663 = vpop.permute.xlu0 %1662
    %v1665 = vadd.f32 %v1574, %v1663
    %v1666 = vadd.f32 %v1575, %v1663
    %v1667 = vtanh.pop %v1665
    %v1668 = vtanh.pop %v1666
    %v1669 = vsub.f32 1.0, %v1651
    %1672 = vrot.lane.b32.xlu0 %v1667, 78
    %v1673 = vpop.permute.xlu0 %1672
    %1674 = vrot.lane.b32.xlu0 %v1668, 78
    %v1675 = vpop.permute.xlu0 %1674
    %v1676 = vsel %vm294, %v1673, %v1675
    %v1678 = vmul.f32 %v1669, %v1676
    %v1679 = vmul.f32 %v1651, %v1484
    %v1680 = vadd.f32 %v1678, %v1679
    %1682 = vrot.lane.b32.xlu0 %v1680, 78
    %v1683 = vpop.permute.xlu0 %1682
    %v1684 = vsel %vm182, %v1683, 0
    %1686 = vmatprep.subr.mxu0 0.0
    %1687 = vmatpush1.msra.mxu0 0.0
    %1688 = vmatprep.subr.mxu0 0.0
    %1689 = vmatpush1.msra.mxu0 0.0
    %1690 = vmatprep.subr.mxu0 0.0
    %1691 = vmatpush1.msra.mxu0 0.0
    %1692 = vmatprep.subr.mxu0 0.0
    %1693 = vmatpush1.msra.mxu0 0.0
    %1694 = vmatprep.subr.mxu0 0.0
    %1695 = vmatpush1.msra.mxu0 0.0
    %1696 = vmatprep.subr.mxu0 0.0
    %1697 = vmatpush1.msra.mxu0 0.0
    %1698 = vmatprep.subr.mxu0 0.0
    %1699 = vmatpush1.msra.mxu0 0.0
    %1700 = vmatprep.subr.mxu0 0.0
    %1701 = vmatpush1.msra.mxu0 0.0
    %1702 = vmatprep.subr.mxu0 0.0
    %1703 = vmatpush1.msra.mxu0 0.0
    %1704 = vmatprep.subr.mxu0 0.0
    %1705 = vmatpush1.msra.mxu0 %v312
    %1706 = vmatprep.subr.mxu0 0.0
    %1707 = vmatpush1.msra.mxu0 %v134
    %1708 = vmatprep.subr.mxu0 0.0
    %1709 = vmatpush1.msra.mxu0 %v133
    %1710 = vmatprep.subr.mxu0 0.0
    %1711 = vmatpush1.msra.mxu0 %v132
    %1712 = vmatprep.subr.mxu0 0.0
    %1713 = vmatpush1.msra.mxu0 %v131
    %1714 = vmatprep.subr.mxu0 0.0
    %1715 = vmatpush1.msra.mxu0 %v130
    %1716 = vmatprep.subr.mxu0 0.0
    %1717 = vmatpush1.msra.mxu0 %v129
    %1718 = vmatprep.subr.mxu0 0.0
    %1719 = vmatpush2.msra.mxu0 0.0
    %1720 = vmatprep.subr.mxu0 0.0
    %1721 = vmatpush2.msra.mxu0 0.0
    %1722 = vmatprep.subr.mxu0 0.0
    %1723 = vmatpush2.msra.mxu0 0.0
    %1724 = vmatprep.subr.mxu0 0.0
    %1725 = vmatpush2.msra.mxu0 0.0
    %1726 = vmatprep.subr.mxu0 0.0
    %1727 = vmatpush2.msra.mxu0 0.0
    %1728 = vmatprep.subr.mxu0 0.0
    %1729 = vmatpush2.msra.mxu0 0.0
    %1730 = vmatprep.subr.mxu0 0.0
    %1731 = vmatpush2.msra.mxu0 0.0
    %1732 = vmatprep.subr.mxu0 0.0
    %1733 = vmatpush2.msra.mxu0 0.0
    %1734 = vmatprep.subr.mxu0 0.0
    %1735 = vmatpush2.msra.mxu0 0.0
    %1736 = vmatprep.subr.mxu0 0.0
    %1737 = vmatpush2.msra.mxu0 0.0
    %1738 = vmatprep.subr.mxu0 0.0
    %1739 = vmatpush2.msra.mxu0 0.0
    %1740 = vmatprep.subr.mxu0 0.0
    %1741 = vmatpush2.msra.mxu0 0.0
    %1742 = vmatprep.subr.mxu0 0.0
    %1743 = vmatpush2.msra.mxu0 0.0
    %1744 = vmatprep.subr.mxu0 0.0
    %1745 = vmatpush2.msra.mxu0 0.0
    %1746 = vmatprep.subr.mxu0 0.0
    %1747 = vmatpush2.msra.mxu0 0.0
    %1748 = vmatprep.subr.mxu0 0.0
    %1749 = vmatpush2.msra.mxu0 0.0
    %1750 = vmatprep.mubr.f32.mxu0 0.0
    %1751 = vmatmul.mubr.f32.gmra.mxu0 %v1684
    %v1752 = vpop.f32.mrf.mxu0
    %v1753 = vadd.f32 %v304, %v1752
    %v1754 = vpop.f32.mrf.mxu0
    %1755 = vdwg.mxu0
    %vm1756 = vcmp.eq.s32.totalorder %v138, 7
    %1758 = vset.pattern.permute.xlu0 0
    %1759 = vperm.xlu0 %1758, %v1753
    %v1760 = vpop.permute.xlu0 %1759
    %v1762 = vsel %vm1756, %v1760, 0.0
    %v1763 = vadd.f32 %v1567, %v1762
    %v1764 = vmul.f32 %v1760, %v149
    %v1765 = vmul.f32 %v1760, %v153
    %v1766 = vadd.f32 %v1764, %v162
    %v1767 = vadd.f32 %v1765, %v166
    %1768 = vmatprep.subr.mxu0 0.0
    %1769 = vmatpush1.msra.mxu0 0.0
    %1770 = vmatprep.subr.mxu0 0.0
    %1771 = vmatpush1.msra.mxu0 0.0
    %1772 = vmatprep.subr.mxu0 0.0
    %1773 = vmatpush1.msra.mxu0 0.0
    %1774 = vmatprep.subr.mxu0 0.0
    %1775 = vmatpush1.msra.mxu0 0.0
    %1776 = vmatprep.subr.mxu0 0.0
    %1777 = vmatpush1.msra.mxu0 0.0
    %1778 = vmatprep.subr.mxu0 0.0
    %1779 = vmatpush1.msra.mxu0 0.0
    %1780 = vmatprep.subr.mxu0 0.0
    %1781 = vmatpush1.msra.mxu0 0.0
    %1782 = vmatprep.subr.mxu0 0.0
    %1783 = vmatpush1.msra.mxu0 0.0
    %1784 = vmatprep.subr.mxu0 0.0
    %1785 = vmatpush1.msra.mxu0 0.0
    %1786 = vmatprep.subr.mxu0 %v191
    %1787 = vmatpush1.msra.mxu0 %v188
    %1788 = vmatprep.subr.mxu0 %v94
    %1789 = vmatpush1.msra.mxu0 %v93
    %1790 = vmatprep.subr.mxu0 %v92
    %1791 = vmatpush1.msra.mxu0 %v91
    %1792 = vmatprep.subr.mxu0 %v90
    %1793 = vmatpush1.msra.mxu0 %v89
    %1794 = vmatprep.subr.mxu0 %v88
    %1795 = vmatpush1.msra.mxu0 %v87
    %1796 = vmatprep.subr.mxu0 %v86
    %1797 = vmatpush1.msra.mxu0 %v85
    %1798 = vmatprep.subr.mxu0 %v84
    %1799 = vmatpush1.msra.mxu0 %v83
    %1800 = vmatprep.subr.mxu0 0.0
    %1801 = vmatpush2.msra.mxu0 0.0
    %1802 = vmatprep.subr.mxu0 0.0
    %1803 = vmatpush2.msra.mxu0 0.0
    %1804 = vmatprep.subr.mxu0 0.0
    %1805 = vmatpush2.msra.mxu0 0.0
    %1806 = vmatprep.subr.mxu0 0.0
    %1807 = vmatpush2.msra.mxu0 0.0
    %1808 = vmatprep.subr.mxu0 0.0
    %1809 = vmatpush2.msra.mxu0 0.0
    %1810 = vmatprep.subr.mxu0 0.0
    %1811 = vmatpush2.msra.mxu0 0.0
    %1812 = vmatprep.subr.mxu0 0.0
    %1813 = vmatpush2.msra.mxu0 0.0
    %1814 = vmatprep.subr.mxu0 0.0
    %1815 = vmatpush2.msra.mxu0 0.0
    %1816 = vmatprep.subr.mxu0 0.0
    %1817 = vmatpush2.msra.mxu0 0.0
    %1818 = vmatprep.subr.mxu0 0.0
    %1819 = vmatpush2.msra.mxu0 0.0
    %1820 = vmatprep.subr.mxu0 0.0
    %1821 = vmatpush2.msra.mxu0 0.0
    %1822 = vmatprep.subr.mxu0 0.0
    %1823 = vmatpush2.msra.mxu0 0.0
    %1824 = vmatprep.subr.mxu0 0.0
    %1825 = vmatpush2.msra.mxu0 0.0
    %1826 = vmatprep.subr.mxu0 0.0
    %1827 = vmatpush2.msra.mxu0 0.0
    %1828 = vmatprep.subr.mxu0 0.0
    %1829 = vmatpush2.msra.mxu0 0.0
    %1830 = vmatprep.subr.mxu0 0.0
    %1831 = vmatpush2.msra.mxu0 0.0
    %1832 = vmatprep.mubr.f32.mxu0 0.0
    %1833 = vmatmul.mubr.f32.gmra.mxu0 %v1684
    %v1834 = vpop.f32.mrf.mxu0
    %v1835 = vadd.f32 %v175, %v1834
    %v1836 = vpop.f32.mrf.mxu0
    %v1837 = vadd.f32 %v179, %v1836
    %1838 = vdwg.mxu0
    %v1839 = vadd.f32 %v1766, %v1835
    %v1840 = vmul.f32 %v1839, 0.5
    %v1841 = vtanh.pop %v1840
    %v1842 = vmul.f32 %v1841, 0.5
    %v1843 = vadd.f32 %v1842, 0.5
    %1846 = vrot.lane.b32.xlu0 %v1835, 28
    %v1847 = vpop.permute.xlu0 %1846
    %1848 = vrot.lane.b32.xlu0 %v1837, 28
    %v1849 = vpop.permute.xlu0 %1848
    %v1850 = vsel %vm275, %v1847, %v1849
    %v1852 = vmul.f32 %v1843, %v1850
    %1854 = vrot.lane.b32.xlu0 %v1852, 100
    %v1855 = vpop.permute.xlu0 %1854
    %v1857 = vadd.f32 %v1766, %v1855
    %v1858 = vadd.f32 %v1767, %v1855
    %v1859 = vtanh.pop %v1857
    %v1860 = vtanh.pop %v1858
    %v1861 = vsub.f32 1.0, %v1843
    %1864 = vrot.lane.b32.xlu0 %v1859, 78
    %v1865 = vpop.permute.xlu0 %1864
    %1866 = vrot.lane.b32.xlu0 %v1860, 78
    %v1867 = vpop.permute.xlu0 %1866
    %v1868 = vsel %vm294, %v1865, %v1867
    %v1870 = vmul.f32 %v1861, %v1868
    %v1871 = vmul.f32 %v1843, %v1680
    %v1872 = vadd.f32 %v1870, %v1871
    %v1874 = vlaneseq
    %v1875 = vshrl.u32 %v1874, 7
    %v1876 = vsub.s32 0, %v1875
    %v1877 = vrot.slane %v127, %v1876
    %v1878 = vlaneseq
    %v1879 = vshrl.u32 %v1878, 7
    %v1880 = vsub.s32 1, %v1879
    %v1881 = vrot.slane %v127, %v1880
    %1885 = vrot.lane.b32.xlu0 %v1872, 78
    %v1886 = vpop.permute.xlu0 %1885
    %v1887 = vsel %vm182, %v1886, 0
    %v1890 = vsel %vm186, %v111, 0
    %v1893 = vsel %vm186, %v112, 0
    %1895 = vmatprep.subr.mxu0 0.0
    %1896 = vmatpush1.msra.mxu0 0.0
    %1897 = vmatprep.subr.mxu0 0.0
    %1898 = vmatpush1.msra.mxu0 0.0
    %1899 = vmatprep.subr.mxu0 0.0
    %1900 = vmatpush1.msra.mxu0 0.0
    %1901 = vmatprep.subr.mxu0 0.0
    %1902 = vmatpush1.msra.mxu0 0.0
    %1903 = vmatprep.subr.mxu0 0.0
    %1904 = vmatpush1.msra.mxu0 0.0
    %1905 = vmatprep.subr.mxu0 0.0
    %1906 = vmatpush1.msra.mxu0 0.0
    %1907 = vmatprep.subr.mxu0 0.0
    %1908 = vmatpush1.msra.mxu0 0.0
    %1909 = vmatprep.subr.mxu0 0.0
    %1910 = vmatpush1.msra.mxu0 0.0
    %1911 = vmatprep.subr.mxu0 0.0
    %1912 = vmatpush1.msra.mxu0 0.0
    %1913 = vmatprep.subr.mxu0 %v1893
    %1914 = vmatpush1.msra.mxu0 %v1890
    %1915 = vmatprep.subr.mxu0 %v110
    %1916 = vmatpush1.msra.mxu0 %v109
    %1917 = vmatprep.subr.mxu0 %v108
    %1918 = vmatpush1.msra.mxu0 %v107
    %1919 = vmatprep.subr.mxu0 %v106
    %1920 = vmatpush1.msra.mxu0 %v105
    %1921 = vmatprep.subr.mxu0 %v104
    %1922 = vmatpush1.msra.mxu0 %v103
    %1923 = vmatprep.subr.mxu0 %v102
    %1924 = vmatpush1.msra.mxu0 %v101
    %1925 = vmatprep.subr.mxu0 %v100
    %1926 = vmatpush1.msra.mxu0 %v99
    %1927 = vmatprep.subr.mxu0 0.0
    %1928 = vmatpush2.msra.mxu0 0.0
    %1929 = vmatprep.subr.mxu0 0.0
    %1930 = vmatpush2.msra.mxu0 0.0
    %1931 = vmatprep.subr.mxu0 0.0
    %1932 = vmatpush2.msra.mxu0 0.0
    %1933 = vmatprep.subr.mxu0 0.0
    %1934 = vmatpush2.msra.mxu0 0.0
    %1935 = vmatprep.subr.mxu0 0.0
    %1936 = vmatpush2.msra.mxu0 0.0
    %1937 = vmatprep.subr.mxu0 0.0
    %1938 = vmatpush2.msra.mxu0 0.0
    %1939 = vmatprep.subr.mxu0 0.0
    %1940 = vmatpush2.msra.mxu0 0.0
    %1941 = vmatprep.subr.mxu0 0.0
    %1942 = vmatpush2.msra.mxu0 0.0
    %1943 = vmatprep.subr.mxu0 0.0
    %1944 = vmatpush2.msra.mxu0 0.0
    %1945 = vmatprep.subr.mxu0 0.0
    %1946 = vmatpush2.msra.mxu0 0.0
    %1947 = vmatprep.subr.mxu0 0.0
    %1948 = vmatpush2.msra.mxu0 0.0
    %1949 = vmatprep.subr.mxu0 0.0
    %1950 = vmatpush2.msra.mxu0 0.0
    %1951 = vmatprep.subr.mxu0 0.0
    %1952 = vmatpush2.msra.mxu0 0.0
    %1953 = vmatprep.subr.mxu0 0.0
    %1954 = vmatpush2.msra.mxu0 0.0
    %1955 = vmatprep.subr.mxu0 0.0
    %1956 = vmatpush2.msra.mxu0 0.0
    %1957 = vmatprep.subr.mxu0 0.0
    %1958 = vmatpush2.msra.mxu0 0.0
    %1959 = vmatprep.mubr.f32.mxu0 0.0
    %1960 = vmatmul.mubr.f32.gmra.mxu0 %v1887
    %v1961 = vpop.f32.mrf.mxu0
    %v1962 = vadd.f32 %v1877, %v1961
    %v1963 = vpop.f32.mrf.mxu0
    %v1964 = vadd.f32 %v1881, %v1963
    %1965 = vdwg.mxu0
    %v1967 = vlaneseq
    %v1968 = vshrl.u32 %v1967, 7
    %v1969 = vsub.s32 0, %v1968
    %v1970 = vrot.slane %v128, %v1969
    %v1971 = vlaneseq
    %v1972 = vshrl.u32 %v1971, 7
    %v1973 = vsub.s32 1, %v1972
    %v1974 = vrot.slane %v128, %v1973
    %v1978 = vsel %vm186, %v125, 0
    %v1981 = vsel %vm186, %v126, 0
    %1983 = vmatprep.subr.mxu0 0.0
    %1984 = vmatpush1.msra.mxu0 0.0
    %1985 = vmatprep.subr.mxu0 0.0
    %1986 = vmatpush1.msra.mxu0 0.0
    %1987 = vmatprep.subr.mxu0 0.0
    %1988 = vmatpush1.msra.mxu0 0.0
    %1989 = vmatprep.subr.mxu0 0.0
    %1990 = vmatpush1.msra.mxu0 0.0
    %1991 = vmatprep.subr.mxu0 0.0
    %1992 = vmatpush1.msra.mxu0 0.0
    %1993 = vmatprep.subr.mxu0 0.0
    %1994 = vmatpush1.msra.mxu0 0.0
    %1995 = vmatprep.subr.mxu0 0.0
    %1996 = vmatpush1.msra.mxu0 0.0
    %1997 = vmatprep.subr.mxu0 0.0
    %1998 = vmatpush1.msra.mxu0 0.0
    %1999 = vmatprep.subr.mxu0 0.0
    %2000 = vmatpush1.msra.mxu0 0.0
    %2001 = vmatprep.subr.mxu0 %v1981
    %2002 = vmatpush1.msra.mxu0 %v1978
    %2003 = vmatprep.subr.mxu0 %v124
    %2004 = vmatpush1.msra.mxu0 %v123
    %2005 = vmatprep.subr.mxu0 %v122
    %2006 = vmatpush1.msra.mxu0 %v121
    %2007 = vmatprep.subr.mxu0 %v120
    %2008 = vmatpush1.msra.mxu0 %v119
    %2009 = vmatprep.subr.mxu0 %v118
    %2010 = vmatpush1.msra.mxu0 %v117
    %2011 = vmatprep.subr.mxu0 %v116
    %2012 = vmatpush1.msra.mxu0 %v115
    %2013 = vmatprep.subr.mxu0 %v114
    %2014 = vmatpush1.msra.mxu0 %v113
    %2015 = vmatprep.subr.mxu0 0.0
    %2016 = vmatpush2.msra.mxu0 0.0
    %2017 = vmatprep.subr.mxu0 0.0
    %2018 = vmatpush2.msra.mxu0 0.0
    %2019 = vmatprep.subr.mxu0 0.0
    %2020 = vmatpush2.msra.mxu0 0.0
    %2021 = vmatprep.subr.mxu0 0.0
    %2022 = vmatpush2.msra.mxu0 0.0
    %2023 = vmatprep.subr.mxu0 0.0
    %2024 = vmatpush2.msra.mxu0 0.0
    %2025 = vmatprep.subr.mxu0 0.0
    %2026 = vmatpush2.msra.mxu0 0.0
    %2027 = vmatprep.subr.mxu0 0.0
    %2028 = vmatpush2.msra.mxu0 0.0
    %2029 = vmatprep.subr.mxu0 0.0
    %2030 = vmatpush2.msra.mxu0 0.0
    %2031 = vmatprep.subr.mxu0 0.0
    %2032 = vmatpush2.msra.mxu0 0.0
    %2033 = vmatprep.subr.mxu0 0.0
    %2034 = vmatpush2.msra.mxu0 0.0
    %2035 = vmatprep.subr.mxu0 0.0
    %2036 = vmatpush2.msra.mxu0 0.0
    %2037 = vmatprep.subr.mxu0 0.0
    %2038 = vmatpush2.msra.mxu0 0.0
    %2039 = vmatprep.subr.mxu0 0.0
    %2040 = vmatpush2.msra.mxu0 0.0
    %2041 = vmatprep.subr.mxu0 0.0
    %2042 = vmatpush2.msra.mxu0 0.0
    %2043 = vmatprep.subr.mxu0 0.0
    %2044 = vmatpush2.msra.mxu0 0.0
    %2045 = vmatprep.subr.mxu0 0.0
    %2046 = vmatpush2.msra.mxu0 0.0
    %2047 = vmatprep.mubr.f32.mxu0 0.0
    %2048 = vmatmul.mubr.f32.gmra.mxu0 %v184
    %v2049 = vpop.f32.mrf.mxu0
    %v2050 = vadd.f32 %v1970, %v2049
    %v2051 = vpop.f32.mrf.mxu0
    %v2052 = vadd.f32 %v1974, %v2051
    %2053 = vdwg.mxu0
    %v2054 = vadd.f32 %v1962, %v2050
    %v2055 = vmul.f32 %v2054, 0.5
    %v2056 = vtanh.pop %v2055
    %v2057 = vmul.f32 %v2056, 0.5
    %v2058 = vadd.f32 %v2057, 0.5
    %2061 = vrot.lane.b32.xlu0 %v2050, 28
    %v2062 = vpop.permute.xlu0 %2061
    %2063 = vrot.lane.b32.xlu0 %v2052, 28
    %v2064 = vpop.permute.xlu0 %2063
    %v2065 = vsel %vm275, %v2062, %v2064
    %v2067 = vmul.f32 %v2058, %v2065
    %2069 = vrot.lane.b32.xlu0 %v2067, 100
    %v2070 = vpop.permute.xlu0 %2069
    %v2072 = vadd.f32 %v1962, %v2070
    %v2073 = vadd.f32 %v1964, %v2070
    %v2074 = vtanh.pop %v2072
    %v2075 = vtanh.pop %v2073
    %v2076 = vsub.f32 1.0, %v2058
    %2079 = vrot.lane.b32.xlu0 %v2074, 78
    %v2080 = vpop.permute.xlu0 %2079
    %2081 = vrot.lane.b32.xlu0 %v2075, 78
    %v2082 = vpop.permute.xlu0 %2081
    %v2083 = vsel %vm294, %v2080, %v2082
    %v2085 = vmul.f32 %v2076, %v2083
    %v2086 = vmul.f32 %v2058, 0.0
    %v2087 = vadd.f32 %v2085, %v2086
    %2089 = vrot.lane.b32.xlu0 %v2087, 78
    %v2090 = vpop.permute.xlu0 %2089
    %v2091 = vsel %vm182, %v2090, 0
    %2093 = vmatprep.subr.mxu0 0.0
    %2094 = vmatpush1.msra.mxu0 0.0
    %2095 = vmatprep.subr.mxu0 0.0
    %2096 = vmatpush1.msra.mxu0 0.0
    %2097 = vmatprep.subr.mxu0 0.0
    %2098 = vmatpush1.msra.mxu0 0.0
    %2099 = vmatprep.subr.mxu0 0.0
    %2100 = vmatpush1.msra.mxu0 0.0
    %2101 = vmatprep.subr.mxu0 0.0
    %2102 = vmatpush1.msra.mxu0 0.0
    %2103 = vmatprep.subr.mxu0 0.0
    %2104 = vmatpush1.msra.mxu0 0.0
    %2105 = vmatprep.subr.mxu0 0.0
    %2106 = vmatpush1.msra.mxu0 0.0
    %2107 = vmatprep.subr.mxu0 0.0
    %2108 = vmatpush1.msra.mxu0 0.0
    %2109 = vmatprep.subr.mxu0 0.0
    %2110 = vmatpush1.msra.mxu0 0.0
    %2111 = vmatprep.subr.mxu0 0.0
    %2112 = vmatpush1.msra.mxu0 %v312
    %2113 = vmatprep.subr.mxu0 0.0
    %2114 = vmatpush1.msra.mxu0 %v134
    %2115 = vmatprep.subr.mxu0 0.0
    %2116 = vmatpush1.msra.mxu0 %v133
    %2117 = vmatprep.subr.mxu0 0.0
    %2118 = vmatpush1.msra.mxu0 %v132
    %2119 = vmatprep.subr.mxu0 0.0
    %2120 = vmatpush1.msra.mxu0 %v131
    %2121 = vmatprep.subr.mxu0 0.0
    %2122 = vmatpush1.msra.mxu0 %v130
    %2123 = vmatprep.subr.mxu0 0.0
    %2124 = vmatpush1.msra.mxu0 %v129
    %2125 = vmatprep.subr.mxu0 0.0
    %2126 = vmatpush2.msra.mxu0 0.0
    %2127 = vmatprep.subr.mxu0 0.0
    %2128 = vmatpush2.msra.mxu0 0.0
    %2129 = vmatprep.subr.mxu0 0.0
    %2130 = vmatpush2.msra.mxu0 0.0
    %2131 = vmatprep.subr.mxu0 0.0
    %2132 = vmatpush2.msra.mxu0 0.0
    %2133 = vmatprep.subr.mxu0 0.0
    %2134 = vmatpush2.msra.mxu0 0.0
    %2135 = vmatprep.subr.mxu0 0.0
    %2136 = vmatpush2.msra.mxu0 0.0
    %2137 = vmatprep.subr.mxu0 0.0
    %2138 = vmatpush2.msra.mxu0 0.0
    %2139 = vmatprep.subr.mxu0 0.0
    %2140 = vmatpush2.msra.mxu0 0.0
    %2141 = vmatprep.subr.mxu0 0.0
    %2142 = vmatpush2.msra.mxu0 0.0
    %2143 = vmatprep.subr.mxu0 0.0
    %2144 = vmatpush2.msra.mxu0 0.0
    %2145 = vmatprep.subr.mxu0 0.0
    %2146 = vmatpush2.msra.mxu0 0.0
    %2147 = vmatprep.subr.mxu0 0.0
    %2148 = vmatpush2.msra.mxu0 0.0
    %2149 = vmatprep.subr.mxu0 0.0
    %2150 = vmatpush2.msra.mxu0 0.0
    %2151 = vmatprep.subr.mxu0 0.0
    %2152 = vmatpush2.msra.mxu0 0.0
    %2153 = vmatprep.subr.mxu0 0.0
    %2154 = vmatpush2.msra.mxu0 0.0
    %2155 = vmatprep.subr.mxu0 0.0
    %2156 = vmatpush2.msra.mxu0 0.0
    %2157 = vmatprep.mubr.f32.mxu0 0.0
    %2158 = vmatmul.mubr.f32.gmra.mxu0 %v2091
    %v2159 = vpop.f32.mrf.mxu0
    %v2160 = vadd.f32 %v304, %v2159
    %v2161 = vpop.f32.mrf.mxu0
    %2162 = vdwg.mxu0
    %vm2163 = vcmp.eq.s32.totalorder %v138, 8
    %2165 = vset.pattern.permute.xlu0 0
    %2166 = vperm.xlu0 %2165, %v2160
    %v2167 = vpop.permute.xlu0 %2166
    %v2169 = vsel %vm2163, %v2167, 0.0
    %v2170 = vadd.f32 %v1763, %v2169
    %v2171 = vmul.f32 %v2167, %v149
    %v2172 = vmul.f32 %v2167, %v153
    %v2173 = vadd.f32 %v2171, %v162
    %v2174 = vadd.f32 %v2172, %v166
    %2175 = vmatprep.subr.mxu0 0.0
    %2176 = vmatpush1.msra.mxu0 0.0
    %2177 = vmatprep.subr.mxu0 0.0
    %2178 = vmatpush1.msra.mxu0 0.0
    %2179 = vmatprep.subr.mxu0 0.0
    %2180 = vmatpush1.msra.mxu0 0.0
    %2181 = vmatprep.subr.mxu0 0.0
    %2182 = vmatpush1.msra.mxu0 0.0
    %2183 = vmatprep.subr.mxu0 0.0
    %2184 = vmatpush1.msra.mxu0 0.0
    %2185 = vmatprep.subr.mxu0 0.0
    %2186 = vmatpush1.msra.mxu0 0.0
    %2187 = vmatprep.subr.mxu0 0.0
    %2188 = vmatpush1.msra.mxu0 0.0
    %2189 = vmatprep.subr.mxu0 0.0
    %2190 = vmatpush1.msra.mxu0 0.0
    %2191 = vmatprep.subr.mxu0 0.0
    %2192 = vmatpush1.msra.mxu0 0.0
    %2193 = vmatprep.subr.mxu0 %v191
    %2194 = vmatpush1.msra.mxu0 %v188
    %2195 = vmatprep.subr.mxu0 %v94
    %2196 = vmatpush1.msra.mxu0 %v93
    %2197 = vmatprep.subr.mxu0 %v92
    %2198 = vmatpush1.msra.mxu0 %v91
    %2199 = vmatprep.subr.mxu0 %v90
    %2200 = vmatpush1.msra.mxu0 %v89
    %2201 = vmatprep.subr.mxu0 %v88
    %2202 = vmatpush1.msra.mxu0 %v87
    %2203 = vmatprep.subr.mxu0 %v86
    %2204 = vmatpush1.msra.mxu0 %v85
    %2205 = vmatprep.subr.mxu0 %v84
    %2206 = vmatpush1.msra.mxu0 %v83
    %2207 = vmatprep.subr.mxu0 0.0
    %2208 = vmatpush2.msra.mxu0 0.0
    %2209 = vmatprep.subr.mxu0 0.0
    %2210 = vmatpush2.msra.mxu0 0.0
    %2211 = vmatprep.subr.mxu0 0.0
    %2212 = vmatpush2.msra.mxu0 0.0
    %2213 = vmatprep.subr.mxu0 0.0
    %2214 = vmatpush2.msra.mxu0 0.0
    %2215 = vmatprep.subr.mxu0 0.0
    %2216 = vmatpush2.msra.mxu0 0.0
    %2217 = vmatprep.subr.mxu0 0.0
    %2218 = vmatpush2.msra.mxu0 0.0
    %2219 = vmatprep.subr.mxu0 0.0
    %2220 = vmatpush2.msra.mxu0 0.0
    %2221 = vmatprep.subr.mxu0 0.0
    %2222 = vmatpush2.msra.mxu0 0.0
    %2223 = vmatprep.subr.mxu0 0.0
    %2224 = vmatpush2.msra.mxu0 0.0
    %2225 = vmatprep.subr.mxu0 0.0
    %2226 = vmatpush2.msra.mxu0 0.0
    %2227 = vmatprep.subr.mxu0 0.0
    %2228 = vmatpush2.msra.mxu0 0.0
    %2229 = vmatprep.subr.mxu0 0.0
    %2230 = vmatpush2.msra.mxu0 0.0
    %2231 = vmatprep.subr.mxu0 0.0
    %2232 = vmatpush2.msra.mxu0 0.0
    %2233 = vmatprep.subr.mxu0 0.0
    %2234 = vmatpush2.msra.mxu0 0.0
    %2235 = vmatprep.subr.mxu0 0.0
    %2236 = vmatpush2.msra.mxu0 0.0
    %2237 = vmatprep.subr.mxu0 0.0
    %2238 = vmatpush2.msra.mxu0 0.0
    %2239 = vmatprep.mubr.f32.mxu0 0.0
    %2240 = vmatmul.mubr.f32.gmra.mxu0 %v1887
    %v2241 = vpop.f32.mrf.mxu0
    %v2242 = vadd.f32 %v175, %v2241
    %v2243 = vpop.f32.mrf.mxu0
    %v2244 = vadd.f32 %v179, %v2243
    %2245 = vdwg.mxu0
    %v2246 = vadd.f32 %v2173, %v2242
    %v2247 = vmul.f32 %v2246, 0.5
    %v2248 = vtanh.pop %v2247
    %v2249 = vmul.f32 %v2248, 0.5
    %v2250 = vadd.f32 %v2249, 0.5
    %2253 = vrot.lane.b32.xlu0 %v2242, 28
    %v2254 = vpop.permute.xlu0 %2253
    %2255 = vrot.lane.b32.xlu0 %v2244, 28
    %v2256 = vpop.permute.xlu0 %2255
    %v2257 = vsel %vm275, %v2254, %v2256
    %v2259 = vmul.f32 %v2250, %v2257
    %2261 = vrot.lane.b32.xlu0 %v2259, 100
    %v2262 = vpop.permute.xlu0 %2261
    %v2264 = vadd.f32 %v2173, %v2262
    %v2265 = vadd.f32 %v2174, %v2262
    %v2266 = vtanh.pop %v2264
    %v2267 = vtanh.pop %v2265
    %v2268 = vsub.f32 1.0, %v2250
    %2271 = vrot.lane.b32.xlu0 %v2266, 78
    %v2272 = vpop.permute.xlu0 %2271
    %2273 = vrot.lane.b32.xlu0 %v2267, 78
    %v2274 = vpop.permute.xlu0 %2273
    %v2275 = vsel %vm294, %v2272, %v2274
    %v2277 = vmul.f32 %v2268, %v2275
    %v2278 = vmul.f32 %v2250, %v1872
    %v2279 = vadd.f32 %v2277, %v2278
    %2281 = vrot.lane.b32.xlu0 %v2279, 78
    %v2282 = vpop.permute.xlu0 %2281
    %v2283 = vsel %vm182, %v2282, 0
    %2285 = vmatprep.subr.mxu0 0.0
    %2286 = vmatpush1.msra.mxu0 0.0
    %2287 = vmatprep.subr.mxu0 0.0
    %2288 = vmatpush1.msra.mxu0 0.0
    %2289 = vmatprep.subr.mxu0 0.0
    %2290 = vmatpush1.msra.mxu0 0.0
    %2291 = vmatprep.subr.mxu0 0.0
    %2292 = vmatpush1.msra.mxu0 0.0
    %2293 = vmatprep.subr.mxu0 0.0
    %2294 = vmatpush1.msra.mxu0 0.0
    %2295 = vmatprep.subr.mxu0 0.0
    %2296 = vmatpush1.msra.mxu0 0.0
    %2297 = vmatprep.subr.mxu0 0.0
    %2298 = vmatpush1.msra.mxu0 0.0
    %2299 = vmatprep.subr.mxu0 0.0
    %2300 = vmatpush1.msra.mxu0 0.0
    %2301 = vmatprep.subr.mxu0 0.0
    %2302 = vmatpush1.msra.mxu0 0.0
    %2303 = vmatprep.subr.mxu0 %v1893
    %2304 = vmatpush1.msra.mxu0 %v1890
    %2305 = vmatprep.subr.mxu0 %v110
    %2306 = vmatpush1.msra.mxu0 %v109
    %2307 = vmatprep.subr.mxu0 %v108
    %2308 = vmatpush1.msra.mxu0 %v107
    %2309 = vmatprep.subr.mxu0 %v106
    %2310 = vmatpush1.msra.mxu0 %v105
    %2311 = vmatprep.subr.mxu0 %v104
    %2312 = vmatpush1.msra.mxu0 %v103
    %2313 = vmatprep.subr.mxu0 %v102
    %2314 = vmatpush1.msra.mxu0 %v101
    %2315 = vmatprep.subr.mxu0 %v100
    %2316 = vmatpush1.msra.mxu0 %v99
    %2317 = vmatprep.subr.mxu0 0.0
    %2318 = vmatpush2.msra.mxu0 0.0
    %2319 = vmatprep.subr.mxu0 0.0
    %2320 = vmatpush2.msra.mxu0 0.0
    %2321 = vmatprep.subr.mxu0 0.0
    %2322 = vmatpush2.msra.mxu0 0.0
    %2323 = vmatprep.subr.mxu0 0.0
    %2324 = vmatpush2.msra.mxu0 0.0
    %2325 = vmatprep.subr.mxu0 0.0
    %2326 = vmatpush2.msra.mxu0 0.0
    %2327 = vmatprep.subr.mxu0 0.0
    %2328 = vmatpush2.msra.mxu0 0.0
    %2329 = vmatprep.subr.mxu0 0.0
    %2330 = vmatpush2.msra.mxu0 0.0
    %2331 = vmatprep.subr.mxu0 0.0
    %2332 = vmatpush2.msra.mxu0 0.0
    %2333 = vmatprep.subr.mxu0 0.0
    %2334 = vmatpush2.msra.mxu0 0.0
    %2335 = vmatprep.subr.mxu0 0.0
    %2336 = vmatpush2.msra.mxu0 0.0
    %2337 = vmatprep.subr.mxu0 0.0
    %2338 = vmatpush2.msra.mxu0 0.0
    %2339 = vmatprep.subr.mxu0 0.0
    %2340 = vmatpush2.msra.mxu0 0.0
    %2341 = vmatprep.subr.mxu0 0.0
    %2342 = vmatpush2.msra.mxu0 0.0
    %2343 = vmatprep.subr.mxu0 0.0
    %2344 = vmatpush2.msra.mxu0 0.0
    %2345 = vmatprep.subr.mxu0 0.0
    %2346 = vmatpush2.msra.mxu0 0.0
    %2347 = vmatprep.subr.mxu0 0.0
    %2348 = vmatpush2.msra.mxu0 0.0
    %2349 = vmatprep.mubr.f32.mxu0 0.0
    %2350 = vmatmul.mubr.f32.gmra.mxu0 %v2283
    %v2351 = vpop.f32.mrf.mxu0
    %v2352 = vadd.f32 %v1877, %v2351
    %v2353 = vpop.f32.mrf.mxu0
    %v2354 = vadd.f32 %v1881, %v2353
    %2355 = vdwg.mxu0
    %2356 = vmatprep.subr.mxu0 0.0
    %2357 = vmatpush1.msra.mxu0 0.0
    %2358 = vmatprep.subr.mxu0 0.0
    %2359 = vmatpush1.msra.mxu0 0.0
    %2360 = vmatprep.subr.mxu0 0.0
    %2361 = vmatpush1.msra.mxu0 0.0
    %2362 = vmatprep.subr.mxu0 0.0
    %2363 = vmatpush1.msra.mxu0 0.0
    %2364 = vmatprep.subr.mxu0 0.0
    %2365 = vmatpush1.msra.mxu0 0.0
    %2366 = vmatprep.subr.mxu0 0.0
    %2367 = vmatpush1.msra.mxu0 0.0
    %2368 = vmatprep.subr.mxu0 0.0
    %2369 = vmatpush1.msra.mxu0 0.0
    %2370 = vmatprep.subr.mxu0 0.0
    %2371 = vmatpush1.msra.mxu0 0.0
    %2372 = vmatprep.subr.mxu0 0.0
    %2373 = vmatpush1.msra.mxu0 0.0
    %2374 = vmatprep.subr.mxu0 %v1981
    %2375 = vmatpush1.msra.mxu0 %v1978
    %2376 = vmatprep.subr.mxu0 %v124
    %2377 = vmatpush1.msra.mxu0 %v123
    %2378 = vmatprep.subr.mxu0 %v122
    %2379 = vmatpush1.msra.mxu0 %v121
    %2380 = vmatprep.subr.mxu0 %v120
    %2381 = vmatpush1.msra.mxu0 %v119
    %2382 = vmatprep.subr.mxu0 %v118
    %2383 = vmatpush1.msra.mxu0 %v117
    %2384 = vmatprep.subr.mxu0 %v116
    %2385 = vmatpush1.msra.mxu0 %v115
    %2386 = vmatprep.subr.mxu0 %v114
    %2387 = vmatpush1.msra.mxu0 %v113
    %2388 = vmatprep.subr.mxu0 0.0
    %2389 = vmatpush2.msra.mxu0 0.0
    %2390 = vmatprep.subr.mxu0 0.0
    %2391 = vmatpush2.msra.mxu0 0.0
    %2392 = vmatprep.subr.mxu0 0.0
    %2393 = vmatpush2.msra.mxu0 0.0
    %2394 = vmatprep.subr.mxu0 0.0
    %2395 = vmatpush2.msra.mxu0 0.0
    %2396 = vmatprep.subr.mxu0 0.0
    %2397 = vmatpush2.msra.mxu0 0.0
    %2398 = vmatprep.subr.mxu0 0.0
    %2399 = vmatpush2.msra.mxu0 0.0
    %2400 = vmatprep.subr.mxu0 0.0
    %2401 = vmatpush2.msra.mxu0 0.0
    %2402 = vmatprep.subr.mxu0 0.0
    %2403 = vmatpush2.msra.mxu0 0.0
    %2404 = vmatprep.subr.mxu0 0.0
    %2405 = vmatpush2.msra.mxu0 0.0
    %2406 = vmatprep.subr.mxu0 0.0
    %2407 = vmatpush2.msra.mxu0 0.0
    %2408 = vmatprep.subr.mxu0 0.0
    %2409 = vmatpush2.msra.mxu0 0.0
    %2410 = vmatprep.subr.mxu0 0.0
    %2411 = vmatpush2.msra.mxu0 0.0
    %2412 = vmatprep.subr.mxu0 0.0
    %2413 = vmatpush2.msra.mxu0 0.0
    %2414 = vmatprep.subr.mxu0 0.0
    %2415 = vmatpush2.msra.mxu0 0.0
    %2416 = vmatprep.subr.mxu0 0.0
    %2417 = vmatpush2.msra.mxu0 0.0
    %2418 = vmatprep.subr.mxu0 0.0
    %2419 = vmatpush2.msra.mxu0 0.0
    %2420 = vmatprep.mubr.f32.mxu0 0.0
    %2421 = vmatmul.mubr.f32.gmra.mxu0 %v2091
    %v2422 = vpop.f32.mrf.mxu0
    %v2423 = vadd.f32 %v1970, %v2422
    %v2424 = vpop.f32.mrf.mxu0
    %v2425 = vadd.f32 %v1974, %v2424
    %2426 = vdwg.mxu0
    %v2427 = vadd.f32 %v2352, %v2423
    %v2428 = vmul.f32 %v2427, 0.5
    %v2429 = vtanh.pop %v2428
    %v2430 = vmul.f32 %v2429, 0.5
    %v2431 = vadd.f32 %v2430, 0.5
    %2434 = vrot.lane.b32.xlu0 %v2423, 28
    %v2435 = vpop.permute.xlu0 %2434
    %2436 = vrot.lane.b32.xlu0 %v2425, 28
    %v2437 = vpop.permute.xlu0 %2436
    %v2438 = vsel %vm275, %v2435, %v2437
    %v2440 = vmul.f32 %v2431, %v2438
    %2442 = vrot.lane.b32.xlu0 %v2440, 100
    %v2443 = vpop.permute.xlu0 %2442
    %v2445 = vadd.f32 %v2352, %v2443
    %v2446 = vadd.f32 %v2354, %v2443
    %v2447 = vtanh.pop %v2445
    %v2448 = vtanh.pop %v2446
    %v2449 = vsub.f32 1.0, %v2431
    %2452 = vrot.lane.b32.xlu0 %v2447, 78
    %v2453 = vpop.permute.xlu0 %2452
    %2454 = vrot.lane.b32.xlu0 %v2448, 78
    %v2455 = vpop.permute.xlu0 %2454
    %v2456 = vsel %vm294, %v2453, %v2455
    %v2458 = vmul.f32 %v2449, %v2456
    %v2459 = vmul.f32 %v2431, %v2087
    %v2460 = vadd.f32 %v2458, %v2459
    %2462 = vrot.lane.b32.xlu0 %v2460, 78
    %v2463 = vpop.permute.xlu0 %2462
    %v2464 = vsel %vm182, %v2463, 0
    %2466 = vmatprep.subr.mxu0 0.0
    %2467 = vmatpush1.msra.mxu0 0.0
    %2468 = vmatprep.subr.mxu0 0.0
    %2469 = vmatpush1.msra.mxu0 0.0
    %2470 = vmatprep.subr.mxu0 0.0
    %2471 = vmatpush1.msra.mxu0 0.0
    %2472 = vmatprep.subr.mxu0 0.0
    %2473 = vmatpush1.msra.mxu0 0.0
    %2474 = vmatprep.subr.mxu0 0.0
    %2475 = vmatpush1.msra.mxu0 0.0
    %2476 = vmatprep.subr.mxu0 0.0
    %2477 = vmatpush1.msra.mxu0 0.0
    %2478 = vmatprep.subr.mxu0 0.0
    %2479 = vmatpush1.msra.mxu0 0.0
    %2480 = vmatprep.subr.mxu0 0.0
    %2481 = vmatpush1.msra.mxu0 0.0
    %2482 = vmatprep.subr.mxu0 0.0
    %2483 = vmatpush1.msra.mxu0 0.0
    %2484 = vmatprep.subr.mxu0 0.0
    %2485 = vmatpush1.msra.mxu0 %v312
    %2486 = vmatprep.subr.mxu0 0.0
    %2487 = vmatpush1.msra.mxu0 %v134
    %2488 = vmatprep.subr.mxu0 0.0
    %2489 = vmatpush1.msra.mxu0 %v133
    %2490 = vmatprep.subr.mxu0 0.0
    %2491 = vmatpush1.msra.mxu0 %v132
    %2492 = vmatprep.subr.mxu0 0.0
    %2493 = vmatpush1.msra.mxu0 %v131
    %2494 = vmatprep.subr.mxu0 0.0
    %2495 = vmatpush1.msra.mxu0 %v130
    %2496 = vmatprep.subr.mxu0 0.0
    %2497 = vmatpush1.msra.mxu0 %v129
    %2498 = vmatprep.subr.mxu0 0.0
    %2499 = vmatpush2.msra.mxu0 0.0
    %2500 = vmatprep.subr.mxu0 0.0
    %2501 = vmatpush2.msra.mxu0 0.0
    %2502 = vmatprep.subr.mxu0 0.0
    %2503 = vmatpush2.msra.mxu0 0.0
    %2504 = vmatprep.subr.mxu0 0.0
    %2505 = vmatpush2.msra.mxu0 0.0
    %2506 = vmatprep.subr.mxu0 0.0
    %2507 = vmatpush2.msra.mxu0 0.0
    %2508 = vmatprep.subr.mxu0 0.0
    %2509 = vmatpush2.msra.mxu0 0.0
    %2510 = vmatprep.subr.mxu0 0.0
    %2511 = vmatpush2.msra.mxu0 0.0
    %2512 = vmatprep.subr.mxu0 0.0
    %2513 = vmatpush2.msra.mxu0 0.0
    %2514 = vmatprep.subr.mxu0 0.0
    %2515 = vmatpush2.msra.mxu0 0.0
    %2516 = vmatprep.subr.mxu0 0.0
    %2517 = vmatpush2.msra.mxu0 0.0
    %2518 = vmatprep.subr.mxu0 0.0
    %2519 = vmatpush2.msra.mxu0 0.0
    %2520 = vmatprep.subr.mxu0 0.0
    %2521 = vmatpush2.msra.mxu0 0.0
    %2522 = vmatprep.subr.mxu0 0.0
    %2523 = vmatpush2.msra.mxu0 0.0
    %2524 = vmatprep.subr.mxu0 0.0
    %2525 = vmatpush2.msra.mxu0 0.0
    %2526 = vmatprep.subr.mxu0 0.0
    %2527 = vmatpush2.msra.mxu0 0.0
    %2528 = vmatprep.subr.mxu0 0.0
    %2529 = vmatpush2.msra.mxu0 0.0
    %2530 = vmatprep.mubr.f32.mxu0 0.0
    %2531 = vmatmul.mubr.f32.gmra.mxu0 %v2464
    %v2532 = vpop.f32.mrf.mxu0
    %v2533 = vadd.f32 %v304, %v2532
    %v2534 = vpop.f32.mrf.mxu0
    %2535 = vdwg.mxu0
    %vm2536 = vcmp.eq.s32.totalorder %v138, 9
    %2538 = vset.pattern.permute.xlu0 0
    %2539 = vperm.xlu0 %2538, %v2533
    %v2540 = vpop.permute.xlu0 %2539
    %v2542 = vsel %vm2536, %v2540, 0.0
    %v2543 = vadd.f32 %v2170, %v2542
    %v2544 = vmul.f32 %v2540, %v149
    %v2545 = vmul.f32 %v2540, %v153
    %v2546 = vadd.f32 %v2544, %v162
    %v2547 = vadd.f32 %v2545, %v166
    %2548 = vmatprep.subr.mxu0 0.0
    %2549 = vmatpush1.msra.mxu0 0.0
    %2550 = vmatprep.subr.mxu0 0.0
    %2551 = vmatpush1.msra.mxu0 0.0
    %2552 = vmatprep.subr.mxu0 0.0
    %2553 = vmatpush1.msra.mxu0 0.0
    %2554 = vmatprep.subr.mxu0 0.0
    %2555 = vmatpush1.msra.mxu0 0.0
    %2556 = vmatprep.subr.mxu0 0.0
    %2557 = vmatpush1.msra.mxu0 0.0
    %2558 = vmatprep.subr.mxu0 0.0
    %2559 = vmatpush1.msra.mxu0 0.0
    %2560 = vmatprep.subr.mxu0 0.0
    %2561 = vmatpush1.msra.mxu0 0.0
    %2562 = vmatprep.subr.mxu0 0.0
    %2563 = vmatpush1.msra.mxu0 0.0
    %2564 = vmatprep.subr.mxu0 0.0
    %2565 = vmatpush1.msra.mxu0 0.0
    %2566 = vmatprep.subr.mxu0 %v191
    %2567 = vmatpush1.msra.mxu0 %v188
    %2568 = vmatprep.subr.mxu0 %v94
    %2569 = vmatpush1.msra.mxu0 %v93
    %2570 = vmatprep.subr.mxu0 %v92
    %2571 = vmatpush1.msra.mxu0 %v91
    %2572 = vmatprep.subr.mxu0 %v90
    %2573 = vmatpush1.msra.mxu0 %v89
    %2574 = vmatprep.subr.mxu0 %v88
    %2575 = vmatpush1.msra.mxu0 %v87
    %2576 = vmatprep.subr.mxu0 %v86
    %2577 = vmatpush1.msra.mxu0 %v85
    %2578 = vmatprep.subr.mxu0 %v84
    %2579 = vmatpush1.msra.mxu0 %v83
    %2580 = vmatprep.subr.mxu0 0.0
    %2581 = vmatpush2.msra.mxu0 0.0
    %2582 = vmatprep.subr.mxu0 0.0
    %2583 = vmatpush2.msra.mxu0 0.0
    %2584 = vmatprep.subr.mxu0 0.0
    %2585 = vmatpush2.msra.mxu0 0.0
    %2586 = vmatprep.subr.mxu0 0.0
    %2587 = vmatpush2.msra.mxu0 0.0
    %2588 = vmatprep.subr.mxu0 0.0
    %2589 = vmatpush2.msra.mxu0 0.0
    %2590 = vmatprep.subr.mxu0 0.0
    %2591 = vmatpush2.msra.mxu0 0.0
    %2592 = vmatprep.subr.mxu0 0.0
    %2593 = vmatpush2.msra.mxu0 0.0
    %2594 = vmatprep.subr.mxu0 0.0
    %2595 = vmatpush2.msra.mxu0 0.0
    %2596 = vmatprep.subr.mxu0 0.0
    %2597 = vmatpush2.msra.mxu0 0.0
    %2598 = vmatprep.subr.mxu0 0.0
    %2599 = vmatpush2.msra.mxu0 0.0
    %2600 = vmatprep.subr.mxu0 0.0
    %2601 = vmatpush2.msra.mxu0 0.0
    %2602 = vmatprep.subr.mxu0 0.0
    %2603 = vmatpush2.msra.mxu0 0.0
    %2604 = vmatprep.subr.mxu0 0.0
    %2605 = vmatpush2.msra.mxu0 0.0
    %2606 = vmatprep.subr.mxu0 0.0
    %2607 = vmatpush2.msra.mxu0 0.0
    %2608 = vmatprep.subr.mxu0 0.0
    %2609 = vmatpush2.msra.mxu0 0.0
    %2610 = vmatprep.subr.mxu0 0.0
    %2611 = vmatpush2.msra.mxu0 0.0
    %2612 = vmatprep.mubr.f32.mxu0 0.0
    %2613 = vmatmul.mubr.f32.gmra.mxu0 %v2283
    %v2614 = vpop.f32.mrf.mxu0
    %v2615 = vadd.f32 %v175, %v2614
    %v2616 = vpop.f32.mrf.mxu0
    %v2617 = vadd.f32 %v179, %v2616
    %2618 = vdwg.mxu0
    %v2619 = vadd.f32 %v2546, %v2615
    %v2620 = vmul.f32 %v2619, 0.5
    %v2621 = vtanh.pop %v2620
    %v2622 = vmul.f32 %v2621, 0.5
    %v2623 = vadd.f32 %v2622, 0.5
    %2626 = vrot.lane.b32.xlu0 %v2615, 28
    %v2627 = vpop.permute.xlu0 %2626
    %2628 = vrot.lane.b32.xlu0 %v2617, 28
    %v2629 = vpop.permute.xlu0 %2628
    %v2630 = vsel %vm275, %v2627, %v2629
    %v2632 = vmul.f32 %v2623, %v2630
    %2634 = vrot.lane.b32.xlu0 %v2632, 100
    %v2635 = vpop.permute.xlu0 %2634
    %v2637 = vadd.f32 %v2546, %v2635
    %v2638 = vadd.f32 %v2547, %v2635
    %v2639 = vtanh.pop %v2637
    %v2640 = vtanh.pop %v2638
    %v2641 = vsub.f32 1.0, %v2623
    %2644 = vrot.lane.b32.xlu0 %v2639, 78
    %v2645 = vpop.permute.xlu0 %2644
    %2646 = vrot.lane.b32.xlu0 %v2640, 78
    %v2647 = vpop.permute.xlu0 %2646
    %v2648 = vsel %vm294, %v2645, %v2647
    %v2650 = vmul.f32 %v2641, %v2648
    %v2651 = vmul.f32 %v2623, %v2279
    %v2652 = vadd.f32 %v2650, %v2651
    %2654 = vrot.lane.b32.xlu0 %v2652, 78
    %v2655 = vpop.permute.xlu0 %2654
    %v2656 = vsel %vm182, %v2655, 0
    %2658 = vmatprep.subr.mxu0 0.0
    %2659 = vmatpush1.msra.mxu0 0.0
    %2660 = vmatprep.subr.mxu0 0.0
    %2661 = vmatpush1.msra.mxu0 0.0
    %2662 = vmatprep.subr.mxu0 0.0
    %2663 = vmatpush1.msra.mxu0 0.0
    %2664 = vmatprep.subr.mxu0 0.0
    %2665 = vmatpush1.msra.mxu0 0.0
    %2666 = vmatprep.subr.mxu0 0.0
    %2667 = vmatpush1.msra.mxu0 0.0
    %2668 = vmatprep.subr.mxu0 0.0
    %2669 = vmatpush1.msra.mxu0 0.0
    %2670 = vmatprep.subr.mxu0 0.0
    %2671 = vmatpush1.msra.mxu0 0.0
    %2672 = vmatprep.subr.mxu0 0.0
    %2673 = vmatpush1.msra.mxu0 0.0
    %2674 = vmatprep.subr.mxu0 0.0
    %2675 = vmatpush1.msra.mxu0 0.0
    %2676 = vmatprep.subr.mxu0 %v1893
    %2677 = vmatpush1.msra.mxu0 %v1890
    %2678 = vmatprep.subr.mxu0 %v110
    %2679 = vmatpush1.msra.mxu0 %v109
    %2680 = vmatprep.subr.mxu0 %v108
    %2681 = vmatpush1.msra.mxu0 %v107
    %2682 = vmatprep.subr.mxu0 %v106
    %2683 = vmatpush1.msra.mxu0 %v105
    %2684 = vmatprep.subr.mxu0 %v104
    %2685 = vmatpush1.msra.mxu0 %v103
    %2686 = vmatprep.subr.mxu0 %v102
    %2687 = vmatpush1.msra.mxu0 %v101
    %2688 = vmatprep.subr.mxu0 %v100
    %2689 = vmatpush1.msra.mxu0 %v99
    %2690 = vmatprep.subr.mxu0 0.0
    %2691 = vmatpush2.msra.mxu0 0.0
    %2692 = vmatprep.subr.mxu0 0.0
    %2693 = vmatpush2.msra.mxu0 0.0
    %2694 = vmatprep.subr.mxu0 0.0
    %2695 = vmatpush2.msra.mxu0 0.0
    %2696 = vmatprep.subr.mxu0 0.0
    %2697 = vmatpush2.msra.mxu0 0.0
    %2698 = vmatprep.subr.mxu0 0.0
    %2699 = vmatpush2.msra.mxu0 0.0
    %2700 = vmatprep.subr.mxu0 0.0
    %2701 = vmatpush2.msra.mxu0 0.0
    %2702 = vmatprep.subr.mxu0 0.0
    %2703 = vmatpush2.msra.mxu0 0.0
    %2704 = vmatprep.subr.mxu0 0.0
    %2705 = vmatpush2.msra.mxu0 0.0
    %2706 = vmatprep.subr.mxu0 0.0
    %2707 = vmatpush2.msra.mxu0 0.0
    %2708 = vmatprep.subr.mxu0 0.0
    %2709 = vmatpush2.msra.mxu0 0.0
    %2710 = vmatprep.subr.mxu0 0.0
    %2711 = vmatpush2.msra.mxu0 0.0
    %2712 = vmatprep.subr.mxu0 0.0
    %2713 = vmatpush2.msra.mxu0 0.0
    %2714 = vmatprep.subr.mxu0 0.0
    %2715 = vmatpush2.msra.mxu0 0.0
    %2716 = vmatprep.subr.mxu0 0.0
    %2717 = vmatpush2.msra.mxu0 0.0
    %2718 = vmatprep.subr.mxu0 0.0
    %2719 = vmatpush2.msra.mxu0 0.0
    %2720 = vmatprep.subr.mxu0 0.0
    %2721 = vmatpush2.msra.mxu0 0.0
    %2722 = vmatprep.mubr.f32.mxu0 0.0
    %2723 = vmatmul.mubr.f32.gmra.mxu0 %v2656
    %v2724 = vpop.f32.mrf.mxu0
    %v2725 = vadd.f32 %v1877, %v2724
    %v2726 = vpop.f32.mrf.mxu0
    %v2727 = vadd.f32 %v1881, %v2726
    %2728 = vdwg.mxu0
    %2729 = vmatprep.subr.mxu0 0.0
    %2730 = vmatpush1.msra.mxu0 0.0
    %2731 = vmatprep.subr.mxu0 0.0
    %2732 = vmatpush1.msra.mxu0 0.0
    %2733 = vmatprep.subr.mxu0 0.0
    %2734 = vmatpush1.msra.mxu0 0.0
    %2735 = vmatprep.subr.mxu0 0.0
    %2736 = vmatpush1.msra.mxu0 0.0
    %2737 = vmatprep.subr.mxu0 0.0
    %2738 = vmatpush1.msra.mxu0 0.0
    %2739 = vmatprep.subr.mxu0 0.0
    %2740 = vmatpush1.msra.mxu0 0.0
    %2741 = vmatprep.subr.mxu0 0.0
    %2742 = vmatpush1.msra.mxu0 0.0
    %2743 = vmatprep.subr.mxu0 0.0
    %2744 = vmatpush1.msra.mxu0 0.0
    %2745 = vmatprep.subr.mxu0 0.0
    %2746 = vmatpush1.msra.mxu0 0.0
    %2747 = vmatprep.subr.mxu0 %v1981
    %2748 = vmatpush1.msra.mxu0 %v1978
    %2749 = vmatprep.subr.mxu0 %v124
    %2750 = vmatpush1.msra.mxu0 %v123
    %2751 = vmatprep.subr.mxu0 %v122
    %2752 = vmatpush1.msra.mxu0 %v121
    %2753 = vmatprep.subr.mxu0 %v120
    %2754 = vmatpush1.msra.mxu0 %v119
    %2755 = vmatprep.subr.mxu0 %v118
    %2756 = vmatpush1.msra.mxu0 %v117
    %2757 = vmatprep.subr.mxu0 %v116
    %2758 = vmatpush1.msra.mxu0 %v115
    %2759 = vmatprep.subr.mxu0 %v114
    %2760 = vmatpush1.msra.mxu0 %v113
    %2761 = vmatprep.subr.mxu0 0.0
    %2762 = vmatpush2.msra.mxu0 0.0
    %2763 = vmatprep.subr.mxu0 0.0
    %2764 = vmatpush2.msra.mxu0 0.0
    %2765 = vmatprep.subr.mxu0 0.0
    %2766 = vmatpush2.msra.mxu0 0.0
    %2767 = vmatprep.subr.mxu0 0.0
    %2768 = vmatpush2.msra.mxu0 0.0
    %2769 = vmatprep.subr.mxu0 0.0
    %2770 = vmatpush2.msra.mxu0 0.0
    %2771 = vmatprep.subr.mxu0 0.0
    %2772 = vmatpush2.msra.mxu0 0.0
    %2773 = vmatprep.subr.mxu0 0.0
    %2774 = vmatpush2.msra.mxu0 0.0
    %2775 = vmatprep.subr.mxu0 0.0
    %2776 = vmatpush2.msra.mxu0 0.0
    %2777 = vmatprep.subr.mxu0 0.0
    %2778 = vmatpush2.msra.mxu0 0.0
    %2779 = vmatprep.subr.mxu0 0.0
    %2780 = vmatpush2.msra.mxu0 0.0
    %2781 = vmatprep.subr.mxu0 0.0
    %2782 = vmatpush2.msra.mxu0 0.0
    %2783 = vmatprep.subr.mxu0 0.0
    %2784 = vmatpush2.msra.mxu0 0.0
    %2785 = vmatprep.subr.mxu0 0.0
    %2786 = vmatpush2.msra.mxu0 0.0
    %2787 = vmatprep.subr.mxu0 0.0
    %2788 = vmatpush2.msra.mxu0 0.0
    %2789 = vmatprep.subr.mxu0 0.0
    %2790 = vmatpush2.msra.mxu0 0.0
    %2791 = vmatprep.subr.mxu0 0.0
    %2792 = vmatpush2.msra.mxu0 0.0
    %2793 = vmatprep.mubr.f32.mxu0 0.0
    %2794 = vmatmul.mubr.f32.gmra.mxu0 %v2464
    %v2795 = vpop.f32.mrf.mxu0
    %v2796 = vadd.f32 %v1970, %v2795
    %v2797 = vpop.f32.mrf.mxu0
    %v2798 = vadd.f32 %v1974, %v2797
    %2799 = vdwg.mxu0
    %v2800 = vadd.f32 %v2725, %v2796
    %v2801 = vmul.f32 %v2800, 0.5
    %v2802 = vtanh.pop %v2801
    %v2803 = vmul.f32 %v2802, 0.5
    %v2804 = vadd.f32 %v2803, 0.5
    %2807 = vrot.lane.b32.xlu0 %v2796, 28
    %v2808 = vpop.permute.xlu0 %2807
    %2809 = vrot.lane.b32.xlu0 %v2798, 28
    %v2810 = vpop.permute.xlu0 %2809
    %v2811 = vsel %vm275, %v2808, %v2810
    %v2813 = vmul.f32 %v2804, %v2811
    %2815 = vrot.lane.b32.xlu0 %v2813, 100
    %v2816 = vpop.permute.xlu0 %2815
    %v2818 = vadd.f32 %v2725, %v2816
    %v2819 = vadd.f32 %v2727, %v2816
    %v2820 = vtanh.pop %v2818
    %v2821 = vtanh.pop %v2819
    %v2822 = vsub.f32 1.0, %v2804
    %2825 = vrot.lane.b32.xlu0 %v2820, 78
    %v2826 = vpop.permute.xlu0 %2825
    %2827 = vrot.lane.b32.xlu0 %v2821, 78
    %v2828 = vpop.permute.xlu0 %2827
    %v2829 = vsel %vm294, %v2826, %v2828
    %v2831 = vmul.f32 %v2822, %v2829
    %v2832 = vmul.f32 %v2804, %v2460
    %v2833 = vadd.f32 %v2831, %v2832
    %2835 = vrot.lane.b32.xlu0 %v2833, 78
    %v2836 = vpop.permute.xlu0 %2835
    %v2837 = vsel %vm182, %v2836, 0
    %2839 = vmatprep.subr.mxu0 0.0
    %2840 = vmatpush1.msra.mxu0 0.0
    %2841 = vmatprep.subr.mxu0 0.0
    %2842 = vmatpush1.msra.mxu0 0.0
    %2843 = vmatprep.subr.mxu0 0.0
    %2844 = vmatpush1.msra.mxu0 0.0
    %2845 = vmatprep.subr.mxu0 0.0
    %2846 = vmatpush1.msra.mxu0 0.0
    %2847 = vmatprep.subr.mxu0 0.0
    %2848 = vmatpush1.msra.mxu0 0.0
    %2849 = vmatprep.subr.mxu0 0.0
    %2850 = vmatpush1.msra.mxu0 0.0
    %2851 = vmatprep.subr.mxu0 0.0
    %2852 = vmatpush1.msra.mxu0 0.0
    %2853 = vmatprep.subr.mxu0 0.0
    %2854 = vmatpush1.msra.mxu0 0.0
    %2855 = vmatprep.subr.mxu0 0.0
    %2856 = vmatpush1.msra.mxu0 0.0
    %2857 = vmatprep.subr.mxu0 0.0
    %2858 = vmatpush1.msra.mxu0 %v312
    %2859 = vmatprep.subr.mxu0 0.0
    %2860 = vmatpush1.msra.mxu0 %v134
    %2861 = vmatprep.subr.mxu0 0.0
    %2862 = vmatpush1.msra.mxu0 %v133
    %2863 = vmatprep.subr.mxu0 0.0
    %2864 = vmatpush1.msra.mxu0 %v132
    %2865 = vmatprep.subr.mxu0 0.0
    %2866 = vmatpush1.msra.mxu0 %v131
    %2867 = vmatprep.subr.mxu0 0.0
    %2868 = vmatpush1.msra.mxu0 %v130
    %2869 = vmatprep.subr.mxu0 0.0
    %2870 = vmatpush1.msra.mxu0 %v129
    %2871 = vmatprep.subr.mxu0 0.0
    %2872 = vmatpush2.msra.mxu0 0.0
    %2873 = vmatprep.subr.mxu0 0.0
    %2874 = vmatpush2.msra.mxu0 0.0
    %2875 = vmatprep.subr.mxu0 0.0
    %2876 = vmatpush2.msra.mxu0 0.0
    %2877 = vmatprep.subr.mxu0 0.0
    %2878 = vmatpush2.msra.mxu0 0.0
    %2879 = vmatprep.subr.mxu0 0.0
    %2880 = vmatpush2.msra.mxu0 0.0
    %2881 = vmatprep.subr.mxu0 0.0
    %2882 = vmatpush2.msra.mxu0 0.0
    %2883 = vmatprep.subr.mxu0 0.0
    %2884 = vmatpush2.msra.mxu0 0.0
    %2885 = vmatprep.subr.mxu0 0.0
    %2886 = vmatpush2.msra.mxu0 0.0
    %2887 = vmatprep.subr.mxu0 0.0
    %2888 = vmatpush2.msra.mxu0 0.0
    %2889 = vmatprep.subr.mxu0 0.0
    %2890 = vmatpush2.msra.mxu0 0.0
    %2891 = vmatprep.subr.mxu0 0.0
    %2892 = vmatpush2.msra.mxu0 0.0
    %2893 = vmatprep.subr.mxu0 0.0
    %2894 = vmatpush2.msra.mxu0 0.0
    %2895 = vmatprep.subr.mxu0 0.0
    %2896 = vmatpush2.msra.mxu0 0.0
    %2897 = vmatprep.subr.mxu0 0.0
    %2898 = vmatpush2.msra.mxu0 0.0
    %2899 = vmatprep.subr.mxu0 0.0
    %2900 = vmatpush2.msra.mxu0 0.0
    %2901 = vmatprep.subr.mxu0 0.0
    %2902 = vmatpush2.msra.mxu0 0.0
    %2903 = vmatprep.mubr.f32.mxu0 0.0
    %2904 = vmatmul.mubr.f32.gmra.mxu0 %v2837
    %v2905 = vpop.f32.mrf.mxu0
    %v2906 = vadd.f32 %v304, %v2905
    %v2907 = vpop.f32.mrf.mxu0
    %2908 = vdwg.mxu0
    %vm2909 = vcmp.eq.s32.totalorder %v138, 10
    %2911 = vset.pattern.permute.xlu0 0
    %2912 = vperm.xlu0 %2911, %v2906
    %v2913 = vpop.permute.xlu0 %2912
    %v2915 = vsel %vm2909, %v2913, 0.0
    %v2916 = vadd.f32 %v2543, %v2915
    %v2917 = vmul.f32 %v2913, %v149
    %v2918 = vmul.f32 %v2913, %v153
    %v2919 = vadd.f32 %v2917, %v162
    %v2920 = vadd.f32 %v2918, %v166
    %2921 = vmatprep.subr.mxu0 0.0
    %2922 = vmatpush1.msra.mxu0 0.0
    %2923 = vmatprep.subr.mxu0 0.0
    %2924 = vmatpush1.msra.mxu0 0.0
    %2925 = vmatprep.subr.mxu0 0.0
    %2926 = vmatpush1.msra.mxu0 0.0
    %2927 = vmatprep.subr.mxu0 0.0
    %2928 = vmatpush1.msra.mxu0 0.0
    %2929 = vmatprep.subr.mxu0 0.0
    %2930 = vmatpush1.msra.mxu0 0.0
    %2931 = vmatprep.subr.mxu0 0.0
    %2932 = vmatpush1.msra.mxu0 0.0
    %2933 = vmatprep.subr.mxu0 0.0
    %2934 = vmatpush1.msra.mxu0 0.0
    %2935 = vmatprep.subr.mxu0 0.0
    %2936 = vmatpush1.msra.mxu0 0.0
    %2937 = vmatprep.subr.mxu0 0.0
    %2938 = vmatpush1.msra.mxu0 0.0
    %2939 = vmatprep.subr.mxu0 %v191
    %2940 = vmatpush1.msra.mxu0 %v188
    %2941 = vmatprep.subr.mxu0 %v94
    %2942 = vmatpush1.msra.mxu0 %v93
    %2943 = vmatprep.subr.mxu0 %v92
    %2944 = vmatpush1.msra.mxu0 %v91
    %2945 = vmatprep.subr.mxu0 %v90
    %2946 = vmatpush1.msra.mxu0 %v89
    %2947 = vmatprep.subr.mxu0 %v88
    %2948 = vmatpush1.msra.mxu0 %v87
    %2949 = vmatprep.subr.mxu0 %v86
    %2950 = vmatpush1.msra.mxu0 %v85
    %2951 = vmatprep.subr.mxu0 %v84
    %2952 = vmatpush1.msra.mxu0 %v83
    %2953 = vmatprep.subr.mxu0 0.0
    %2954 = vmatpush2.msra.mxu0 0.0
    %2955 = vmatprep.subr.mxu0 0.0
    %2956 = vmatpush2.msra.mxu0 0.0
    %2957 = vmatprep.subr.mxu0 0.0
    %2958 = vmatpush2.msra.mxu0 0.0
    %2959 = vmatprep.subr.mxu0 0.0
    %2960 = vmatpush2.msra.mxu0 0.0
    %2961 = vmatprep.subr.mxu0 0.0
    %2962 = vmatpush2.msra.mxu0 0.0
    %2963 = vmatprep.subr.mxu0 0.0
    %2964 = vmatpush2.msra.mxu0 0.0
    %2965 = vmatprep.subr.mxu0 0.0
    %2966 = vmatpush2.msra.mxu0 0.0
    %2967 = vmatprep.subr.mxu0 0.0
    %2968 = vmatpush2.msra.mxu0 0.0
    %2969 = vmatprep.subr.mxu0 0.0
    %2970 = vmatpush2.msra.mxu0 0.0
    %2971 = vmatprep.subr.mxu0 0.0
    %2972 = vmatpush2.msra.mxu0 0.0
    %2973 = vmatprep.subr.mxu0 0.0
    %2974 = vmatpush2.msra.mxu0 0.0
    %2975 = vmatprep.subr.mxu0 0.0
    %2976 = vmatpush2.msra.mxu0 0.0
    %2977 = vmatprep.subr.mxu0 0.0
    %2978 = vmatpush2.msra.mxu0 0.0
    %2979 = vmatprep.subr.mxu0 0.0
    %2980 = vmatpush2.msra.mxu0 0.0
    %2981 = vmatprep.subr.mxu0 0.0
    %2982 = vmatpush2.msra.mxu0 0.0
    %2983 = vmatprep.subr.mxu0 0.0
    %2984 = vmatpush2.msra.mxu0 0.0
    %2985 = vmatprep.mubr.f32.mxu0 0.0
    %2986 = vmatmul.mubr.f32.gmra.mxu0 %v2656
    %v2987 = vpop.f32.mrf.mxu0
    %v2988 = vadd.f32 %v175, %v2987
    %v2989 = vpop.f32.mrf.mxu0
    %v2990 = vadd.f32 %v179, %v2989
    %2991 = vdwg.mxu0
    %v2992 = vadd.f32 %v2919, %v2988
    %v2993 = vmul.f32 %v2992, 0.5
    %v2994 = vtanh.pop %v2993
    %v2995 = vmul.f32 %v2994, 0.5
    %v2996 = vadd.f32 %v2995, 0.5
    %2999 = vrot.lane.b32.xlu0 %v2988, 28
    %v3000 = vpop.permute.xlu0 %2999
    %3001 = vrot.lane.b32.xlu0 %v2990, 28
    %v3002 = vpop.permute.xlu0 %3001
    %v3003 = vsel %vm275, %v3000, %v3002
    %v3005 = vmul.f32 %v2996, %v3003
    %3007 = vrot.lane.b32.xlu0 %v3005, 100
    %v3008 = vpop.permute.xlu0 %3007
    %v3010 = vadd.f32 %v2919, %v3008
    %v3011 = vadd.f32 %v2920, %v3008
    %v3012 = vtanh.pop %v3010
    %v3013 = vtanh.pop %v3011
    %v3014 = vsub.f32 1.0, %v2996
    %3017 = vrot.lane.b32.xlu0 %v3012, 78
    %v3018 = vpop.permute.xlu0 %3017
    %3019 = vrot.lane.b32.xlu0 %v3013, 78
    %v3020 = vpop.permute.xlu0 %3019
    %v3021 = vsel %vm294, %v3018, %v3020
    %v3023 = vmul.f32 %v3014, %v3021
    %v3024 = vmul.f32 %v2996, %v2652
    %v3025 = vadd.f32 %v3023, %v3024
    %3027 = vrot.lane.b32.xlu0 %v3025, 78
    %v3028 = vpop.permute.xlu0 %3027
    %v3029 = vsel %vm182, %v3028, 0
    %3031 = vmatprep.subr.mxu0 0.0
    %3032 = vmatpush1.msra.mxu0 0.0
    %3033 = vmatprep.subr.mxu0 0.0
    %3034 = vmatpush1.msra.mxu0 0.0
    %3035 = vmatprep.subr.mxu0 0.0
    %3036 = vmatpush1.msra.mxu0 0.0
    %3037 = vmatprep.subr.mxu0 0.0
    %3038 = vmatpush1.msra.mxu0 0.0
    %3039 = vmatprep.subr.mxu0 0.0
    %3040 = vmatpush1.msra.mxu0 0.0
    %3041 = vmatprep.subr.mxu0 0.0
    %3042 = vmatpush1.msra.mxu0 0.0
    %3043 = vmatprep.subr.mxu0 0.0
    %3044 = vmatpush1.msra.mxu0 0.0
    %3045 = vmatprep.subr.mxu0 0.0
    %3046 = vmatpush1.msra.mxu0 0.0
    %3047 = vmatprep.subr.mxu0 0.0
    %3048 = vmatpush1.msra.mxu0 0.0
    %3049 = vmatprep.subr.mxu0 %v1893
    %3050 = vmatpush1.msra.mxu0 %v1890
    %3051 = vmatprep.subr.mxu0 %v110
    %3052 = vmatpush1.msra.mxu0 %v109
    %3053 = vmatprep.subr.mxu0 %v108
    %3054 = vmatpush1.msra.mxu0 %v107
    %3055 = vmatprep.subr.mxu0 %v106
    %3056 = vmatpush1.msra.mxu0 %v105
    %3057 = vmatprep.subr.mxu0 %v104
    %3058 = vmatpush1.msra.mxu0 %v103
    %3059 = vmatprep.subr.mxu0 %v102
    %3060 = vmatpush1.msra.mxu0 %v101
    %3061 = vmatprep.subr.mxu0 %v100
    %3062 = vmatpush1.msra.mxu0 %v99
    %3063 = vmatprep.subr.mxu0 0.0
    %3064 = vmatpush2.msra.mxu0 0.0
    %3065 = vmatprep.subr.mxu0 0.0
    %3066 = vmatpush2.msra.mxu0 0.0
    %3067 = vmatprep.subr.mxu0 0.0
    %3068 = vmatpush2.msra.mxu0 0.0
    %3069 = vmatprep.subr.mxu0 0.0
    %3070 = vmatpush2.msra.mxu0 0.0
    %3071 = vmatprep.subr.mxu0 0.0
    %3072 = vmatpush2.msra.mxu0 0.0
    %3073 = vmatprep.subr.mxu0 0.0
    %3074 = vmatpush2.msra.mxu0 0.0
    %3075 = vmatprep.subr.mxu0 0.0
    %3076 = vmatpush2.msra.mxu0 0.0
    %3077 = vmatprep.subr.mxu0 0.0
    %3078 = vmatpush2.msra.mxu0 0.0
    %3079 = vmatprep.subr.mxu0 0.0
    %3080 = vmatpush2.msra.mxu0 0.0
    %3081 = vmatprep.subr.mxu0 0.0
    %3082 = vmatpush2.msra.mxu0 0.0
    %3083 = vmatprep.subr.mxu0 0.0
    %3084 = vmatpush2.msra.mxu0 0.0
    %3085 = vmatprep.subr.mxu0 0.0
    %3086 = vmatpush2.msra.mxu0 0.0
    %3087 = vmatprep.subr.mxu0 0.0
    %3088 = vmatpush2.msra.mxu0 0.0
    %3089 = vmatprep.subr.mxu0 0.0
    %3090 = vmatpush2.msra.mxu0 0.0
    %3091 = vmatprep.subr.mxu0 0.0
    %3092 = vmatpush2.msra.mxu0 0.0
    %3093 = vmatprep.subr.mxu0 0.0
    %3094 = vmatpush2.msra.mxu0 0.0
    %3095 = vmatprep.mubr.f32.mxu0 0.0
    %3096 = vmatmul.mubr.f32.gmra.mxu0 %v3029
    %v3097 = vpop.f32.mrf.mxu0
    %v3098 = vadd.f32 %v1877, %v3097
    %v3099 = vpop.f32.mrf.mxu0
    %v3100 = vadd.f32 %v1881, %v3099
    %3101 = vdwg.mxu0
    %3102 = vmatprep.subr.mxu0 0.0
    %3103 = vmatpush1.msra.mxu0 0.0
    %3104 = vmatprep.subr.mxu0 0.0
    %3105 = vmatpush1.msra.mxu0 0.0
    %3106 = vmatprep.subr.mxu0 0.0
    %3107 = vmatpush1.msra.mxu0 0.0
    %3108 = vmatprep.subr.mxu0 0.0
    %3109 = vmatpush1.msra.mxu0 0.0
    %3110 = vmatprep.subr.mxu0 0.0
    %3111 = vmatpush1.msra.mxu0 0.0
    %3112 = vmatprep.subr.mxu0 0.0
    %3113 = vmatpush1.msra.mxu0 0.0
    %3114 = vmatprep.subr.mxu0 0.0
    %3115 = vmatpush1.msra.mxu0 0.0
    %3116 = vmatprep.subr.mxu0 0.0
    %3117 = vmatpush1.msra.mxu0 0.0
    %3118 = vmatprep.subr.mxu0 0.0
    %3119 = vmatpush1.msra.mxu0 0.0
    %3120 = vmatprep.subr.mxu0 %v1981
    %3121 = vmatpush1.msra.mxu0 %v1978
    %3122 = vmatprep.subr.mxu0 %v124
    %3123 = vmatpush1.msra.mxu0 %v123
    %3124 = vmatprep.subr.mxu0 %v122
    %3125 = vmatpush1.msra.mxu0 %v121
    %3126 = vmatprep.subr.mxu0 %v120
    %3127 = vmatpush1.msra.mxu0 %v119
    %3128 = vmatprep.subr.mxu0 %v118
    %3129 = vmatpush1.msra.mxu0 %v117
    %3130 = vmatprep.subr.mxu0 %v116
    %3131 = vmatpush1.msra.mxu0 %v115
    %3132 = vmatprep.subr.mxu0 %v114
    %3133 = vmatpush1.msra.mxu0 %v113
    %3134 = vmatprep.subr.mxu0 0.0
    %3135 = vmatpush2.msra.mxu0 0.0
    %3136 = vmatprep.subr.mxu0 0.0
    %3137 = vmatpush2.msra.mxu0 0.0
    %3138 = vmatprep.subr.mxu0 0.0
    %3139 = vmatpush2.msra.mxu0 0.0
    %3140 = vmatprep.subr.mxu0 0.0
    %3141 = vmatpush2.msra.mxu0 0.0
    %3142 = vmatprep.subr.mxu0 0.0
    %3143 = vmatpush2.msra.mxu0 0.0
    %3144 = vmatprep.subr.mxu0 0.0
    %3145 = vmatpush2.msra.mxu0 0.0
    %3146 = vmatprep.subr.mxu0 0.0
    %3147 = vmatpush2.msra.mxu0 0.0
    %3148 = vmatprep.subr.mxu0 0.0
    %3149 = vmatpush2.msra.mxu0 0.0
    %3150 = vmatprep.subr.mxu0 0.0
    %3151 = vmatpush2.msra.mxu0 0.0
    %3152 = vmatprep.subr.mxu0 0.0
    %3153 = vmatpush2.msra.mxu0 0.0
    %3154 = vmatprep.subr.mxu0 0.0
    %3155 = vmatpush2.msra.mxu0 0.0
    %3156 = vmatprep.subr.mxu0 0.0
    %3157 = vmatpush2.msra.mxu0 0.0
    %3158 = vmatprep.subr.mxu0 0.0
    %3159 = vmatpush2.msra.mxu0 0.0
    %3160 = vmatprep.subr.mxu0 0.0
    %3161 = vmatpush2.msra.mxu0 0.0
    %3162 = vmatprep.subr.mxu0 0.0
    %3163 = vmatpush2.msra.mxu0 0.0
    %3164 = vmatprep.subr.mxu0 0.0
    %3165 = vmatpush2.msra.mxu0 0.0
    %3166 = vmatprep.mubr.f32.mxu0 0.0
    %3167 = vmatmul.mubr.f32.gmra.mxu0 %v2837
    %v3168 = vpop.f32.mrf.mxu0
    %v3169 = vadd.f32 %v1970, %v3168
    %v3170 = vpop.f32.mrf.mxu0
    %v3171 = vadd.f32 %v1974, %v3170
    %3172 = vdwg.mxu0
    %v3173 = vadd.f32 %v3098, %v3169
    %v3174 = vmul.f32 %v3173, 0.5
    %v3175 = vtanh.pop %v3174
    %v3176 = vmul.f32 %v3175, 0.5
    %v3177 = vadd.f32 %v3176, 0.5
    %3180 = vrot.lane.b32.xlu0 %v3169, 28
    %v3181 = vpop.permute.xlu0 %3180
    %3182 = vrot.lane.b32.xlu0 %v3171, 28
    %v3183 = vpop.permute.xlu0 %3182
    %v3184 = vsel %vm275, %v3181, %v3183
    %v3186 = vmul.f32 %v3177, %v3184
    %3188 = vrot.lane.b32.xlu0 %v3186, 100
    %v3189 = vpop.permute.xlu0 %3188
    %v3191 = vadd.f32 %v3098, %v3189
    %v3192 = vadd.f32 %v3100, %v3189
    %v3193 = vtanh.pop %v3191
    %v3194 = vtanh.pop %v3192
    %v3195 = vsub.f32 1.0, %v3177
    %3198 = vrot.lane.b32.xlu0 %v3193, 78
    %v3199 = vpop.permute.xlu0 %3198
    %3200 = vrot.lane.b32.xlu0 %v3194, 78
    %v3201 = vpop.permute.xlu0 %3200
    %v3202 = vsel %vm294, %v3199, %v3201
    %v3204 = vmul.f32 %v3195, %v3202
    %v3205 = vmul.f32 %v3177, %v2833
    %v3206 = vadd.f32 %v3204, %v3205
    %3208 = vrot.lane.b32.xlu0 %v3206, 78
    %v3209 = vpop.permute.xlu0 %3208
    %v3210 = vsel %vm182, %v3209, 0
    %3212 = vmatprep.subr.mxu0 0.0
    %3213 = vmatpush1.msra.mxu0 0.0
    %3214 = vmatprep.subr.mxu0 0.0
    %3215 = vmatpush1.msra.mxu0 0.0
    %3216 = vmatprep.subr.mxu0 0.0
    %3217 = vmatpush1.msra.mxu0 0.0
    %3218 = vmatprep.subr.mxu0 0.0
    %3219 = vmatpush1.msra.mxu0 0.0
    %3220 = vmatprep.subr.mxu0 0.0
    %3221 = vmatpush1.msra.mxu0 0.0
    %3222 = vmatprep.subr.mxu0 0.0
    %3223 = vmatpush1.msra.mxu0 0.0
    %3224 = vmatprep.subr.mxu0 0.0
    %3225 = vmatpush1.msra.mxu0 0.0
    %3226 = vmatprep.subr.mxu0 0.0
    %3227 = vmatpush1.msra.mxu0 0.0
    %3228 = vmatprep.subr.mxu0 0.0
    %3229 = vmatpush1.msra.mxu0 0.0
    %3230 = vmatprep.subr.mxu0 0.0
    %3231 = vmatpush1.msra.mxu0 %v312
    %3232 = vmatprep.subr.mxu0 0.0
    %3233 = vmatpush1.msra.mxu0 %v134
    %3234 = vmatprep.subr.mxu0 0.0
    %3235 = vmatpush1.msra.mxu0 %v133
    %3236 = vmatprep.subr.mxu0 0.0
    %3237 = vmatpush1.msra.mxu0 %v132
    %3238 = vmatprep.subr.mxu0 0.0
    %3239 = vmatpush1.msra.mxu0 %v131
    %3240 = vmatprep.subr.mxu0 0.0
    %3241 = vmatpush1.msra.mxu0 %v130
    %3242 = vmatprep.subr.mxu0 0.0
    %3243 = vmatpush1.msra.mxu0 %v129
    %3244 = vmatprep.subr.mxu0 0.0
    %3245 = vmatpush2.msra.mxu0 0.0
    %3246 = vmatprep.subr.mxu0 0.0
    %3247 = vmatpush2.msra.mxu0 0.0
    %3248 = vmatprep.subr.mxu0 0.0
    %3249 = vmatpush2.msra.mxu0 0.0
    %3250 = vmatprep.subr.mxu0 0.0
    %3251 = vmatpush2.msra.mxu0 0.0
    %3252 = vmatprep.subr.mxu0 0.0
    %3253 = vmatpush2.msra.mxu0 0.0
    %3254 = vmatprep.subr.mxu0 0.0
    %3255 = vmatpush2.msra.mxu0 0.0
    %3256 = vmatprep.subr.mxu0 0.0
    %3257 = vmatpush2.msra.mxu0 0.0
    %3258 = vmatprep.subr.mxu0 0.0
    %3259 = vmatpush2.msra.mxu0 0.0
    %3260 = vmatprep.subr.mxu0 0.0
    %3261 = vmatpush2.msra.mxu0 0.0
    %3262 = vmatprep.subr.mxu0 0.0
    %3263 = vmatpush2.msra.mxu0 0.0
    %3264 = vmatprep.subr.mxu0 0.0
    %3265 = vmatpush2.msra.mxu0 0.0
    %3266 = vmatprep.subr.mxu0 0.0
    %3267 = vmatpush2.msra.mxu0 0.0
    %3268 = vmatprep.subr.mxu0 0.0
    %3269 = vmatpush2.msra.mxu0 0.0
    %3270 = vmatprep.subr.mxu0 0.0
    %3271 = vmatpush2.msra.mxu0 0.0
    %3272 = vmatprep.subr.mxu0 0.0
    %3273 = vmatpush2.msra.mxu0 0.0
    %3274 = vmatprep.subr.mxu0 0.0
    %3275 = vmatpush2.msra.mxu0 0.0
    %3276 = vmatprep.mubr.f32.mxu0 0.0
    %3277 = vmatmul.mubr.f32.gmra.mxu0 %v3210
    %v3278 = vpop.f32.mrf.mxu0
    %v3279 = vadd.f32 %v304, %v3278
    %v3280 = vpop.f32.mrf.mxu0
    %3281 = vdwg.mxu0
    %vm3282 = vcmp.eq.s32.totalorder %v138, 11
    %3284 = vset.pattern.permute.xlu0 0
    %3285 = vperm.xlu0 %3284, %v3279
    %v3286 = vpop.permute.xlu0 %3285
    %v3288 = vsel %vm3282, %v3286, 0.0
    %v3289 = vadd.f32 %v2916, %v3288
    %vm3290 = vcmask 97280
    %3291 = vst.msk [vmem:[#allocation9] sm:$0xff] %vm3290, %v3289
    // Predicated region
    $region58: #{tpu_custom_call.1} parent=1 // pred_check
      _
    $region59: #{tpu_custom_call.1} parent=1 // pred_check_branch
      %3293 = sbr.rel (0) target = $region61
    $region60: #{tpu_custom_call.1} parent=1 // pred_region
      %s3295 = ssub.s32 128, 128
      %3296 = vsyncadd [#allocation5], %s3295
      %s3298 = sshll.u32 [#allocation9], 4
      %s3299 = int_to_ptr.vmem [resolvable:$true] %s3298
      %3301 = dma.vmem_to_hbm [thread:$0]  %s3299, 128, %s11, [#allocation5]
    $region61: #{tpu_custom_call.1} parent=1 // pred_fallthru
      _
    // Predicated region
    $region62: #{tpu_custom_call.1} parent=1 // pred_check
      _
    $region63: #{tpu_custom_call.1} parent=1 // pred_check_branch
      %3303 = sbr.rel (0) target = $region65
    $region64: #{tpu_custom_call.1} parent=1 // pred_region
      %3304 = dma.done [#allocation5], 128
    $region65: #{tpu_custom_call.1} parent=1 // pred_fallthru
      _
    %3305 = vsyncpa [#allocation4], 1
    %3306 = vsyncpa [#allocation7], 1
    %3307 = vsyncpa [#allocation5], 1

</llo_original>
